<compile_context>
chip_gen: v7x
topology: tpu7x:2x2x1
jax: 0.10.0
libtpu: 0.0.40
codegen_flags: <defaults>
</compile_context>

<pallas_src>
import functools
import math

import jax
import jax.numpy as jnp
from jax.experimental import pallas as pl
from jax.experimental.pallas import tpu as pltpu


# ------------------------------- Pallas kernel --------------------------------------

def _win_decoder_kernel(*refs, nhead, has_qpos, has_pos):
    f32, bf16 = jnp.float32, jnp.bfloat16
    it = iter(refs)
    tgt_ref = next(it)                        # (L, Nb, D) f32
    mem_ref = next(it)                        # (S, Nb, D) f32
    qpos_ref = next(it) if has_qpos else None  # (L, Nb, D) f32
    pos_ref = next(it) if has_pos else None    # (S, Nb, D) f32
    w_in_ref = next(it)                       # (2, D, 3D) bf16  [self|cross], cols [q|k|v]
    w_out_ref = next(it)                      # (2, D, D)  bf16
    b_in_ref = next(it)                       # (2, 3, D)  f32   rows [bq|bk|bv]
    l1w_ref = next(it)                        # (D, F)     bf16
    l2w_ref = next(it)                        # (F, D)     bf16
    l1b_ref = next(it)                        # (1, F)     f32
    vec_ref = next(it)                        # (9, D)     f32
    nf_ref = next(it)                         # (2, D)     f32   final decoder norm
    out_ref = next(it)                        # (L, Nb, D)
    t_sc = next(it)                           # (Nb*L, D)  f32   residual-stream carry
    mv_sc = next(it)                          # (Nb*S, D)  bf16  memory (cross-attn V)
    mk_sc = next(it) if has_pos else mv_sc    # (Nb*S, D)  bf16  memory + pos (cross-attn K)
    qp_sc = next(it) if has_qpos else None    # (Nb*L, D)  f32   query_pos (window-major)

    L, Nb, D = tgt_ref.shape
    S = mem_ref.shape[0]
    H = nhead
    Dh = D // H

    layer = pl.program_id(1)
    last_layer = pl.num_programs(1) - 1

    # ---- first layer of each window block: stage activations window-major ----------
    @pl.when(layer == 0)
    def _init():
        for b in range(Nb):
            t_sc[b * L:(b + 1) * L, :] = tgt_ref[:, b, :]
            if has_qpos:
                qp_sc[b * L:(b + 1) * L, :] = qpos_ref[:, b, :]
            m = mem_ref[:, b, :]
            mv_sc[b * S:(b + 1) * S, :] = m.astype(bf16)
            if has_pos:
                mk_sc[b * S:(b + 1) * S, :] = (m + pos_ref[:, b, :]).astype(bf16)

    def layer_norm(x, w_row, b_row, eps=1e-5):
        mu = jnp.mean(x, axis=-1, keepdims=True)
        var = jnp.mean(jnp.square(x - mu), axis=-1, keepdims=True)
        return (x - mu) * jax.lax.rsqrt(var + eps) * w_row + b_row

    def mha(a, xq, xk, xv, Lq, Sk, b_out_row):
        """nn.MultiheadAttention (no masks, dropout=0.0) over Nb windows at once.

        a: 0 = self-attention weights, 1 = cross-attention weights.
        xq: (Nb*Lq, D) bf16; xk, xv: (Nb*Sk, D) bf16.  Rows are window-major.
        Returns (Nb*Lq, D) f32.
        """
        if xq is xk:   # self-attention: fused (M, 2D) GEMM for Q and K
            qk = jnp.dot(xq, w_in_ref[a, :, 0:2 * D], preferred_element_type=f32)
            q = qk[:, 0:D] + b_in_ref[a, 0:1, :]
            k = qk[:, D:2 * D] + b_in_ref[a, 1:2, :]
        else:
            q = jnp.dot(xq, w_in_ref[a, :, 0:D],
                        preferred_element_type=f32) + b_in_ref[a, 0:1, :]
            k = jnp.dot(xk, w_in_ref[a, :, D:2 * D],
                        preferred_element_type=f32) + b_in_ref[a, 1:2, :]
        v = jnp.dot(xv, w_in_ref[a, :, 2 * D:3 * D],
                    preferred_element_type=f32) + b_in_ref[a, 2:3, :]

        q3 = q.astype(bf16).reshape(Nb, Lq, D)   # 1/sqrt(Dh) pre-folded into W_q/b_q
        k3 = k.astype(bf16).reshape(Nb, Sk, D)
        v3 = v.astype(bf16).reshape(Nb, Sk, D)

        ctx = []
        for h in range(H):
            hs = slice(h * Dh, (h + 1) * Dh)
            s = jnp.einsum('bld,bsd->bls', q3[:, :, hs], k3[:, :, hs],
                           preferred_element_type=f32)            # (Nb, Lq, Sk)
            s = s - jnp.max(s, axis=-1, keepdims=True)
            e = jnp.exp(s)
            p = e * pl.reciprocal(jnp.sum(e, axis=-1, keepdims=True), approx=True)
            ctx.append(jnp.einsum('bls,bsd->bld', p.astype(bf16), v3[:, :, hs],
                                  preferred_element_type=f32))    # (Nb, Lq, Dh)
        o = jnp.concatenate(ctx, axis=-1).reshape(Nb * Lq, D)      # heads back to D lanes
        return jnp.dot(o.astype(bf16), w_out_ref[a],
                       preferred_element_type=f32) + b_out_row

    # ---- one DecoderLayer over the whole (Nb windows x L queries) block ------------
    t = t_sc[...]                                   # (Nb*L, D) f32
    if has_qpos:
        qp = qp_sc[...]
        q_in = (t + qp).astype(bf16)                # with_pos_embed(tgt, query_pos)
    else:
        qp = None
        q_in = t.astype(bf16)

    sa = mha(0, q_in, q_in, t.astype(bf16), L, L, vec_ref[0:1, :])     # self-attn
    t = layer_norm(t + sa, vec_ref[3:4, :], vec_ref[4:5, :])           # norm1

    cq = (t + qp).astype(bf16) if has_qpos else t.astype(bf16)
    ca = mha(1, cq, mk_sc[...], mv_sc[...], L, S, vec_ref[1:2, :])     # cross-attn
    t = layer_norm(t + ca, vec_ref[5:6, :], vec_ref[6:7, :])           # norm2

    h1 = jnp.dot(t.astype(bf16), l1w_ref[...],
                 preferred_element_type=f32) + l1b_ref[...]            # linear1
    h1 = jnp.maximum(h1, 0.0)                                          # relu
    ff = jnp.dot(h1.astype(bf16), l2w_ref[...],
                 preferred_element_type=f32) + vec_ref[2:3, :]         # linear2
    t = layer_norm(t + ff, vec_ref[7:8, :], vec_ref[8:9, :])           # norm3

    t_sc[...] = t                                   # carry to next layer

    @pl.when(layer == last_layer)
    def _finalize():
        tf = layer_norm(t, nf_ref[0:1, :], nf_ref[1:2, :]).astype(out_ref.dtype)
        for b in range(Nb):
            out_ref[:, b, :] = tf[b * L:(b + 1) * L, :]


# ------------------------------- host-side packing ----------------------------------

def pack_decoder_params(layer_params, decoder_norm, nhead):
    """Pre-transpose to lane-dense (D / F minor) slabs, fold 1/sqrt(Dh) into the Q slab,
    and stack per-layer so a single fused kernel can index weights by layer.
    Call ONCE and reuse (do not re-pack per forward)."""
    D = layer_params[0]["n1_w"].shape[-1]
    Dh = D // nhead
    scale = 1.0 / math.sqrt(Dh)

    def attn_in_w(wi):                 # torch (3D, D) -> (D, 3D), scale folded into Q cols
        wt = wi.T
        return jnp.concatenate([wt[:, :D] * scale, wt[:, D:]], axis=1)

    def attn_in_b(bi):                 # (1, 3D) -> (3, D), scale folded into bq row
        b = bi.reshape(3, D)
        return jnp.concatenate([b[:1] * scale, b[1:]], axis=0)

    w_in, w_out, b_in, vec, l1w, l2w, l1b = [], [], [], [], [], [], []
    for p in layer_params:
        w_in.append(jnp.stack([attn_in_w(p["sa_wi"]), attn_in_w(p["ca_wi"])]))
        w_out.append(jnp.stack([p["sa_wo"].T, p["ca_wo"].T]))
        b_in.append(jnp.stack([attn_in_b(p["sa_bi"]), attn_in_b(p["ca_bi"])]))
        vec.append(jnp.concatenate([p["sa_bo"], p["ca_bo"], p["l2_b"],
                                    p["n1_w"], p["n1_b"], p["n2_w"], p["n2_b"],
                                    p["n3_w"], p["n3_b"]], axis=0))
        l1w.append(p["l1_w"].T)
        l2w.append(p["l2_w"].T)
        l1b.append(p["l1_b"])
    nf_w, nf_b = decoder_norm
    return {
        "w_in": jnp.stack(w_in).astype(jnp.bfloat16),    # (Lyr, 2, D, 3D)
        "w_out": jnp.stack(w_out).astype(jnp.bfloat16),  # (Lyr, 2, D, D)
        "b_in": jnp.stack(b_in).astype(jnp.float32),     # (Lyr, 2, 3, D)
        "vec": jnp.stack(vec).astype(jnp.float32),       # (Lyr, 9, D)
        "l1w": jnp.stack(l1w).astype(jnp.bfloat16),      # (Lyr, D, F)
        "l2w": jnp.stack(l2w).astype(jnp.bfloat16),      # (Lyr, F, D)
        "l1b": jnp.stack(l1b).astype(jnp.float32),       # (Lyr, 1, F)
        "nf": jnp.concatenate([nf_w, nf_b], axis=0).astype(jnp.float32),  # (2, D)
    }


# ------------------------------- wrapper ---------------------------------------------

def _choose_window_block(n_windows, l_q, s_mem, *, target_rows=256, max_rows=4096):
    """How many windows to process per grid step (must divide n_windows and keep the
    second-minor block dim layout-legal: multiple of 8 or the full axis)."""
    divisors = [d for d in range(1, n_windows + 1) if n_windows % d == 0]
    ok = [d for d in divisors
          if (d % 8 == 0 or d == n_windows) and d * max(l_q, s_mem) <= max_rows]
    if not ok:
        return n_windows
    for d in ok:
        if d * l_q >= target_rows:
            return d
    return ok[-1]


def _vmem_limit_bytes(L, S, Nb, D, F, has_qpos, has_pos):
    f4, b2 = 4, 2
    acts = (1 + int(has_qpos)) * L * Nb * D * f4 + (1 + int(has_pos)) * S * Nb * D * f4
    outb = L * Nb * D * f4
    wts = (2 * D * 3 * D + 2 * D * D + D * F + F * D) * b2 + (6 * D + F + 11 * D) * f4
    scr = (1 + int(has_qpos)) * Nb * L * D * f4 + (1 + int(has_pos)) * Nb * S * D * b2
    est = 2 * (acts + outb + wts) + scr + (2 << 20)
    # never below the default scoped limit, never above v7x physical VMEM
    return int(min(64 << 20, max(32 << 20, 2 * est)))


def win_decoder_forward(tgt, memory, packed, *, nhead, query_pos=None, pos=None,
                        window_block=None, out_dtype=jnp.float32):
    """Fused TransformerDecoder (return_intermediate=False): all DecoderLayers plus the
    final LayerNorm in one pallas_call.  tgt: (L, N, D), memory: (S, N, D) torch layout.
    Returns (1, L, N, D), matching `output.unsqueeze(0)`."""
    L, N, D = tgt.shape
    S = memory.shape[0]
    num_layers = packed["w_in"].shape[0]
    F = packed["l1w"].shape[-1]
    has_qpos = query_pos is not None
    has_pos = pos is not None

    Nb = window_block if window_block is not None else _choose_window_block(N, L, S)
    assert N % Nb == 0, "window block must divide the (windows x batch) axis"
    n_blocks = N // Nb

    def act_spec(T):
        return pl.BlockSpec((T, Nb, D), lambda b, l: (0, b, 0))

    def w_spec(arr):
        nd = arr.ndim
        return pl.BlockSpec((None,) + arr.shape[1:],
                            lambda b, l, _nd=nd: (l,) + (0,) * (_nd - 1))

    in_specs = [act_spec(L), act_spec(S)]
    args = [tgt.astype(jnp.float32), memory.astype(jnp.float32)]
    if has_qpos:
        in_specs.append(act_spec(L))
        args.append(query_pos.astype(jnp.float32))
    if has_pos:
        in_specs.append(act_spec(S))
        args.append(pos.astype(jnp.float32))
    for name in ("w_in", "w_out", "b_in", "l1w", "l2w", "l1b", "vec"):
        in_specs.append(w_spec(packed[name]))
        args.append(packed[name])
    in_specs.append(pl.BlockSpec((2, D), lambda b, l: (0, 0)))
    args.append(packed["nf"])

    scratch_shapes = [pltpu.VMEM((Nb * L, D), jnp.float32),     # residual-stream carry
                      pltpu.VMEM((Nb * S, D), jnp.bfloat16)]    # memory (cross V)
    if has_pos:
        scratch_shapes.append(pltpu.VMEM((Nb * S, D), jnp.bfloat16))  # memory + pos (cross K)
    if has_qpos:
        scratch_shapes.append(pltpu.VMEM((Nb * L, D), jnp.float32))   # query_pos

    kernel = functools.partial(_win_decoder_kernel, nhead=nhead,
                               has_qpos=has_qpos, has_pos=has_pos)

    out = pl.pallas_call(
        kernel,
        out_shape=jax.ShapeDtypeStruct((L, N, D), out_dtype),
        grid_spec=pltpu.PrefetchScalarGridSpec(
            num_scalar_prefetch=0,
            grid=(n_blocks, num_layers),        # layer axis innermost, sequential
            in_specs=in_specs,
            out_specs=pl.BlockSpec((L, Nb, D), lambda b, l: (0, b, 0)),
            scratch_shapes=scratch_shapes,
        ),
        compiler_params=pltpu.CompilerParams(
            dimension_semantics=("parallel", "arbitrary"),
            vmem_limit_bytes=_vmem_limit_bytes(L, S, Nb, D, F, has_qpos, has_pos)),
    )(*args)
    return out[None]


# ------------------------------- pure-JAX reference ----------------------------------

def _ref_layer_norm(x, w, b, eps=1e-5):
    mu = jnp.mean(x, axis=-1, keepdims=True)
    var = jnp.mean((x - mu) ** 2, axis=-1, keepdims=True)
    return (x - mu) * jax.lax.rsqrt(var + eps) * w + b


def _ref_mha(q_in, k_in, v_in, wi, bi, wo, bo, nhead):
    D = q_in.shape[-1]
    Dh = D // nhead
    wq, wk, wv = wi[:D], wi[D:2 * D], wi[2 * D:]
    bq, bk, bv = bi[:, :D], bi[:, D:2 * D], bi[:, 2 * D:]
    Q = q_in @ wq.T + bq
    K = k_in @ wk.T + bk
    V = v_in @ wv.T + bv
    scale = 1.0 / math.sqrt(Dh)
    outs = []
    for h in range(nhead):
        Qh = Q[:, h * Dh:(h + 1) * Dh] * scale
        Kh = K[:, h * Dh:(h + 1) * Dh]
        Vh = V[:, h * Dh:(h + 1) * Dh]
        a = jax.nn.softmax(Qh @ Kh.T, axis=-1)
        outs.append(a @ Vh)
    return jnp.concatenate(outs, axis=-1) @ wo.T + bo


def _ref_decoder_layer(t, m, qp, po, p, nhead):
    q = t + qp
    t2 = _ref_mha(q, q, t, p["sa_wi"], p["sa_bi"], p["sa_wo"], p["sa_bo"], nhead)
    t = _ref_layer_norm(t + t2, p["n1_w"], p["n1_b"])
    t2 = _ref_mha(t + qp, m + po, m,
                  p["ca_wi"], p["ca_bi"], p["ca_wo"], p["ca_bo"], nhead)
    t = _ref_layer_norm(t + t2, p["n2_w"], p["n2_b"])
    t2 = jnp.maximum(t @ p["l1_w"].T + p["l1_b"], 0.0) @ p["l2_w"].T + p["l2_b"]
    return _ref_layer_norm(t + t2, p["n3_w"], p["n3_b"])


def _ref_decoder(tgt, memory, layer_params, norm_w, norm_b, nhead, query_pos, pos):
    out = tgt
    for p in layer_params:
        fn = lambda t, m, qp, po, _p=p: _ref_decoder_layer(t, m, qp, po, _p, nhead)
        out = jax.vmap(fn, in_axes=(1, 1, 1, 1), out_axes=1)(out, memory, query_pos, pos)
    return _ref_layer_norm(out, norm_w, norm_b)[None]


# ------------------------------- parameter init --------------------------------------

def init_layer_params(key, d_model, nhead, dim_feedforward):
    ks = jax.random.split(key, 12)
    s = 0.1
    D, F = d_model, dim_feedforward
    return {
        "sa_wi": jax.random.normal(ks[0], (3 * D, D), jnp.float32) * s,
        "sa_bi": jax.random.normal(ks[1], (1, 3 * D), jnp.float32) * s,
        "sa_wo": jax.random.normal(ks[2], (D, D), jnp.float32) * s,
        "sa_bo": jax.random.normal(ks[3], (1, D), jnp.float32) * s,
        "ca_wi": jax.random.normal(ks[4], (3 * D, D), jnp.float32) * s,
        "ca_bi": jax.random.normal(ks[5], (1, 3 * D), jnp.float32) * s,
        "ca_wo": jax.random.normal(ks[6], (D, D), jnp.float32) * s,
        "ca_bo": jax.random.normal(ks[7], (1, D), jnp.float32) * s,
        "l1_w": jax.random.normal(ks[8], (F, D), jnp.float32) * s,
        "l1_b": jax.random.normal(ks[9], (1, F), jnp.float32) * s,
        "l2_w": jax.random.normal(ks[10], (D, F), jnp.float32) * s,
        "l2_b": jax.random.normal(ks[11], (1, D), jnp.float32) * s,
        "n1_w": jnp.ones((1, D), jnp.float32), "n1_b": jnp.zeros((1, D), jnp.float32),
        "n2_w": jnp.ones((1, D), jnp.float32), "n2_b": jnp.zeros((1, D), jnp.float32),
        "n3_w": jnp.ones((1, D), jnp.float32), "n3_b": jnp.zeros((1, D), jnp.float32),
    }


# ------------------------------- demo -------------------------------------------------

if __name__ == "__main__":
    d_model, nhead, dim_feedforward, num_layers = 32, 4, 64, 2
    L, S, N = 8, 16, 2   # window query len, window memory len, (#windows x batch)

    key = jax.random.PRNGKey(0)
    k1, k2, k3, k4, k5 = jax.random.split(key, 5)
    tgt = jax.random.normal(k1, (L, N, d_model), jnp.float32)
    memory = jax.random.normal(k2, (S, N, d_model), jnp.float32)
    query_pos = jax.random.normal(k3, (L, N, d_model), jnp.float32)
    pos = jax.random.normal(k4, (S, N, d_model), jnp.float32)

    layer_params = [init_layer_params(jax.random.fold_in(k5, i),
                                      d_model, nhead, dim_feedforward)
                    for i in range(num_layers)]
    norm_w = jnp.ones((1, d_model), jnp.float32)   # decoder_norm (torch default init)
    norm_b = jnp.zeros((1, d_model), jnp.float32)

    # pack once (hoisted out of the forward), jit the fused forward
    packed = pack_decoder_params(layer_params, (norm_w, norm_b), nhead)
    fwd = jax.jit(functools.partial(win_decoder_forward, nhead=nhead))

    out = fwd(tgt, memory, packed, query_pos=query_pos, pos=pos)
    out = jax.block_until_ready(out)

    ref = _ref_decoder(tgt, memory, layer_params, norm_w, norm_b,
                       nhead, query_pos, pos)

    assert out.shape == (1, L, N, d_model)
    max_err = float(jnp.max(jnp.abs(out - ref)))
    # kernel runs MXU in bf16 (f32 accumulation) + approx reciprocal in softmax,
    # the reference is pure f32 -> allow a small numeric gap.
    assert jnp.allclose(out, ref, atol=5e-2, rtol=5e-2), \
        f"mismatch vs reference, max abs err {max_err}"
    print("KERNEL_OK")
</pallas_src>

<mosaic_0001>
module attributes {stable_mosaic.version = 11 : i64} {
  func.func @_win_decoder_kernel(%arg0: i32, %arg1: i32, %arg2: memref<8x2x32xf32, #tpu.memory_space<vmem>>, %arg3: memref<16x2x32xf32, #tpu.memory_space<vmem>>, %arg4: memref<8x2x32xf32, #tpu.memory_space<vmem>>, %arg5: memref<16x2x32xf32, #tpu.memory_space<vmem>>, %arg6: memref<1x2x32x96xbf16, #tpu.memory_space<vmem>>, %arg7: memref<1x2x32x32xbf16, #tpu.memory_space<vmem>>, %arg8: memref<1x2x3x32xf32, #tpu.memory_space<vmem>>, %arg9: memref<1x32x64xbf16, #tpu.memory_space<vmem>>, %arg10: memref<1x64x32xbf16, #tpu.memory_space<vmem>>, %arg11: memref<1x1x64xf32, #tpu.memory_space<vmem>>, %arg12: memref<1x9x32xf32, #tpu.memory_space<vmem>>, %arg13: memref<2x32xf32, #tpu.memory_space<vmem>>, %arg14: memref<8x2x32xf32, #tpu.memory_space<vmem>>, %arg15: memref<16x32xf32, #tpu.memory_space<vmem>>, %arg16: memref<32x32xbf16, #tpu.memory_space<vmem>>, %arg17: memref<32x32xbf16, #tpu.memory_space<vmem>>, %arg18: memref<16x32xf32, #tpu.memory_space<vmem>>) attributes {dimension_semantics = [#tpu.dimension_semantics<parallel>, #tpu.dimension_semantics<arbitrary>], iteration_bounds = array<i64: 1, 2>, scalar_prefetch = 0 : i64, scratch_operands = 4 : i64, tpu.core_type = #tpu.core_type<tc>, window_params = [{transform_indices = @transform_0, window_bounds = array<i64: 8, 2, 32>}, {transform_indices = @transform_1, window_bounds = array<i64: 16, 2, 32>}, {transform_indices = @transform_2, window_bounds = array<i64: 8, 2, 32>}, {transform_indices = @transform_3, window_bounds = array<i64: 16, 2, 32>}, {transform_indices = @transform_4, window_bounds = array<i64: 1, 2, 32, 96>}, {transform_indices = @transform_5, window_bounds = array<i64: 1, 2, 32, 32>}, {transform_indices = @transform_6, window_bounds = array<i64: 1, 2, 3, 32>}, {transform_indices = @transform_7, window_bounds = array<i64: 1, 32, 64>}, {transform_indices = @transform_8, window_bounds = array<i64: 1, 64, 32>}, {transform_indices = @transform_9, window_bounds = array<i64: 1, 1, 64>}, {transform_indices = @transform_10, window_bounds = array<i64: 1, 9, 32>}, {pipeline_mode = #tpu.pipeline_mode<synchronous>, transform_indices = @transform_11, window_bounds = array<i64: 2, 32>}, {transform_indices = @transform_12, window_bounds = array<i64: 8, 2, 32>}]} {
    %c0_i32 = arith.constant 0 : i32
    %0 = arith.cmpi eq, %arg1, %c0_i32 : i32
    %1 = arith.extui %0 : i1 to i32
    %c0_i32_0 = arith.constant 0 : i32
    %2 = arith.cmpi ne, %1, %c0_i32_0 : i32
    scf.if %2 {
      %c0_145 = arith.constant 0 : index
      %c0_146 = arith.constant 0 : index
      %c0_147 = arith.constant 0 : index
      %316 = vector.load %arg2[%c0_145, %c0_146, %c0_147] : memref<8x2x32xf32, #tpu.memory_space<vmem>>, vector<8x1x32xf32>
      %317 = vector.shape_cast %316 : vector<8x1x32xf32> to vector<8x32xf32>
      %c0_148 = arith.constant 0 : index
      %c0_149 = arith.constant 0 : index
      %318 = vector.load %arg15[%c0_148, %c0_149] : memref<16x32xf32, #tpu.memory_space<vmem>>, vector<8x32xf32>
      tpu.vector_store %arg15[%c0_148, %c0_149], %317 {strides = array<i32>} : memref<16x32xf32, #tpu.memory_space<vmem>>, vector<8x32xf32>,
      %c0_150 = arith.constant 0 : index
      %c0_151 = arith.constant 0 : index
      %c0_152 = arith.constant 0 : index
      %319 = vector.load %arg4[%c0_150, %c0_151, %c0_152] : memref<8x2x32xf32, #tpu.memory_space<vmem>>, vector<8x1x32xf32>
      %320 = vector.shape_cast %319 : vector<8x1x32xf32> to vector<8x32xf32>
      %c0_153 = arith.constant 0 : index
      %c0_154 = arith.constant 0 : index
      %321 = vector.load %arg18[%c0_153, %c0_154] : memref<16x32xf32, #tpu.memory_space<vmem>>, vector<8x32xf32>
      tpu.vector_store %arg18[%c0_153, %c0_154], %320 {strides = array<i32>} : memref<16x32xf32, #tpu.memory_space<vmem>>, vector<8x32xf32>,
      %c0_155 = arith.constant 0 : index
      %c0_156 = arith.constant 0 : index
      %c0_157 = arith.constant 0 : index
      %322 = vector.load %arg3[%c0_155, %c0_156, %c0_157] : memref<16x2x32xf32, #tpu.memory_space<vmem>>, vector<16x1x32xf32>
      %323 = vector.shape_cast %322 : vector<16x1x32xf32> to vector<16x32xf32>
      %324 = arith.truncf %323 : vector<16x32xf32> to vector<16x32xbf16>
      %c0_158 = arith.constant 0 : index
      %c0_159 = arith.constant 0 : index
      %325 = vector.load %arg16[%c0_158, %c0_159] : memref<32x32xbf16, #tpu.memory_space<vmem>>, vector<16x32xbf16>
      tpu.vector_store %arg16[%c0_158, %c0_159], %324 {strides = array<i32>} : memref<32x32xbf16, #tpu.memory_space<vmem>>, vector<16x32xbf16>,
      %c0_160 = arith.constant 0 : index
      %c0_161 = arith.constant 0 : index
      %c0_162 = arith.constant 0 : index
      %326 = vector.load %arg5[%c0_160, %c0_161, %c0_162] : memref<16x2x32xf32, #tpu.memory_space<vmem>>, vector<16x1x32xf32>
      %327 = vector.shape_cast %326 : vector<16x1x32xf32> to vector<16x32xf32>
      %328 = arith.addf %323, %327 : vector<16x32xf32>
      %329 = arith.truncf %328 : vector<16x32xf32> to vector<16x32xbf16>
      %c0_163 = arith.constant 0 : index
      %c0_164 = arith.constant 0 : index
      %330 = vector.load %arg17[%c0_163, %c0_164] : memref<32x32xbf16, #tpu.memory_space<vmem>>, vector<16x32xbf16>
      tpu.vector_store %arg17[%c0_163, %c0_164], %329 {strides = array<i32>} : memref<32x32xbf16, #tpu.memory_space<vmem>>, vector<16x32xbf16>,
      %c0_165 = arith.constant 0 : index
      %c1_166 = arith.constant 1 : index
      %c0_167 = arith.constant 0 : index
      %331 = vector.load %arg2[%c0_165, %c1_166, %c0_167] : memref<8x2x32xf32, #tpu.memory_space<vmem>>, vector<8x1x32xf32>
      %332 = vector.shape_cast %331 : vector<8x1x32xf32> to vector<8x32xf32>
      %c8_168 = arith.constant 8 : index
      %c0_169 = arith.constant 0 : index
      %333 = vector.load %arg15[%c8_168, %c0_169] : memref<16x32xf32, #tpu.memory_space<vmem>>, vector<8x32xf32>
      tpu.vector_store %arg15[%c8_168, %c0_169], %332 {strides = array<i32>} : memref<16x32xf32, #tpu.memory_space<vmem>>, vector<8x32xf32>,
      %c0_170 = arith.constant 0 : index
      %c1_171 = arith.constant 1 : index
      %c0_172 = arith.constant 0 : index
      %334 = vector.load %arg4[%c0_170, %c1_171, %c0_172] : memref<8x2x32xf32, #tpu.memory_space<vmem>>, vector<8x1x32xf32>
      %335 = vector.shape_cast %334 : vector<8x1x32xf32> to vector<8x32xf32>
      %c8_173 = arith.constant 8 : index
      %c0_174 = arith.constant 0 : index
      %336 = vector.load %arg18[%c8_173, %c0_174] : memref<16x32xf32, #tpu.memory_space<vmem>>, vector<8x32xf32>
      tpu.vector_store %arg18[%c8_173, %c0_174], %335 {strides = array<i32>} : memref<16x32xf32, #tpu.memory_space<vmem>>, vector<8x32xf32>,
      %c0_175 = arith.constant 0 : index
      %c1_176 = arith.constant 1 : index
      %c0_177 = arith.constant 0 : index
      %337 = vector.load %arg3[%c0_175, %c1_176, %c0_177] : memref<16x2x32xf32, #tpu.memory_space<vmem>>, vector<16x1x32xf32>
      %338 = vector.shape_cast %337 : vector<16x1x32xf32> to vector<16x32xf32>
      %339 = arith.truncf %338 : vector<16x32xf32> to vector<16x32xbf16>
      %c16 = arith.constant 16 : index
      %c0_178 = arith.constant 0 : index
      %340 = vector.load %arg16[%c16, %c0_178] : memref<32x32xbf16, #tpu.memory_space<vmem>>, vector<16x32xbf16>
      tpu.vector_store %arg16[%c16, %c0_178], %339 {strides = array<i32>} : memref<32x32xbf16, #tpu.memory_space<vmem>>, vector<16x32xbf16>,
      %c0_179 = arith.constant 0 : index
      %c1_180 = arith.constant 1 : index
      %c0_181 = arith.constant 0 : index
      %341 = vector.load %arg5[%c0_179, %c1_180, %c0_181] : memref<16x2x32xf32, #tpu.memory_space<vmem>>, vector<16x1x32xf32>
      %342 = vector.shape_cast %341 : vector<16x1x32xf32> to vector<16x32xf32>
      %343 = arith.addf %338, %342 : vector<16x32xf32>
      %344 = arith.truncf %343 : vector<16x32xf32> to vector<16x32xbf16>
      %c16_182 = arith.constant 16 : index
      %c0_183 = arith.constant 0 : index
      %345 = vector.load %arg17[%c16_182, %c0_183] : memref<32x32xbf16, #tpu.memory_space<vmem>>, vector<16x32xbf16>
      tpu.vector_store %arg17[%c16_182, %c0_183], %344 {strides = array<i32>} : memref<32x32xbf16, #tpu.memory_space<vmem>>, vector<16x32xbf16>,
    } else {
    }
    %c0 = arith.constant 0 : index
    %c0_1 = arith.constant 0 : index
    %3 = vector.load %arg15[%c0, %c0_1] : memref<16x32xf32, #tpu.memory_space<vmem>>, vector<16x32xf32>
    %c0_2 = arith.constant 0 : index
    %c0_3 = arith.constant 0 : index
    %4 = vector.load %arg18[%c0_2, %c0_3] : memref<16x32xf32, #tpu.memory_space<vmem>>, vector<16x32xf32>
    %5 = arith.addf %3, %4 : vector<16x32xf32>
    %6 = arith.truncf %5 : vector<16x32xf32> to vector<16x32xbf16>
    %7 = arith.truncf %3 : vector<16x32xf32> to vector<16x32xbf16>
    %c0_4 = arith.constant 0 : index
    %c0_5 = arith.constant 0 : index
    %c0_6 = arith.constant 0 : index
    %8 = vector.load %arg12[%c0_4, %c0_5, %c0_6] : memref<1x9x32xf32, #tpu.memory_space<vmem>>, vector<1x1x32xf32>
    %9 = vector.shape_cast %8 : vector<1x1x32xf32> to vector<1x32xf32>
    %c0_7 = arith.constant 0 : index
    %c0_8 = arith.constant 0 : index
    %c0_9 = arith.constant 0 : index
    %c0_10 = arith.constant 0 : index
    %10 = vector.load %arg6[%c0_7, %c0_8, %c0_9, %c0_10] : memref<1x2x32x96xbf16, #tpu.memory_space<vmem>>, vector<1x1x32x64xbf16>
    %11 = vector.shape_cast %10 : vector<1x1x32x64xbf16> to vector<32x64xbf16>
    %cst = arith.constant dense<0.000000e+00> : vector<16x64xf32>
    %12 = tpu.matmul %6, %11, %cst {dimension_numbers = #tpu.dot_dimension_numbers<[1], [0], [0], [1], [0, 0, 1, 1], [], []>} : vector<16x32xbf16>, vector<32x64xbf16>, vector<16x64xf32> -> vector<16x64xf32>
    %13 = vector.extract_strided_slice %12 {offsets = [0, 0], sizes = [16, 32], strides = [1, 1]} : vector<16x64xf32> to vector<16x32xf32>
    %c0_11 = arith.constant 0 : index
    %c0_12 = arith.constant 0 : index
    %c0_13 = arith.constant 0 : index
    %c0_14 = arith.constant 0 : index
    %14 = vector.load %arg8[%c0_11, %c0_12, %c0_13, %c0_14] : memref<1x2x3x32xf32, #tpu.memory_space<vmem>>, vector<1x1x1x32xf32>
    %15 = vector.shape_cast %14 : vector<1x1x1x32xf32> to vector<1x32xf32>
    %16 = vector.broadcast %15 : vector<1x32xf32> to vector<16x32xf32>
    %17 = arith.addf %13, %16 : vector<16x32xf32>
    %18 = vector.extract_strided_slice %12 {offsets = [0, 32], sizes = [16, 32], strides = [1, 1]} : vector<16x64xf32> to vector<16x32xf32>
    %c0_15 = arith.constant 0 : index
    %c0_16 = arith.constant 0 : index
    %c1 = arith.constant 1 : index
    %c0_17 = arith.constant 0 : index
    %19 = vector.load %arg8[%c0_15, %c0_16, %c1, %c0_17] : memref<1x2x3x32xf32, #tpu.memory_space<vmem>>, vector<1x1x1x32xf32>
    %20 = vector.shape_cast %19 : vector<1x1x1x32xf32> to vector<1x32xf32>
    %21 = vector.broadcast %20 : vector<1x32xf32> to vector<16x32xf32>
    %22 = arith.addf %18, %21 : vector<16x32xf32>
    %c0_18 = arith.constant 0 : index
    %c0_19 = arith.constant 0 : index
    %c0_20 = arith.constant 0 : index
    %c64 = arith.constant 64 : index
    %23 = vector.load %arg6[%c0_18, %c0_19, %c0_20, %c64] : memref<1x2x32x96xbf16, #tpu.memory_space<vmem>>, vector<1x1x32x32xbf16>
    %24 = vector.shape_cast %23 : vector<1x1x32x32xbf16> to vector<32x32xbf16>
    %cst_21 = arith.constant dense<0.000000e+00> : vector<16x32xf32>
    %25 = tpu.matmul %7, %24, %cst_21 {dimension_numbers = #tpu.dot_dimension_numbers<[1], [0], [0], [1], [0, 0, 1, 1], [], []>} : vector<16x32xbf16>, vector<32x32xbf16>, vector<16x32xf32> -> vector<16x32xf32>
    %c0_22 = arith.constant 0 : index
    %c0_23 = arith.constant 0 : index
    %c2 = arith.constant 2 : index
    %c0_24 = arith.constant 0 : index
    %26 = vector.load %arg8[%c0_22, %c0_23, %c2, %c0_24] : memref<1x2x3x32xf32, #tpu.memory_space<vmem>>, vector<1x1x1x32xf32>
    %27 = vector.shape_cast %26 : vector<1x1x1x32xf32> to vector<1x32xf32>
    %28 = vector.broadcast %27 : vector<1x32xf32> to vector<16x32xf32>
    %29 = arith.addf %25, %28 : vector<16x32xf32>
    %30 = arith.truncf %17 : vector<16x32xf32> to vector<16x32xbf16>
    %31 = vector.shape_cast %30 : vector<16x32xbf16> to vector<2x8x32xbf16>
    %32 = arith.truncf %22 : vector<16x32xf32> to vector<16x32xbf16>
    %33 = vector.shape_cast %32 : vector<16x32xbf16> to vector<2x8x32xbf16>
    %34 = arith.truncf %29 : vector<16x32xf32> to vector<16x32xbf16>
    %35 = vector.shape_cast %34 : vector<16x32xbf16> to vector<2x8x32xbf16>
    %36 = vector.extract_strided_slice %31 {offsets = [0, 0, 0], sizes = [2, 8, 8], strides = [1, 1, 1]} : vector<2x8x32xbf16> to vector<2x8x8xbf16>
    %37 = vector.extract_strided_slice %33 {offsets = [0, 0, 0], sizes = [2, 8, 8], strides = [1, 1, 1]} : vector<2x8x32xbf16> to vector<2x8x8xbf16>
    "tpu.trace_start"() <{level = 10 : i32, message = "bld,bsd->bls"}> : () -> ()
    %cst_25 = arith.constant dense<0.000000e+00> : vector<2x8x8xf32>
    %38 = tpu.matmul %36, %37, %cst_25 {dimension_numbers = #tpu.dot_dimension_numbers<[2], [2], [1], [1], [0, 0, 0, 1, 1, 1], [0], [0]>} : vector<2x8x8xbf16>, vector<2x8x8xbf16>, vector<2x8x8xf32> -> vector<2x8x8xf32>
    "tpu.trace_stop"() : () -> ()
    %cst_26 = arith.constant dense<0xFF800000> : vector<2x8xf32>
    %39 = vector.multi_reduction <maximumf>, %38, %cst_26 [2] : vector<2x8x8xf32> to vector<2x8xf32>
    %40 = vector.shape_cast %39 : vector<2x8xf32> to vector<2x8x1xf32>
    %41 = vector.broadcast %40 : vector<2x8x1xf32> to vector<2x8x8xf32>
    %42 = arith.subf %38, %41 : vector<2x8x8xf32>
    %43 = math.exp %42 : vector<2x8x8xf32>
    %cst_27 = arith.constant dense<0.000000e+00> : vector<2x8xf32>
    %44 = vector.multi_reduction <add>, %43, %cst_27 [2] : vector<2x8x8xf32> to vector<2x8xf32>
    %45 = vector.shape_cast %44 : vector<2x8xf32> to vector<2x8x1xf32>
    %46 = tpu.reciprocal %45 {approx = true} : vector<2x8x1xf32> -> vector<2x8x1xf32>
    %47 = vector.broadcast %46 : vector<2x8x1xf32> to vector<2x8x8xf32>
    %48 = arith.mulf %43, %47 : vector<2x8x8xf32>
    %49 = arith.truncf %48 : vector<2x8x8xf32> to vector<2x8x8xbf16>
    %50 = vector.extract_strided_slice %35 {offsets = [0, 0, 0], sizes = [2, 8, 8], strides = [1, 1, 1]} : vector<2x8x32xbf16> to vector<2x8x8xbf16>
    "tpu.trace_start"() <{level = 10 : i32, message = "bls,bsd->bld"}> : () -> ()
    %cst_28 = arith.constant dense<0.000000e+00> : vector<2x8x8xf32>
    %51 = tpu.matmul %49, %50, %cst_28 {dimension_numbers = #tpu.dot_dimension_numbers<[2], [1], [1], [2], [0, 0, 0, 1, 1, 2], [0], [0]>} : vector<2x8x8xbf16>, vector<2x8x8xbf16>, vector<2x8x8xf32> -> vector<2x8x8xf32>
    "tpu.trace_stop"() : () -> ()
    %52 = vector.extract_strided_slice %31 {offsets = [0, 0, 8], sizes = [2, 8, 8], strides = [1, 1, 1]} : vector<2x8x32xbf16> to vector<2x8x8xbf16>
    %53 = vector.extract_strided_slice %33 {offsets = [0, 0, 8], sizes = [2, 8, 8], strides = [1, 1, 1]} : vector<2x8x32xbf16> to vector<2x8x8xbf16>
    "tpu.trace_start"() <{level = 10 : i32, message = "bld,bsd->bls"}> : () -> ()
    %cst_29 = arith.constant dense<0.000000e+00> : vector<2x8x8xf32>
    %54 = tpu.matmul %52, %53, %cst_29 {dimension_numbers = #tpu.dot_dimension_numbers<[2], [2], [1], [1], [0, 0, 0, 1, 1, 1], [0], [0]>} : vector<2x8x8xbf16>, vector<2x8x8xbf16>, vector<2x8x8xf32> -> vector<2x8x8xf32>
    "tpu.trace_stop"() : () -> ()
    %cst_30 = arith.constant dense<0xFF800000> : vector<2x8xf32>
    %55 = vector.multi_reduction <maximumf>, %54, %cst_30 [2] : vector<2x8x8xf32> to vector<2x8xf32>
    %56 = vector.shape_cast %55 : vector<2x8xf32> to vector<2x8x1xf32>
    %57 = vector.broadcast %56 : vector<2x8x1xf32> to vector<2x8x8xf32>
    %58 = arith.subf %54, %57 : vector<2x8x8xf32>
    %59 = math.exp %58 : vector<2x8x8xf32>
    %cst_31 = arith.constant dense<0.000000e+00> : vector<2x8xf32>
    %60 = vector.multi_reduction <add>, %59, %cst_31 [2] : vector<2x8x8xf32> to vector<2x8xf32>
    %61 = vector.shape_cast %60 : vector<2x8xf32> to vector<2x8x1xf32>
    %62 = tpu.reciprocal %61 {approx = true} : vector<2x8x1xf32> -> vector<2x8x1xf32>
    %63 = vector.broadcast %62 : vector<2x8x1xf32> to vector<2x8x8xf32>
    %64 = arith.mulf %59, %63 : vector<2x8x8xf32>
    %65 = arith.truncf %64 : vector<2x8x8xf32> to vector<2x8x8xbf16>
    %66 = vector.extract_strided_slice %35 {offsets = [0, 0, 8], sizes = [2, 8, 8], strides = [1, 1, 1]} : vector<2x8x32xbf16> to vector<2x8x8xbf16>
    "tpu.trace_start"() <{level = 10 : i32, message = "bls,bsd->bld"}> : () -> ()
    %cst_32 = arith.constant dense<0.000000e+00> : vector<2x8x8xf32>
    %67 = tpu.matmul %65, %66, %cst_32 {dimension_numbers = #tpu.dot_dimension_numbers<[2], [1], [1], [2], [0, 0, 0, 1, 1, 2], [0], [0]>} : vector<2x8x8xbf16>, vector<2x8x8xbf16>, vector<2x8x8xf32> -> vector<2x8x8xf32>
    "tpu.trace_stop"() : () -> ()
    %68 = vector.extract_strided_slice %31 {offsets = [0, 0, 16], sizes = [2, 8, 8], strides = [1, 1, 1]} : vector<2x8x32xbf16> to vector<2x8x8xbf16>
    %69 = vector.extract_strided_slice %33 {offsets = [0, 0, 16], sizes = [2, 8, 8], strides = [1, 1, 1]} : vector<2x8x32xbf16> to vector<2x8x8xbf16>
    "tpu.trace_start"() <{level = 10 : i32, message = "bld,bsd->bls"}> : () -> ()
    %cst_33 = arith.constant dense<0.000000e+00> : vector<2x8x8xf32>
    %70 = tpu.matmul %68, %69, %cst_33 {dimension_numbers = #tpu.dot_dimension_numbers<[2], [2], [1], [1], [0, 0, 0, 1, 1, 1], [0], [0]>} : vector<2x8x8xbf16>, vector<2x8x8xbf16>, vector<2x8x8xf32> -> vector<2x8x8xf32>
    "tpu.trace_stop"() : () -> ()
    %cst_34 = arith.constant dense<0xFF800000> : vector<2x8xf32>
    %71 = vector.multi_reduction <maximumf>, %70, %cst_34 [2] : vector<2x8x8xf32> to vector<2x8xf32>
    %72 = vector.shape_cast %71 : vector<2x8xf32> to vector<2x8x1xf32>
    %73 = vector.broadcast %72 : vector<2x8x1xf32> to vector<2x8x8xf32>
    %74 = arith.subf %70, %73 : vector<2x8x8xf32>
    %75 = math.exp %74 : vector<2x8x8xf32>
    %cst_35 = arith.constant dense<0.000000e+00> : vector<2x8xf32>
    %76 = vector.multi_reduction <add>, %75, %cst_35 [2] : vector<2x8x8xf32> to vector<2x8xf32>
    %77 = vector.shape_cast %76 : vector<2x8xf32> to vector<2x8x1xf32>
    %78 = tpu.reciprocal %77 {approx = true} : vector<2x8x1xf32> -> vector<2x8x1xf32>
    %79 = vector.broadcast %78 : vector<2x8x1xf32> to vector<2x8x8xf32>
    %80 = arith.mulf %75, %79 : vector<2x8x8xf32>
    %81 = arith.truncf %80 : vector<2x8x8xf32> to vector<2x8x8xbf16>
    %82 = vector.extract_strided_slice %35 {offsets = [0, 0, 16], sizes = [2, 8, 8], strides = [1, 1, 1]} : vector<2x8x32xbf16> to vector<2x8x8xbf16>
    "tpu.trace_start"() <{level = 10 : i32, message = "bls,bsd->bld"}> : () -> ()
    %cst_36 = arith.constant dense<0.000000e+00> : vector<2x8x8xf32>
    %83 = tpu.matmul %81, %82, %cst_36 {dimension_numbers = #tpu.dot_dimension_numbers<[2], [1], [1], [2], [0, 0, 0, 1, 1, 2], [0], [0]>} : vector<2x8x8xbf16>, vector<2x8x8xbf16>, vector<2x8x8xf32> -> vector<2x8x8xf32>
    "tpu.trace_stop"() : () -> ()
    %84 = vector.extract_strided_slice %31 {offsets = [0, 0, 24], sizes = [2, 8, 8], strides = [1, 1, 1]} : vector<2x8x32xbf16> to vector<2x8x8xbf16>
    %85 = vector.extract_strided_slice %33 {offsets = [0, 0, 24], sizes = [2, 8, 8], strides = [1, 1, 1]} : vector<2x8x32xbf16> to vector<2x8x8xbf16>
    "tpu.trace_start"() <{level = 10 : i32, message = "bld,bsd->bls"}> : () -> ()
    %cst_37 = arith.constant dense<0.000000e+00> : vector<2x8x8xf32>
    %86 = tpu.matmul %84, %85, %cst_37 {dimension_numbers = #tpu.dot_dimension_numbers<[2], [2], [1], [1], [0, 0, 0, 1, 1, 1], [0], [0]>} : vector<2x8x8xbf16>, vector<2x8x8xbf16>, vector<2x8x8xf32> -> vector<2x8x8xf32>
    "tpu.trace_stop"() : () -> ()
    %cst_38 = arith.constant dense<0xFF800000> : vector<2x8xf32>
    %87 = vector.multi_reduction <maximumf>, %86, %cst_38 [2] : vector<2x8x8xf32> to vector<2x8xf32>
    %88 = vector.shape_cast %87 : vector<2x8xf32> to vector<2x8x1xf32>
    %89 = vector.broadcast %88 : vector<2x8x1xf32> to vector<2x8x8xf32>
    %90 = arith.subf %86, %89 : vector<2x8x8xf32>
    %91 = math.exp %90 : vector<2x8x8xf32>
    %cst_39 = arith.constant dense<0.000000e+00> : vector<2x8xf32>
    %92 = vector.multi_reduction <add>, %91, %cst_39 [2] : vector<2x8x8xf32> to vector<2x8xf32>
    %93 = vector.shape_cast %92 : vector<2x8xf32> to vector<2x8x1xf32>
    %94 = tpu.reciprocal %93 {approx = true} : vector<2x8x1xf32> -> vector<2x8x1xf32>
    %95 = vector.broadcast %94 : vector<2x8x1xf32> to vector<2x8x8xf32>
    %96 = arith.mulf %91, %95 : vector<2x8x8xf32>
    %97 = arith.truncf %96 : vector<2x8x8xf32> to vector<2x8x8xbf16>
    %98 = vector.extract_strided_slice %35 {offsets = [0, 0, 24], sizes = [2, 8, 8], strides = [1, 1, 1]} : vector<2x8x32xbf16> to vector<2x8x8xbf16>
    "tpu.trace_start"() <{level = 10 : i32, message = "bls,bsd->bld"}> : () -> ()
    %cst_40 = arith.constant dense<0.000000e+00> : vector<2x8x8xf32>
    %99 = tpu.matmul %97, %98, %cst_40 {dimension_numbers = #tpu.dot_dimension_numbers<[2], [1], [1], [2], [0, 0, 0, 1, 1, 2], [0], [0]>} : vector<2x8x8xbf16>, vector<2x8x8xbf16>, vector<2x8x8xf32> -> vector<2x8x8xf32>
    "tpu.trace_stop"() : () -> ()
    %100 = tpu.concatenate %51, %67, %83, %99 in 2 : vector<2x8x8xf32>, vector<2x8x8xf32>, vector<2x8x8xf32>, vector<2x8x8xf32> -> vector<2x8x32xf32>
    %101 = vector.shape_cast %100 : vector<2x8x32xf32> to vector<16x32xf32>
    %102 = arith.truncf %101 : vector<16x32xf32> to vector<16x32xbf16>
    %c0_41 = arith.constant 0 : index
    %c0_42 = arith.constant 0 : index
    %c0_43 = arith.constant 0 : index
    %c0_44 = arith.constant 0 : index
    %103 = vector.load %arg7[%c0_41, %c0_42, %c0_43, %c0_44] : memref<1x2x32x32xbf16, #tpu.memory_space<vmem>>, vector<1x1x32x32xbf16>
    %104 = vector.shape_cast %103 : vector<1x1x32x32xbf16> to vector<32x32xbf16>
    %cst_45 = arith.constant dense<0.000000e+00> : vector<16x32xf32>
    %105 = tpu.matmul %102, %104, %cst_45 {dimension_numbers = #tpu.dot_dimension_numbers<[1], [0], [0], [1], [0, 0, 1, 1], [], []>} : vector<16x32xbf16>, vector<32x32xbf16>, vector<16x32xf32> -> vector<16x32xf32>
    %106 = vector.broadcast %9 : vector<1x32xf32> to vector<16x32xf32>
    %107 = arith.addf %105, %106 : vector<16x32xf32>
    %108 = arith.addf %3, %107 : vector<16x32xf32>
    %c0_46 = arith.constant 0 : index
    %c3 = arith.constant 3 : index
    %c0_47 = arith.constant 0 : index
    %109 = vector.load %arg12[%c0_46, %c3, %c0_47] : memref<1x9x32xf32, #tpu.memory_space<vmem>>, vector<1x1x32xf32>
    %110 = vector.shape_cast %109 : vector<1x1x32xf32> to vector<1x32xf32>
    %c0_48 = arith.constant 0 : index
    %c4 = arith.constant 4 : index
    %c0_49 = arith.constant 0 : index
    %111 = vector.load %arg12[%c0_48, %c4, %c0_49] : memref<1x9x32xf32, #tpu.memory_space<vmem>>, vector<1x1x32xf32>
    %112 = vector.shape_cast %111 : vector<1x1x32xf32> to vector<1x32xf32>
    %cst_50 = arith.constant dense<0.000000e+00> : vector<16xf32>
    %113 = vector.multi_reduction <add>, %108, %cst_50 [1] : vector<16x32xf32> to vector<16xf32>
    %114 = vector.shape_cast %113 : vector<16xf32> to vector<16x1xf32>
    %cst_51 = arith.constant 3.200000e+01 : f32
    %115 = vector.broadcast %cst_51 : f32 to vector<16x1xf32>
    %116 = arith.divf %114, %115 : vector<16x1xf32>
    %117 = vector.broadcast %116 : vector<16x1xf32> to vector<16x32xf32>
    %118 = arith.subf %108, %117 : vector<16x32xf32>
    %119 = arith.mulf %118, %118 : vector<16x32xf32>
    %cst_52 = arith.constant dense<0.000000e+00> : vector<16xf32>
    %120 = vector.multi_reduction <add>, %119, %cst_52 [1] : vector<16x32xf32> to vector<16xf32>
    %121 = vector.shape_cast %120 : vector<16xf32> to vector<16x1xf32>
    %cst_53 = arith.constant 3.200000e+01 : f32
    %122 = vector.broadcast %cst_53 : f32 to vector<16x1xf32>
    %123 = arith.divf %121, %122 : vector<16x1xf32>
    %124 = vector.broadcast %116 : vector<16x1xf32> to vector<16x32xf32>
    %125 = arith.subf %108, %124 : vector<16x32xf32>
    %cst_54 = arith.constant 9.99999974E-6 : f32
    %126 = vector.broadcast %cst_54 : f32 to vector<16x1xf32>
    %127 = arith.addf %123, %126 : vector<16x1xf32>
    %128 = math.rsqrt %127 : vector<16x1xf32>
    %129 = vector.broadcast %128 : vector<16x1xf32> to vector<16x32xf32>
    %130 = arith.mulf %125, %129 : vector<16x32xf32>
    %131 = vector.broadcast %110 : vector<1x32xf32> to vector<16x32xf32>
    %132 = arith.mulf %130, %131 : vector<16x32xf32>
    %133 = vector.broadcast %112 : vector<1x32xf32> to vector<16x32xf32>
    %134 = arith.addf %132, %133 : vector<16x32xf32>
    %135 = arith.addf %134, %4 : vector<16x32xf32>
    %136 = arith.truncf %135 : vector<16x32xf32> to vector<16x32xbf16>
    %c0_55 = arith.constant 0 : index
    %c0_56 = arith.constant 0 : index
    %137 = vector.load %arg17[%c0_55, %c0_56] : memref<32x32xbf16, #tpu.memory_space<vmem>>, vector<32x32xbf16>
    %c0_57 = arith.constant 0 : index
    %c0_58 = arith.constant 0 : index
    %138 = vector.load %arg16[%c0_57, %c0_58] : memref<32x32xbf16, #tpu.memory_space<vmem>>, vector<32x32xbf16>
    %c0_59 = arith.constant 0 : index
    %c1_60 = arith.constant 1 : index
    %c0_61 = arith.constant 0 : index
    %139 = vector.load %arg12[%c0_59, %c1_60, %c0_61] : memref<1x9x32xf32, #tpu.memory_space<vmem>>, vector<1x1x32xf32>
    %140 = vector.shape_cast %139 : vector<1x1x32xf32> to vector<1x32xf32>
    %c0_62 = arith.constant 0 : index
    %c1_63 = arith.constant 1 : index
    %c0_64 = arith.constant 0 : index
    %c0_65 = arith.constant 0 : index
    %141 = vector.load %arg6[%c0_62, %c1_63, %c0_64, %c0_65] : memref<1x2x32x96xbf16, #tpu.memory_space<vmem>>, vector<1x1x32x32xbf16>
    %142 = vector.shape_cast %141 : vector<1x1x32x32xbf16> to vector<32x32xbf16>
    %cst_66 = arith.constant dense<0.000000e+00> : vector<16x32xf32>
    %143 = tpu.matmul %136, %142, %cst_66 {dimension_numbers = #tpu.dot_dimension_numbers<[1], [0], [0], [1], [0, 0, 1, 1], [], []>} : vector<16x32xbf16>, vector<32x32xbf16>, vector<16x32xf32> -> vector<16x32xf32>
    %c0_67 = arith.constant 0 : index
    %c1_68 = arith.constant 1 : index
    %c0_69 = arith.constant 0 : index
    %c0_70 = arith.constant 0 : index
    %144 = vector.load %arg8[%c0_67, %c1_68, %c0_69, %c0_70] : memref<1x2x3x32xf32, #tpu.memory_space<vmem>>, vector<1x1x1x32xf32>
    %145 = vector.shape_cast %144 : vector<1x1x1x32xf32> to vector<1x32xf32>
    %146 = vector.broadcast %145 : vector<1x32xf32> to vector<16x32xf32>
    %147 = arith.addf %143, %146 : vector<16x32xf32>
    %c0_71 = arith.constant 0 : index
    %c1_72 = arith.constant 1 : index
    %c0_73 = arith.constant 0 : index
    %c32 = arith.constant 32 : index
    %148 = vector.load %arg6[%c0_71, %c1_72, %c0_73, %c32] : memref<1x2x32x96xbf16, #tpu.memory_space<vmem>>, vector<1x1x32x32xbf16>
    %149 = vector.shape_cast %148 : vector<1x1x32x32xbf16> to vector<32x32xbf16>
    %cst_74 = arith.constant dense<0.000000e+00> : vector<32x32xf32>
    %150 = tpu.matmul %137, %149, %cst_74 {dimension_numbers = #tpu.dot_dimension_numbers<[1], [0], [0], [1], [0, 0, 1, 1], [], []>} : vector<32x32xbf16>, vector<32x32xbf16>, vector<32x32xf32> -> vector<32x32xf32>
    %c0_75 = arith.constant 0 : index
    %c1_76 = arith.constant 1 : index
    %c1_77 = arith.constant 1 : index
    %c0_78 = arith.constant 0 : index
    %151 = vector.load %arg8[%c0_75, %c1_76, %c1_77, %c0_78] : memref<1x2x3x32xf32, #tpu.memory_space<vmem>>, vector<1x1x1x32xf32>
    %152 = vector.shape_cast %151 : vector<1x1x1x32xf32> to vector<1x32xf32>
    %153 = vector.broadcast %152 : vector<1x32xf32> to vector<32x32xf32>
    %154 = arith.addf %150, %153 : vector<32x32xf32>
    %c0_79 = arith.constant 0 : index
    %c1_80 = arith.constant 1 : index
    %c0_81 = arith.constant 0 : index
    %c64_82 = arith.constant 64 : index
    %155 = vector.load %arg6[%c0_79, %c1_80, %c0_81, %c64_82] : memref<1x2x32x96xbf16, #tpu.memory_space<vmem>>, vector<1x1x32x32xbf16>
    %156 = vector.shape_cast %155 : vector<1x1x32x32xbf16> to vector<32x32xbf16>
    %cst_83 = arith.constant dense<0.000000e+00> : vector<32x32xf32>
    %157 = tpu.matmul %138, %156, %cst_83 {dimension_numbers = #tpu.dot_dimension_numbers<[1], [0], [0], [1], [0, 0, 1, 1], [], []>} : vector<32x32xbf16>, vector<32x32xbf16>, vector<32x32xf32> -> vector<32x32xf32>
    %c0_84 = arith.constant 0 : index
    %c1_85 = arith.constant 1 : index
    %c2_86 = arith.constant 2 : index
    %c0_87 = arith.constant 0 : index
    %158 = vector.load %arg8[%c0_84, %c1_85, %c2_86, %c0_87] : memref<1x2x3x32xf32, #tpu.memory_space<vmem>>, vector<1x1x1x32xf32>
    %159 = vector.shape_cast %158 : vector<1x1x1x32xf32> to vector<1x32xf32>
    %160 = vector.broadcast %159 : vector<1x32xf32> to vector<32x32xf32>
    %161 = arith.addf %157, %160 : vector<32x32xf32>
    %162 = arith.truncf %147 : vector<16x32xf32> to vector<16x32xbf16>
    %163 = vector.shape_cast %162 : vector<16x32xbf16> to vector<2x8x32xbf16>
    %164 = arith.truncf %154 : vector<32x32xf32> to vector<32x32xbf16>
    %165 = vector.shape_cast %164 : vector<32x32xbf16> to vector<2x16x32xbf16>
    %166 = arith.truncf %161 : vector<32x32xf32> to vector<32x32xbf16>
    %167 = vector.shape_cast %166 : vector<32x32xbf16> to vector<2x16x32xbf16>
    %168 = vector.extract_strided_slice %163 {offsets = [0, 0, 0], sizes = [2, 8, 8], strides = [1, 1, 1]} : vector<2x8x32xbf16> to vector<2x8x8xbf16>
    %169 = vector.extract_strided_slice %165 {offsets = [0, 0, 0], sizes = [2, 16, 8], strides = [1, 1, 1]} : vector<2x16x32xbf16> to vector<2x16x8xbf16>
    "tpu.trace_start"() <{level = 10 : i32, message = "bld,bsd->bls"}> : () -> ()
    %cst_88 = arith.constant dense<0.000000e+00> : vector<2x8x16xf32>
    %170 = tpu.matmul %168, %169, %cst_88 {dimension_numbers = #tpu.dot_dimension_numbers<[2], [2], [1], [1], [0, 0, 0, 1, 1, 1], [0], [0]>} : vector<2x8x8xbf16>, vector<2x16x8xbf16>, vector<2x8x16xf32> -> vector<2x8x16xf32>
    "tpu.trace_stop"() : () -> ()
    %cst_89 = arith.constant dense<0xFF800000> : vector<2x8xf32>
    %171 = vector.multi_reduction <maximumf>, %170, %cst_89 [2] : vector<2x8x16xf32> to vector<2x8xf32>
    %172 = vector.shape_cast %171 : vector<2x8xf32> to vector<2x8x1xf32>
    %173 = vector.broadcast %172 : vector<2x8x1xf32> to vector<2x8x16xf32>
    %174 = arith.subf %170, %173 : vector<2x8x16xf32>
    %175 = math.exp %174 : vector<2x8x16xf32>
    %cst_90 = arith.constant dense<0.000000e+00> : vector<2x8xf32>
    %176 = vector.multi_reduction <add>, %175, %cst_90 [2] : vector<2x8x16xf32> to vector<2x8xf32>
    %177 = vector.shape_cast %176 : vector<2x8xf32> to vector<2x8x1xf32>
    %178 = tpu.reciprocal %177 {approx = true} : vector<2x8x1xf32> -> vector<2x8x1xf32>
    %179 = vector.broadcast %178 : vector<2x8x1xf32> to vector<2x8x16xf32>
    %180 = arith.mulf %175, %179 : vector<2x8x16xf32>
    %181 = arith.truncf %180 : vector<2x8x16xf32> to vector<2x8x16xbf16>
    %182 = vector.extract_strided_slice %167 {offsets = [0, 0, 0], sizes = [2, 16, 8], strides = [1, 1, 1]} : vector<2x16x32xbf16> to vector<2x16x8xbf16>
    "tpu.trace_start"() <{level = 10 : i32, message = "bls,bsd->bld"}> : () -> ()
    %cst_91 = arith.constant dense<0.000000e+00> : vector<2x8x8xf32>
    %183 = tpu.matmul %181, %182, %cst_91 {dimension_numbers = #tpu.dot_dimension_numbers<[2], [1], [1], [2], [0, 0, 0, 1, 1, 2], [0], [0]>} : vector<2x8x16xbf16>, vector<2x16x8xbf16>, vector<2x8x8xf32> -> vector<2x8x8xf32>
    "tpu.trace_stop"() : () -> ()
    %184 = vector.extract_strided_slice %163 {offsets = [0, 0, 8], sizes = [2, 8, 8], strides = [1, 1, 1]} : vector<2x8x32xbf16> to vector<2x8x8xbf16>
    %185 = vector.extract_strided_slice %165 {offsets = [0, 0, 8], sizes = [2, 16, 8], strides = [1, 1, 1]} : vector<2x16x32xbf16> to vector<2x16x8xbf16>
    "tpu.trace_start"() <{level = 10 : i32, message = "bld,bsd->bls"}> : () -> ()
    %cst_92 = arith.constant dense<0.000000e+00> : vector<2x8x16xf32>
    %186 = tpu.matmul %184, %185, %cst_92 {dimension_numbers = #tpu.dot_dimension_numbers<[2], [2], [1], [1], [0, 0, 0, 1, 1, 1], [0], [0]>} : vector<2x8x8xbf16>, vector<2x16x8xbf16>, vector<2x8x16xf32> -> vector<2x8x16xf32>
    "tpu.trace_stop"() : () -> ()
    %cst_93 = arith.constant dense<0xFF800000> : vector<2x8xf32>
    %187 = vector.multi_reduction <maximumf>, %186, %cst_93 [2] : vector<2x8x16xf32> to vector<2x8xf32>
    %188 = vector.shape_cast %187 : vector<2x8xf32> to vector<2x8x1xf32>
    %189 = vector.broadcast %188 : vector<2x8x1xf32> to vector<2x8x16xf32>
    %190 = arith.subf %186, %189 : vector<2x8x16xf32>
    %191 = math.exp %190 : vector<2x8x16xf32>
    %cst_94 = arith.constant dense<0.000000e+00> : vector<2x8xf32>
    %192 = vector.multi_reduction <add>, %191, %cst_94 [2] : vector<2x8x16xf32> to vector<2x8xf32>
    %193 = vector.shape_cast %192 : vector<2x8xf32> to vector<2x8x1xf32>
    %194 = tpu.reciprocal %193 {approx = true} : vector<2x8x1xf32> -> vector<2x8x1xf32>
    %195 = vector.broadcast %194 : vector<2x8x1xf32> to vector<2x8x16xf32>
    %196 = arith.mulf %191, %195 : vector<2x8x16xf32>
    %197 = arith.truncf %196 : vector<2x8x16xf32> to vector<2x8x16xbf16>
    %198 = vector.extract_strided_slice %167 {offsets = [0, 0, 8], sizes = [2, 16, 8], strides = [1, 1, 1]} : vector<2x16x32xbf16> to vector<2x16x8xbf16>
    "tpu.trace_start"() <{level = 10 : i32, message = "bls,bsd->bld"}> : () -> ()
    %cst_95 = arith.constant dense<0.000000e+00> : vector<2x8x8xf32>
    %199 = tpu.matmul %197, %198, %cst_95 {dimension_numbers = #tpu.dot_dimension_numbers<[2], [1], [1], [2], [0, 0, 0, 1, 1, 2], [0], [0]>} : vector<2x8x16xbf16>, vector<2x16x8xbf16>, vector<2x8x8xf32> -> vector<2x8x8xf32>
    "tpu.trace_stop"() : () -> ()
    %200 = vector.extract_strided_slice %163 {offsets = [0, 0, 16], sizes = [2, 8, 8], strides = [1, 1, 1]} : vector<2x8x32xbf16> to vector<2x8x8xbf16>
    %201 = vector.extract_strided_slice %165 {offsets = [0, 0, 16], sizes = [2, 16, 8], strides = [1, 1, 1]} : vector<2x16x32xbf16> to vector<2x16x8xbf16>
    "tpu.trace_start"() <{level = 10 : i32, message = "bld,bsd->bls"}> : () -> ()
    %cst_96 = arith.constant dense<0.000000e+00> : vector<2x8x16xf32>
    %202 = tpu.matmul %200, %201, %cst_96 {dimension_numbers = #tpu.dot_dimension_numbers<[2], [2], [1], [1], [0, 0, 0, 1, 1, 1], [0], [0]>} : vector<2x8x8xbf16>, vector<2x16x8xbf16>, vector<2x8x16xf32> -> vector<2x8x16xf32>
    "tpu.trace_stop"() : () -> ()
    %cst_97 = arith.constant dense<0xFF800000> : vector<2x8xf32>
    %203 = vector.multi_reduction <maximumf>, %202, %cst_97 [2] : vector<2x8x16xf32> to vector<2x8xf32>
    %204 = vector.shape_cast %203 : vector<2x8xf32> to vector<2x8x1xf32>
    %205 = vector.broadcast %204 : vector<2x8x1xf32> to vector<2x8x16xf32>
    %206 = arith.subf %202, %205 : vector<2x8x16xf32>
    %207 = math.exp %206 : vector<2x8x16xf32>
    %cst_98 = arith.constant dense<0.000000e+00> : vector<2x8xf32>
    %208 = vector.multi_reduction <add>, %207, %cst_98 [2] : vector<2x8x16xf32> to vector<2x8xf32>
    %209 = vector.shape_cast %208 : vector<2x8xf32> to vector<2x8x1xf32>
    %210 = tpu.reciprocal %209 {approx = true} : vector<2x8x1xf32> -> vector<2x8x1xf32>
    %211 = vector.broadcast %210 : vector<2x8x1xf32> to vector<2x8x16xf32>
    %212 = arith.mulf %207, %211 : vector<2x8x16xf32>
    %213 = arith.truncf %212 : vector<2x8x16xf32> to vector<2x8x16xbf16>
    %214 = vector.extract_strided_slice %167 {offsets = [0, 0, 16], sizes = [2, 16, 8], strides = [1, 1, 1]} : vector<2x16x32xbf16> to vector<2x16x8xbf16>
    "tpu.trace_start"() <{level = 10 : i32, message = "bls,bsd->bld"}> : () -> ()
    %cst_99 = arith.constant dense<0.000000e+00> : vector<2x8x8xf32>
    %215 = tpu.matmul %213, %214, %cst_99 {dimension_numbers = #tpu.dot_dimension_numbers<[2], [1], [1], [2], [0, 0, 0, 1, 1, 2], [0], [0]>} : vector<2x8x16xbf16>, vector<2x16x8xbf16>, vector<2x8x8xf32> -> vector<2x8x8xf32>
    "tpu.trace_stop"() : () -> ()
    %216 = vector.extract_strided_slice %163 {offsets = [0, 0, 24], sizes = [2, 8, 8], strides = [1, 1, 1]} : vector<2x8x32xbf16> to vector<2x8x8xbf16>
    %217 = vector.extract_strided_slice %165 {offsets = [0, 0, 24], sizes = [2, 16, 8], strides = [1, 1, 1]} : vector<2x16x32xbf16> to vector<2x16x8xbf16>
    "tpu.trace_start"() <{level = 10 : i32, message = "bld,bsd->bls"}> : () -> ()
    %cst_100 = arith.constant dense<0.000000e+00> : vector<2x8x16xf32>
    %218 = tpu.matmul %216, %217, %cst_100 {dimension_numbers = #tpu.dot_dimension_numbers<[2], [2], [1], [1], [0, 0, 0, 1, 1, 1], [0], [0]>} : vector<2x8x8xbf16>, vector<2x16x8xbf16>, vector<2x8x16xf32> -> vector<2x8x16xf32>
    "tpu.trace_stop"() : () -> ()
    %cst_101 = arith.constant dense<0xFF800000> : vector<2x8xf32>
    %219 = vector.multi_reduction <maximumf>, %218, %cst_101 [2] : vector<2x8x16xf32> to vector<2x8xf32>
    %220 = vector.shape_cast %219 : vector<2x8xf32> to vector<2x8x1xf32>
    %221 = vector.broadcast %220 : vector<2x8x1xf32> to vector<2x8x16xf32>
    %222 = arith.subf %218, %221 : vector<2x8x16xf32>
    %223 = math.exp %222 : vector<2x8x16xf32>
    %cst_102 = arith.constant dense<0.000000e+00> : vector<2x8xf32>
    %224 = vector.multi_reduction <add>, %223, %cst_102 [2] : vector<2x8x16xf32> to vector<2x8xf32>
    %225 = vector.shape_cast %224 : vector<2x8xf32> to vector<2x8x1xf32>
    %226 = tpu.reciprocal %225 {approx = true} : vector<2x8x1xf32> -> vector<2x8x1xf32>
    %227 = vector.broadcast %226 : vector<2x8x1xf32> to vector<2x8x16xf32>
    %228 = arith.mulf %223, %227 : vector<2x8x16xf32>
    %229 = arith.truncf %228 : vector<2x8x16xf32> to vector<2x8x16xbf16>
    %230 = vector.extract_strided_slice %167 {offsets = [0, 0, 24], sizes = [2, 16, 8], strides = [1, 1, 1]} : vector<2x16x32xbf16> to vector<2x16x8xbf16>
    "tpu.trace_start"() <{level = 10 : i32, message = "bls,bsd->bld"}> : () -> ()
    %cst_103 = arith.constant dense<0.000000e+00> : vector<2x8x8xf32>
    %231 = tpu.matmul %229, %230, %cst_103 {dimension_numbers = #tpu.dot_dimension_numbers<[2], [1], [1], [2], [0, 0, 0, 1, 1, 2], [0], [0]>} : vector<2x8x16xbf16>, vector<2x16x8xbf16>, vector<2x8x8xf32> -> vector<2x8x8xf32>
    "tpu.trace_stop"() : () -> ()
    %232 = tpu.concatenate %183, %199, %215, %231 in 2 : vector<2x8x8xf32>, vector<2x8x8xf32>, vector<2x8x8xf32>, vector<2x8x8xf32> -> vector<2x8x32xf32>
    %233 = vector.shape_cast %232 : vector<2x8x32xf32> to vector<16x32xf32>
    %234 = arith.truncf %233 : vector<16x32xf32> to vector<16x32xbf16>
    %c0_104 = arith.constant 0 : index
    %c1_105 = arith.constant 1 : index
    %c0_106 = arith.constant 0 : index
    %c0_107 = arith.constant 0 : index
    %235 = vector.load %arg7[%c0_104, %c1_105, %c0_106, %c0_107] : memref<1x2x32x32xbf16, #tpu.memory_space<vmem>>, vector<1x1x32x32xbf16>
    %236 = vector.shape_cast %235 : vector<1x1x32x32xbf16> to vector<32x32xbf16>
    %cst_108 = arith.constant dense<0.000000e+00> : vector<16x32xf32>
    %237 = tpu.matmul %234, %236, %cst_108 {dimension_numbers = #tpu.dot_dimension_numbers<[1], [0], [0], [1], [0, 0, 1, 1], [], []>} : vector<16x32xbf16>, vector<32x32xbf16>, vector<16x32xf32> -> vector<16x32xf32>
    %238 = vector.broadcast %140 : vector<1x32xf32> to vector<16x32xf32>
    %239 = arith.addf %237, %238 : vector<16x32xf32>
    %240 = arith.addf %134, %239 : vector<16x32xf32>
    %c0_109 = arith.constant 0 : index
    %c5 = arith.constant 5 : index
    %c0_110 = arith.constant 0 : index
    %241 = vector.load %arg12[%c0_109, %c5, %c0_110] : memref<1x9x32xf32, #tpu.memory_space<vmem>>, vector<1x1x32xf32>
    %242 = vector.shape_cast %241 : vector<1x1x32xf32> to vector<1x32xf32>
    %c0_111 = arith.constant 0 : index
    %c6 = arith.constant 6 : index
    %c0_112 = arith.constant 0 : index
    %243 = vector.load %arg12[%c0_111, %c6, %c0_112] : memref<1x9x32xf32, #tpu.memory_space<vmem>>, vector<1x1x32xf32>
    %244 = vector.shape_cast %243 : vector<1x1x32xf32> to vector<1x32xf32>
    %cst_113 = arith.constant dense<0.000000e+00> : vector<16xf32>
    %245 = vector.multi_reduction <add>, %240, %cst_113 [1] : vector<16x32xf32> to vector<16xf32>
    %246 = vector.shape_cast %245 : vector<16xf32> to vector<16x1xf32>
    %cst_114 = arith.constant 3.200000e+01 : f32
    %247 = vector.broadcast %cst_114 : f32 to vector<16x1xf32>
    %248 = arith.divf %246, %247 : vector<16x1xf32>
    %249 = vector.broadcast %248 : vector<16x1xf32> to vector<16x32xf32>
    %250 = arith.subf %240, %249 : vector<16x32xf32>
    %251 = arith.mulf %250, %250 : vector<16x32xf32>
    %cst_115 = arith.constant dense<0.000000e+00> : vector<16xf32>
    %252 = vector.multi_reduction <add>, %251, %cst_115 [1] : vector<16x32xf32> to vector<16xf32>
    %253 = vector.shape_cast %252 : vector<16xf32> to vector<16x1xf32>
    %cst_116 = arith.constant 3.200000e+01 : f32
    %254 = vector.broadcast %cst_116 : f32 to vector<16x1xf32>
    %255 = arith.divf %253, %254 : vector<16x1xf32>
    %256 = vector.broadcast %248 : vector<16x1xf32> to vector<16x32xf32>
    %257 = arith.subf %240, %256 : vector<16x32xf32>
    %cst_117 = arith.constant 9.99999974E-6 : f32
    %258 = vector.broadcast %cst_117 : f32 to vector<16x1xf32>
    %259 = arith.addf %255, %258 : vector<16x1xf32>
    %260 = math.rsqrt %259 : vector<16x1xf32>
    %261 = vector.broadcast %260 : vector<16x1xf32> to vector<16x32xf32>
    %262 = arith.mulf %257, %261 : vector<16x32xf32>
    %263 = vector.broadcast %242 : vector<1x32xf32> to vector<16x32xf32>
    %264 = arith.mulf %262, %263 : vector<16x32xf32>
    %265 = vector.broadcast %244 : vector<1x32xf32> to vector<16x32xf32>
    %266 = arith.addf %264, %265 : vector<16x32xf32>
    %267 = arith.truncf %266 : vector<16x32xf32> to vector<16x32xbf16>
    %c0_118 = arith.constant 0 : index
    %c0_119 = arith.constant 0 : index
    %c0_120 = arith.constant 0 : index
    %268 = vector.load %arg9[%c0_118, %c0_119, %c0_120] : memref<1x32x64xbf16, #tpu.memory_space<vmem>>, vector<1x32x64xbf16>
    %269 = vector.shape_cast %268 : vector<1x32x64xbf16> to vector<32x64xbf16>
    %cst_121 = arith.constant dense<0.000000e+00> : vector<16x64xf32>
    %270 = tpu.matmul %267, %269, %cst_121 {dimension_numbers = #tpu.dot_dimension_numbers<[1], [0], [0], [1], [0, 0, 1, 1], [], []>} : vector<16x32xbf16>, vector<32x64xbf16>, vector<16x64xf32> -> vector<16x64xf32>
    %c0_122 = arith.constant 0 : index
    %c0_123 = arith.constant 0 : index
    %c0_124 = arith.constant 0 : index
    %271 = vector.load %arg11[%c0_122, %c0_123, %c0_124] : memref<1x1x64xf32, #tpu.memory_space<vmem>>, vector<1x1x64xf32>
    %272 = vector.shape_cast %271 : vector<1x1x64xf32> to vector<1x64xf32>
    %273 = vector.broadcast %272 : vector<1x64xf32> to vector<16x64xf32>
    %274 = arith.addf %270, %273 : vector<16x64xf32>
    %cst_125 = arith.constant 0.000000e+00 : f32
    %275 = vector.broadcast %cst_125 : f32 to vector<16x64xf32>
    %276 = arith.maximumf %274, %275 : vector<16x64xf32>
    %277 = arith.truncf %276 : vector<16x64xf32> to vector<16x64xbf16>
    %c0_126 = arith.constant 0 : index
    %c0_127 = arith.constant 0 : index
    %c0_128 = arith.constant 0 : index
    %278 = vector.load %arg10[%c0_126, %c0_127, %c0_128] : memref<1x64x32xbf16, #tpu.memory_space<vmem>>, vector<1x64x32xbf16>
    %279 = vector.shape_cast %278 : vector<1x64x32xbf16> to vector<64x32xbf16>
    %cst_129 = arith.constant dense<0.000000e+00> : vector<16x32xf32>
    %280 = tpu.matmul %277, %279, %cst_129 {dimension_numbers = #tpu.dot_dimension_numbers<[1], [0], [0], [1], [0, 0, 1, 1], [], []>} : vector<16x64xbf16>, vector<64x32xbf16>, vector<16x32xf32> -> vector<16x32xf32>
    %c0_130 = arith.constant 0 : index
    %c2_131 = arith.constant 2 : index
    %c0_132 = arith.constant 0 : index
    %281 = vector.load %arg12[%c0_130, %c2_131, %c0_132] : memref<1x9x32xf32, #tpu.memory_space<vmem>>, vector<1x1x32xf32>
    %282 = vector.shape_cast %281 : vector<1x1x32xf32> to vector<1x32xf32>
    %283 = vector.broadcast %282 : vector<1x32xf32> to vector<16x32xf32>
    %284 = arith.addf %280, %283 : vector<16x32xf32>
    %285 = arith.addf %266, %284 : vector<16x32xf32>
    %c0_133 = arith.constant 0 : index
    %c7 = arith.constant 7 : index
    %c0_134 = arith.constant 0 : index
    %286 = vector.load %arg12[%c0_133, %c7, %c0_134] : memref<1x9x32xf32, #tpu.memory_space<vmem>>, vector<1x1x32xf32>
    %287 = vector.shape_cast %286 : vector<1x1x32xf32> to vector<1x32xf32>
    %c0_135 = arith.constant 0 : index
    %c8 = arith.constant 8 : index
    %c0_136 = arith.constant 0 : index
    %288 = vector.load %arg12[%c0_135, %c8, %c0_136] : memref<1x9x32xf32, #tpu.memory_space<vmem>>, vector<1x1x32xf32>
    %289 = vector.shape_cast %288 : vector<1x1x32xf32> to vector<1x32xf32>
    %cst_137 = arith.constant dense<0.000000e+00> : vector<16xf32>
    %290 = vector.multi_reduction <add>, %285, %cst_137 [1] : vector<16x32xf32> to vector<16xf32>
    %291 = vector.shape_cast %290 : vector<16xf32> to vector<16x1xf32>
    %cst_138 = arith.constant 3.200000e+01 : f32
    %292 = vector.broadcast %cst_138 : f32 to vector<16x1xf32>
    %293 = arith.divf %291, %292 : vector<16x1xf32>
    %294 = vector.broadcast %293 : vector<16x1xf32> to vector<16x32xf32>
    %295 = arith.subf %285, %294 : vector<16x32xf32>
    %296 = arith.mulf %295, %295 : vector<16x32xf32>
    %cst_139 = arith.constant dense<0.000000e+00> : vector<16xf32>
    %297 = vector.multi_reduction <add>, %296, %cst_139 [1] : vector<16x32xf32> to vector<16xf32>
    %298 = vector.shape_cast %297 : vector<16xf32> to vector<16x1xf32>
    %cst_140 = arith.constant 3.200000e+01 : f32
    %299 = vector.broadcast %cst_140 : f32 to vector<16x1xf32>
    %300 = arith.divf %298, %299 : vector<16x1xf32>
    %301 = vector.broadcast %293 : vector<16x1xf32> to vector<16x32xf32>
    %302 = arith.subf %285, %301 : vector<16x32xf32>
    %cst_141 = arith.constant 9.99999974E-6 : f32
    %303 = vector.broadcast %cst_141 : f32 to vector<16x1xf32>
    %304 = arith.addf %300, %303 : vector<16x1xf32>
    %305 = math.rsqrt %304 : vector<16x1xf32>
    %306 = vector.broadcast %305 : vector<16x1xf32> to vector<16x32xf32>
    %307 = arith.mulf %302, %306 : vector<16x32xf32>
    %308 = vector.broadcast %287 : vector<1x32xf32> to vector<16x32xf32>
    %309 = arith.mulf %307, %308 : vector<16x32xf32>
    %310 = vector.broadcast %289 : vector<1x32xf32> to vector<16x32xf32>
    %311 = arith.addf %309, %310 : vector<16x32xf32>
    %c0_142 = arith.constant 0 : index
    %c0_143 = arith.constant 0 : index
    %312 = vector.load %arg15[%c0_142, %c0_143] : memref<16x32xf32, #tpu.memory_space<vmem>>, vector<16x32xf32>
    tpu.vector_store %arg15[%c0_142, %c0_143], %311 {strides = array<i32>} : memref<16x32xf32, #tpu.memory_space<vmem>>, vector<16x32xf32>,
    %c1_i32 = arith.constant 1 : i32
    %313 = arith.cmpi eq, %arg1, %c1_i32 : i32
    %314 = arith.extui %313 : i1 to i32
    %c0_i32_144 = arith.constant 0 : i32
    %315 = arith.cmpi ne, %314, %c0_i32_144 : i32
    scf.if %315 {
      %c0_145 = arith.constant 0 : index
      %c0_146 = arith.constant 0 : index
      %316 = vector.load %arg13[%c0_145, %c0_146] : memref<2x32xf32, #tpu.memory_space<vmem>>, vector<1x32xf32>
      %c1_147 = arith.constant 1 : index
      %c0_148 = arith.constant 0 : index
      %317 = vector.load %arg13[%c1_147, %c0_148] : memref<2x32xf32, #tpu.memory_space<vmem>>, vector<1x32xf32>
      %cst_149 = arith.constant dense<0.000000e+00> : vector<16xf32>
      %318 = vector.multi_reduction <add>, %311, %cst_149 [1] : vector<16x32xf32> to vector<16xf32>
      %319 = vector.shape_cast %318 : vector<16xf32> to vector<16x1xf32>
      %cst_150 = arith.constant 3.200000e+01 : f32
      %320 = vector.broadcast %cst_150 : f32 to vector<16x1xf32>
      %321 = arith.divf %319, %320 : vector<16x1xf32>
      %322 = vector.broadcast %321 : vector<16x1xf32> to vector<16x32xf32>
      %323 = arith.subf %311, %322 : vector<16x32xf32>
      %324 = arith.mulf %323, %323 : vector<16x32xf32>
      %cst_151 = arith.constant dense<0.000000e+00> : vector<16xf32>
      %325 = vector.multi_reduction <add>, %324, %cst_151 [1] : vector<16x32xf32> to vector<16xf32>
      %326 = vector.shape_cast %325 : vector<16xf32> to vector<16x1xf32>
      %cst_152 = arith.constant 3.200000e+01 : f32
      %327 = vector.broadcast %cst_152 : f32 to vector<16x1xf32>
      %328 = arith.divf %326, %327 : vector<16x1xf32>
      %329 = vector.broadcast %321 : vector<16x1xf32> to vector<16x32xf32>
      %330 = arith.subf %311, %329 : vector<16x32xf32>
      %cst_153 = arith.constant 9.99999974E-6 : f32
      %331 = vector.broadcast %cst_153 : f32 to vector<16x1xf32>
      %332 = arith.addf %328, %331 : vector<16x1xf32>
      %333 = math.rsqrt %332 : vector<16x1xf32>
      %334 = vector.broadcast %333 : vector<16x1xf32> to vector<16x32xf32>
      %335 = arith.mulf %330, %334 : vector<16x32xf32>
      %336 = vector.broadcast %316 : vector<1x32xf32> to vector<16x32xf32>
      %337 = arith.mulf %335, %336 : vector<16x32xf32>
      %338 = vector.broadcast %317 : vector<1x32xf32> to vector<16x32xf32>
      %339 = arith.addf %337, %338 : vector<16x32xf32>
      %340 = vector.extract_strided_slice %339 {offsets = [0, 0], sizes = [8, 32], strides = [1, 1]} : vector<16x32xf32> to vector<8x32xf32>
      %c0_154 = arith.constant 0 : index
      %c0_155 = arith.constant 0 : index
      %c0_156 = arith.constant 0 : index
      %341 = vector.load %arg14[%c0_154, %c0_155, %c0_156] : memref<8x2x32xf32, #tpu.memory_space<vmem>>, vector<8x1x32xf32>
      %342 = vector.shape_cast %341 : vector<8x1x32xf32> to vector<8x32xf32>
      %343 = vector.shape_cast %340 : vector<8x32xf32> to vector<8x1x32xf32>
      tpu.vector_store %arg14[%c0_154, %c0_155, %c0_156], %343 {strides = array<i32>} : memref<8x2x32xf32, #tpu.memory_space<vmem>>, vector<8x1x32xf32>,
      %344 = vector.extract_strided_slice %339 {offsets = [8, 0], sizes = [8, 32], strides = [1, 1]} : vector<16x32xf32> to vector<8x32xf32>
      %c0_157 = arith.constant 0 : index
      %c1_158 = arith.constant 1 : index
      %c0_159 = arith.constant 0 : index
      %345 = vector.load %arg14[%c0_157, %c1_158, %c0_159] : memref<8x2x32xf32, #tpu.memory_space<vmem>>, vector<8x1x32xf32>
      %346 = vector.shape_cast %345 : vector<8x1x32xf32> to vector<8x32xf32>
      %347 = vector.shape_cast %344 : vector<8x32xf32> to vector<8x1x32xf32>
      tpu.vector_store %arg14[%c0_157, %c1_158, %c0_159], %347 {strides = array<i32>} : memref<8x2x32xf32, #tpu.memory_space<vmem>>, vector<8x1x32xf32>,
    } else {
    }
    return
  }
  func.func @transform_0(%arg0: i32, %arg1: i32) -> (i32, i32, i32) {
    %c0_i32 = arith.constant 0 : i32
    %c0_i32_0 = arith.constant 0 : i32
    %c0_i32_1 = arith.constant 0 : i32
    return %c0_i32, %arg0, %c0_i32_0 : i32, i32, i32
  }
  func.func @transform_1(%arg0: i32, %arg1: i32) -> (i32, i32, i32) {
    %c0_i32 = arith.constant 0 : i32
    %c0_i32_0 = arith.constant 0 : i32
    %c0_i32_1 = arith.constant 0 : i32
    return %c0_i32, %arg0, %c0_i32_0 : i32, i32, i32
  }
  func.func @transform_2(%arg0: i32, %arg1: i32) -> (i32, i32, i32) {
    %c0_i32 = arith.constant 0 : i32
    %c0_i32_0 = arith.constant 0 : i32
    %c0_i32_1 = arith.constant 0 : i32
    return %c0_i32, %arg0, %c0_i32_0 : i32, i32, i32
  }
  func.func @transform_3(%arg0: i32, %arg1: i32) -> (i32, i32, i32) {
    %c0_i32 = arith.constant 0 : i32
    %c0_i32_0 = arith.constant 0 : i32
    %c0_i32_1 = arith.constant 0 : i32
    return %c0_i32, %arg0, %c0_i32_0 : i32, i32, i32
  }
  func.func @transform_4(%arg0: i32, %arg1: i32) -> (i32, i32, i32, i32) {
    %c0_i32 = arith.constant 0 : i32
    %c0_i32_0 = arith.constant 0 : i32
    %c0_i32_1 = arith.constant 0 : i32
    %c0_i32_2 = arith.constant 0 : i32
    return %arg1, %c0_i32, %c0_i32_0, %c0_i32_1 : i32, i32, i32, i32
  }
  func.func @transform_5(%arg0: i32, %arg1: i32) -> (i32, i32, i32, i32) {
    %c0_i32 = arith.constant 0 : i32
    %c0_i32_0 = arith.constant 0 : i32
    %c0_i32_1 = arith.constant 0 : i32
    %c0_i32_2 = arith.constant 0 : i32
    return %arg1, %c0_i32, %c0_i32_0, %c0_i32_1 : i32, i32, i32, i32
  }
  func.func @transform_6(%arg0: i32, %arg1: i32) -> (i32, i32, i32, i32) {
    %c0_i32 = arith.constant 0 : i32
    %c0_i32_0 = arith.constant 0 : i32
    %c0_i32_1 = arith.constant 0 : i32
    %c0_i32_2 = arith.constant 0 : i32
    return %arg1, %c0_i32, %c0_i32_0, %c0_i32_1 : i32, i32, i32, i32
  }
  func.func @transform_7(%arg0: i32, %arg1: i32) -> (i32, i32, i32) {
    %c0_i32 = arith.constant 0 : i32
    %c0_i32_0 = arith.constant 0 : i32
    %c0_i32_1 = arith.constant 0 : i32
    return %arg1, %c0_i32, %c0_i32_0 : i32, i32, i32
  }
  func.func @transform_8(%arg0: i32, %arg1: i32) -> (i32, i32, i32) {
    %c0_i32 = arith.constant 0 : i32
    %c0_i32_0 = arith.constant 0 : i32
    %c0_i32_1 = arith.constant 0 : i32
    return %arg1, %c0_i32, %c0_i32_0 : i32, i32, i32
  }
  func.func @transform_9(%arg0: i32, %arg1: i32) -> (i32, i32, i32) {
    %c0_i32 = arith.constant 0 : i32
    %c0_i32_0 = arith.constant 0 : i32
    %c0_i32_1 = arith.constant 0 : i32
    return %arg1, %c0_i32, %c0_i32_0 : i32, i32, i32
  }
  func.func @transform_10(%arg0: i32, %arg1: i32) -> (i32, i32, i32) {
    %c0_i32 = arith.constant 0 : i32
    %c0_i32_0 = arith.constant 0 : i32
    %c0_i32_1 = arith.constant 0 : i32
    return %arg1, %c0_i32, %c0_i32_0 : i32, i32, i32
  }
  func.func @transform_11(%arg0: i32, %arg1: i32) -> (i32, i32) {
    %c0_i32 = arith.constant 0 : i32
    %c0_i32_0 = arith.constant 0 : i32
    %c0_i32_1 = arith.constant 0 : i32
    return %c0_i32, %c0_i32_0 : i32, i32
  }
  func.func @transform_12(%arg0: i32, %arg1: i32) -> (i32, i32, i32) {
    %c0_i32 = arith.constant 0 : i32
    %c0_i32_0 = arith.constant 0 : i32
    %c0_i32_1 = arith.constant 0 : i32
    return %c0_i32, %arg0, %c0_i32_0 : i32, i32, i32
  }
}

</mosaic_0001>

<llo_original>
// kernel: win_decoder_forward.1
$region0: #{win_decoder_forward.1}
  #allocation0 [shape = 'u32[]', space=smem, size = 0x4, offset = 0x4, fixed_abs, tag = 'smem constant byte address 0x4 - core index']
  #allocation1 [shape = 'u32[144,128]{1,0:T(1,128)}', space=vmem, size = 0x12000, scoped, tag = 'internal scratch']
  #allocation2 [shape = 'f32[16,32]{1,0:T(8,128)}', space=vmem, size = 0x2000, scoped, tag = 'scratch operand']
  #allocation3 [shape = 'bf16[32,32]{1,0:T(16,128)(2,1)}', space=vmem, size = 0x2000, scoped, tag = 'scratch operand']
  #allocation4 [shape = 'bf16[32,32]{1,0:T(16,128)(2,1)}', space=vmem, size = 0x2000, scoped, tag = 'scratch operand']
  #allocation5 [shape = 'f32[16,32]{1,0:T(8,128)}', space=vmem, size = 0x2000, scoped, tag = 'scratch operand']
  %s0 = inlined_call_operand.hbm [shape: f32[8,2,32], index: 0, kind: input, shape index: {}]
  %s1 = inlined_call_operand.hbm [shape: f32[16,2,32], index: 1, kind: input, shape index: {}]
  %s2 = inlined_call_operand.vmem [shape: f32[8,2,32], index: 2, kind: input, shape index: {}]
  %s3 = inlined_call_operand.vmem [shape: f32[16,2,32], index: 3, kind: input, shape index: {}]
  %s4 = inlined_call_operand.vmem [shape: bf16[2,2,32,96], index: 4, kind: input, shape index: {}]
  %s5 = inlined_call_operand.vmem [shape: bf16[2,2,32,32], index: 5, kind: input, shape index: {}]
  %s6 = inlined_call_operand.vmem [shape: f32[2,2,3,32], index: 6, kind: input, shape index: {}]
  %s7 = inlined_call_operand.hbm [shape: bf16[2,32,64], index: 7, kind: input, shape index: {}]
  %s8 = inlined_call_operand.vmem [shape: bf16[2,64,32], index: 8, kind: input, shape index: {}]
  %s9 = inlined_call_operand.hbm [shape: f32[2,1,64], index: 9, kind: input, shape index: {}]
  %s10 = inlined_call_operand.vmem [shape: f32[2,9,32], index: 10, kind: input, shape index: {}]
  %s11 = inlined_call_operand.hbm [shape: f32[2,32], index: 11, kind: input, shape index: {}]
  %s12 = inlined_call_operand.hbm [shape: f32[8,2,32], index: 12, kind: output, shape index: {}]
  %s13 = sld [smem:[#allocation0]]
  $region109: #{win_decoder_forward.1} parent=0
    _
  %s15 = ssub.s32 1, %s13
  %s16 = scalar_select 0, %s15, %s13
  $region1: #{win_decoder_forward.1} parent=0
    #allocation6 [shape = 'u8[8192]{0}', space=vmem, size = 0x2000, scoped, tag = 'input window, operand 0, single buffered']
    #allocation7 [shape = 's32[2]{0}', space=sflag, size = 0x8, scoped, tag = 'scoped memory for win_decoder_forward.1']
    #allocation8 [shape = 's32[2]{0}', space=sflag, size = 0x8, scoped, tag = 'scoped memory for win_decoder_forward.1']
    #allocation9 [shape = 'u8[16384]{0}', space=vmem, size = 0x4000, scoped, tag = 'input window, operand 1, single buffered']
    #allocation10 [shape = 's32[1]{0}', space=sflag, size = 0x4, scoped, tag = 'scoped memory for win_decoder_forward.1']
    #allocation11 [shape = 'u8[16384]{0}', space=vmem, size = 0x4000, scoped, tag = 'input window, operand 7']
    #allocation12 [shape = 'u8[1024]{0}', space=vmem, size = 0x400, scoped, tag = 'input window, operand 9']
    #allocation13 [shape = 'u8[1024]{0}', space=vmem, size = 0x400, scoped, tag = 'input window, operand 11, single buffered']
    #allocation14 [shape = 'u8[8192]{0}', space=vmem, size = 0x2000, scoped, tag = 'output window, operand 0, single buffered']
    %17 = vsyncpa [#allocation7], 0
    %18 = vsyncpa [#allocation10], 0
    %19 = vsyncpa [#allocation8], 0
    loop: start=0, step=1, limit=4
    $region2: #{win_decoder_forward.1} parent=1 // loop_pre_header
      _
    $region3: #{win_decoder_forward.1} parent=1 // loop_header
      %s21 = sphi 0, %s25
      %p22 = scmp.ge.s32.totalorder %s21, 4
      %s28 = sphi 0, %s40
      %s29 = sphi 0, %s36
      %s30 = sphi 0, %s28
      %s31 = sphi 0, %s29
      %s32 = sphi 0, %s30
      %s33 = sphi 0, %s31
      %s43 = sphi 0, %s45
      %s46 = sphi 0, %s43
      %s47 = sphi 0, %s46
      %s63 = sphi 0, %s47
      %s69 = sphi 0, %s71
      %s72 = sphi 0, %s69
      %s73 = sphi 0, %s72
      %s89 = sphi 0, %s73
      %s95 = sphi 0, %s97
      %s98 = sphi 0, %s95
      %s99 = sphi 0, %s98
      %s115 = sphi 0, %s99
      %s121 = sphi 0, %s123
      %s124 = sphi 0, %s121
      %s125 = sphi 0, %s124
      %s141 = sphi 0, %s125
      %s147 = sphi 0, %s149
      %s150 = sphi 0, %s147
      %s151 = sphi 0, %s150
      %s167 = sphi 0, %s151
      %s173 = sphi 0, %s175
      %s176 = sphi 0, %s173
      %s177 = sphi 0, %s176
      %s193 = sphi 0, %s177
      %s199 = sphi 0, %s201
      %s202 = sphi 0, %s199
      %s203 = sphi 0, %s202
      %s219 = sphi 0, %s203
      %s225 = sphi 0, %s227
      %s228 = sphi 0, %s225
      %s229 = sphi 0, %s228
      %s245 = sphi 0, %s229
      %s251 = sphi 0, %s253
      %s254 = sphi 0, %s251
      %s255 = sphi 0, %s254
      %s271 = sphi 0, %s255
      %s277 = sphi 0, %s279
      %s280 = sphi 0, %s277
      %s281 = sphi 0, %s280
      %s297 = sphi 0, %s281
      %s303 = sphi 0, %s305
      %s306 = sphi 0, %s303
      %s307 = sphi 0, %s306
      %s323 = sphi 0, %s307
      %s327 = sphi 0, %s327
      %s329 = sphi 0, %s327
      %s330 = sphi 0, %s329
      %s344 = sphi 0, %s330
      %s350 = sphi 0, %s352
      %s353 = sphi 0, %s350
      %s354 = sphi 0, %s353
      %s370 = sphi 0, %s354
    $region4: #{win_decoder_forward.1} parent=1 // loop_header_branch
      %24 = sbr.rel (%p22) target = $region8
    $region5: #{win_decoder_forward.1} parent=1 // loop_body
      %s26 = ssub.s32 %s21, 1
      %s27 = ssub.s32 %s21, 2
      %s34 = sadd.s32 1, %s29
      %p35 = scmp.ge.s32.totalorder %s34, 2
      %s36 = scalar_select %p35, 0, %s34
      %s37 = sadd.s32 1, %s28
      %s38 = scalar_select %p35, %s37, %s28
      %p39 = scmp.ge.s32.totalorder %s38, 1
      %s40 = scalar_select %p39, 0, %s38
      %s41 = ssub.s32 %s28, %s40
      %p42 = scmp.eq.s32.totalorder %s41, 0
      %s44 = sadd.s32 %s43, 1
      %s45 = scalar_select %p42, %s43, %s44
      %p48 = pneg %p42
      %p49 = scmp.eq.s32.totalorder %s21, 1
      %p50 = por %p48, %p49
      %p51 = scmp.ne.s32.totalorder %s43, %s46
      %p52 = scmp.eq.s32.totalorder %s21, 0
      %p53 = por %p51, %p52
      %p54 = scmp.ne.s32.totalorder %s43, %s46
      %p55 = scmp.eq.s32.totalorder %s26, 1
      %p56 = por %p54, %p55
      %p57 = scmp.ne.s32.totalorder %s46, %s47
      %p58 = scmp.eq.s32.totalorder %s26, 0
      %p59 = por %p57, %p58
      %p60 = scmp.ne.s32.totalorder %s46, %s47
      %p61 = scmp.eq.s32.totalorder %s27, 1
      %p62 = por %p60, %p61
      %p64 = scmp.ne.s32.totalorder %s47, %s63
      %p65 = scmp.eq.s32.totalorder %s27, 0
      %p66 = por %p64, %p65
      %s67 = ssub.s32 %s28, %s40
      %p68 = scmp.eq.s32.totalorder %s67, 0
      %s70 = sadd.s32 %s69, 1
      %s71 = scalar_select %p68, %s69, %s70
      %p74 = pneg %p68
      %p75 = scmp.eq.s32.totalorder %s21, 1
      %p76 = por %p74, %p75
      %p77 = scmp.ne.s32.totalorder %s69, %s72
      %p78 = scmp.eq.s32.totalorder %s21, 0
      %p79 = por %p77, %p78
      %p80 = scmp.ne.s32.totalorder %s69, %s72
      %p81 = scmp.eq.s32.totalorder %s26, 1
      %p82 = por %p80, %p81
      %p83 = scmp.ne.s32.totalorder %s72, %s73
      %p84 = scmp.eq.s32.totalorder %s26, 0
      %p85 = por %p83, %p84
      %p86 = scmp.ne.s32.totalorder %s72, %s73
      %p87 = scmp.eq.s32.totalorder %s27, 1
      %p88 = por %p86, %p87
      %p90 = scmp.ne.s32.totalorder %s73, %s89
      %p91 = scmp.eq.s32.totalorder %s27, 0
      %p92 = por %p90, %p91
      %s93 = ssub.s32 %s28, %s40
      %p94 = scmp.eq.s32.totalorder %s93, 0
      %s96 = sadd.s32 %s95, 1
      %s97 = scalar_select %p94, %s95, %s96
      %p100 = pneg %p94
      %p101 = scmp.eq.s32.totalorder %s21, 1
      %p102 = por %p100, %p101
      %p103 = scmp.ne.s32.totalorder %s95, %s98
      %p104 = scmp.eq.s32.totalorder %s21, 0
      %p105 = por %p103, %p104
      %p106 = scmp.ne.s32.totalorder %s95, %s98
      %p107 = scmp.eq.s32.totalorder %s26, 1
      %p108 = por %p106, %p107
      %p109 = scmp.ne.s32.totalorder %s98, %s99
      %p110 = scmp.eq.s32.totalorder %s26, 0
      %p111 = por %p109, %p110
      %p112 = scmp.ne.s32.totalorder %s98, %s99
      %p113 = scmp.eq.s32.totalorder %s27, 1
      %p114 = por %p112, %p113
      %p116 = scmp.ne.s32.totalorder %s99, %s115
      %p117 = scmp.eq.s32.totalorder %s27, 0
      %p118 = por %p116, %p117
      %s119 = ssub.s32 %s28, %s40
      %p120 = scmp.eq.s32.totalorder %s119, 0
      %s122 = sadd.s32 %s121, 1
      %s123 = scalar_select %p120, %s121, %s122
      %p126 = pneg %p120
      %p127 = scmp.eq.s32.totalorder %s21, 1
      %p128 = por %p126, %p127
      %p129 = scmp.ne.s32.totalorder %s121, %s124
      %p130 = scmp.eq.s32.totalorder %s21, 0
      %p131 = por %p129, %p130
      %p132 = scmp.ne.s32.totalorder %s121, %s124
      %p133 = scmp.eq.s32.totalorder %s26, 1
      %p134 = por %p132, %p133
      %p135 = scmp.ne.s32.totalorder %s124, %s125
      %p136 = scmp.eq.s32.totalorder %s26, 0
      %p137 = por %p135, %p136
      %p138 = scmp.ne.s32.totalorder %s124, %s125
      %p139 = scmp.eq.s32.totalorder %s27, 1
      %p140 = por %p138, %p139
      %p142 = scmp.ne.s32.totalorder %s125, %s141
      %p143 = scmp.eq.s32.totalorder %s27, 0
      %p144 = por %p142, %p143
      %s145 = ssub.s32 %s29, %s36
      %p146 = scmp.eq.s32.totalorder %s145, 0
      %s148 = sadd.s32 %s147, 1
      %s149 = scalar_select %p146, %s147, %s148
      %p152 = pneg %p146
      %p153 = scmp.eq.s32.totalorder %s21, 1
      %p154 = por %p152, %p153
      %p155 = scmp.ne.s32.totalorder %s147, %s150
      %p156 = scmp.eq.s32.totalorder %s21, 0
      %p157 = por %p155, %p156
      %p158 = scmp.ne.s32.totalorder %s147, %s150
      %p159 = scmp.eq.s32.totalorder %s26, 1
      %p160 = por %p158, %p159
      %p161 = scmp.ne.s32.totalorder %s150, %s151
      %p162 = scmp.eq.s32.totalorder %s26, 0
      %p163 = por %p161, %p162
      %p164 = scmp.ne.s32.totalorder %s150, %s151
      %p165 = scmp.eq.s32.totalorder %s27, 1
      %p166 = por %p164, %p165
      %p168 = scmp.ne.s32.totalorder %s151, %s167
      %p169 = scmp.eq.s32.totalorder %s27, 0
      %p170 = por %p168, %p169
      %s171 = ssub.s32 %s29, %s36
      %p172 = scmp.eq.s32.totalorder %s171, 0
      %s174 = sadd.s32 %s173, 1
      %s175 = scalar_select %p172, %s173, %s174
      %p178 = pneg %p172
      %p179 = scmp.eq.s32.totalorder %s21, 1
      %p180 = por %p178, %p179
      %p181 = scmp.ne.s32.totalorder %s173, %s176
      %p182 = scmp.eq.s32.totalorder %s21, 0
      %p183 = por %p181, %p182
      %p184 = scmp.ne.s32.totalorder %s173, %s176
      %p185 = scmp.eq.s32.totalorder %s26, 1
      %p186 = por %p184, %p185
      %p187 = scmp.ne.s32.totalorder %s176, %s177
      %p188 = scmp.eq.s32.totalorder %s26, 0
      %p189 = por %p187, %p188
      %p190 = scmp.ne.s32.totalorder %s176, %s177
      %p191 = scmp.eq.s32.totalorder %s27, 1
      %p192 = por %p190, %p191
      %p194 = scmp.ne.s32.totalorder %s177, %s193
      %p195 = scmp.eq.s32.totalorder %s27, 0
      %p196 = por %p194, %p195
      %s197 = ssub.s32 %s29, %s36
      %p198 = scmp.eq.s32.totalorder %s197, 0
      %s200 = sadd.s32 %s199, 1
      %s201 = scalar_select %p198, %s199, %s200
      %p204 = pneg %p198
      %p205 = scmp.eq.s32.totalorder %s21, 1
      %p206 = por %p204, %p205
      %p207 = scmp.ne.s32.totalorder %s199, %s202
      %p208 = scmp.eq.s32.totalorder %s21, 0
      %p209 = por %p207, %p208
      %p210 = scmp.ne.s32.totalorder %s199, %s202
      %p211 = scmp.eq.s32.totalorder %s26, 1
      %p212 = por %p210, %p211
      %p213 = scmp.ne.s32.totalorder %s202, %s203
      %p214 = scmp.eq.s32.totalorder %s26, 0
      %p215 = por %p213, %p214
      %p216 = scmp.ne.s32.totalorder %s202, %s203
      %p217 = scmp.eq.s32.totalorder %s27, 1
      %p218 = por %p216, %p217
      %p220 = scmp.ne.s32.totalorder %s203, %s219
      %p221 = scmp.eq.s32.totalorder %s27, 0
      %p222 = por %p220, %p221
      %s223 = ssub.s32 %s29, %s36
      %p224 = scmp.eq.s32.totalorder %s223, 0
      %s226 = sadd.s32 %s225, 1
      %s227 = scalar_select %p224, %s225, %s226
      %p230 = pneg %p224
      %p231 = scmp.eq.s32.totalorder %s21, 1
      %p232 = por %p230, %p231
      %p233 = scmp.ne.s32.totalorder %s225, %s228
      %p234 = scmp.eq.s32.totalorder %s21, 0
      %p235 = por %p233, %p234
      %p236 = scmp.ne.s32.totalorder %s225, %s228
      %p237 = scmp.eq.s32.totalorder %s26, 1
      %p238 = por %p236, %p237
      %p239 = scmp.ne.s32.totalorder %s228, %s229
      %p240 = scmp.eq.s32.totalorder %s26, 0
      %p241 = por %p239, %p240
      %p242 = scmp.ne.s32.totalorder %s228, %s229
      %p243 = scmp.eq.s32.totalorder %s27, 1
      %p244 = por %p242, %p243
      %p246 = scmp.ne.s32.totalorder %s229, %s245
      %p247 = scmp.eq.s32.totalorder %s27, 0
      %p248 = por %p246, %p247
      %s249 = ssub.s32 %s29, %s36
      %p250 = scmp.eq.s32.totalorder %s249, 0
      %s252 = sadd.s32 %s251, 1
      %s253 = scalar_select %p250, %s251, %s252
      %p256 = pneg %p250
      %p257 = scmp.eq.s32.totalorder %s21, 1
      %p258 = por %p256, %p257
      %p259 = scmp.ne.s32.totalorder %s251, %s254
      %p260 = scmp.eq.s32.totalorder %s21, 0
      %p261 = por %p259, %p260
      %p262 = scmp.ne.s32.totalorder %s251, %s254
      %p263 = scmp.eq.s32.totalorder %s26, 1
      %p264 = por %p262, %p263
      %p265 = scmp.ne.s32.totalorder %s254, %s255
      %p266 = scmp.eq.s32.totalorder %s26, 0
      %p267 = por %p265, %p266
      %p268 = scmp.ne.s32.totalorder %s254, %s255
      %p269 = scmp.eq.s32.totalorder %s27, 1
      %p270 = por %p268, %p269
      %p272 = scmp.ne.s32.totalorder %s255, %s271
      %p273 = scmp.eq.s32.totalorder %s27, 0
      %p274 = por %p272, %p273
      %s275 = ssub.s32 %s29, %s36
      %p276 = scmp.eq.s32.totalorder %s275, 0
      %s278 = sadd.s32 %s277, 1
      %s279 = scalar_select %p276, %s277, %s278
      %p282 = pneg %p276
      %p283 = scmp.eq.s32.totalorder %s21, 1
      %p284 = por %p282, %p283
      %p285 = scmp.ne.s32.totalorder %s277, %s280
      %p286 = scmp.eq.s32.totalorder %s21, 0
      %p287 = por %p285, %p286
      %p288 = scmp.ne.s32.totalorder %s277, %s280
      %p289 = scmp.eq.s32.totalorder %s26, 1
      %p290 = por %p288, %p289
      %p291 = scmp.ne.s32.totalorder %s280, %s281
      %p292 = scmp.eq.s32.totalorder %s26, 0
      %p293 = por %p291, %p292
      %p294 = scmp.ne.s32.totalorder %s280, %s281
      %p295 = scmp.eq.s32.totalorder %s27, 1
      %p296 = por %p294, %p295
      %p298 = scmp.ne.s32.totalorder %s281, %s297
      %p299 = scmp.eq.s32.totalorder %s27, 0
      %p300 = por %p298, %p299
      %s301 = ssub.s32 %s29, %s36
      %p302 = scmp.eq.s32.totalorder %s301, 0
      %s304 = sadd.s32 %s303, 1
      %s305 = scalar_select %p302, %s303, %s304
      %p308 = pneg %p302
      %p309 = scmp.eq.s32.totalorder %s21, 1
      %p310 = por %p308, %p309
      %p311 = scmp.ne.s32.totalorder %s303, %s306
      %p312 = scmp.eq.s32.totalorder %s21, 0
      %p313 = por %p311, %p312
      %p314 = scmp.ne.s32.totalorder %s303, %s306
      %p315 = scmp.eq.s32.totalorder %s26, 1
      %p316 = por %p314, %p315
      %p317 = scmp.ne.s32.totalorder %s306, %s307
      %p318 = scmp.eq.s32.totalorder %s26, 0
      %p319 = por %p317, %p318
      %p320 = scmp.ne.s32.totalorder %s306, %s307
      %p321 = scmp.eq.s32.totalorder %s27, 1
      %p322 = por %p320, %p321
      %p324 = scmp.ne.s32.totalorder %s307, %s323
      %p325 = scmp.eq.s32.totalorder %s27, 0
      %p326 = por %p324, %p325
      %s328 = sadd.s32 %s327, 1
      %p331 = scmp.eq.s32.totalorder %s21, 1
      %p332 = scmp.ne.s32.totalorder %s327, %s329
      %p333 = scmp.eq.s32.totalorder %s21, 0
      %p334 = por %p332, %p333
      %p335 = scmp.ne.s32.totalorder %s327, %s329
      %p336 = scmp.eq.s32.totalorder %s26, 1
      %p337 = por %p335, %p336
      %p338 = scmp.ne.s32.totalorder %s329, %s330
      %p339 = scmp.eq.s32.totalorder %s26, 0
      %p340 = por %p338, %p339
      %p341 = scmp.ne.s32.totalorder %s329, %s330
      %p342 = scmp.eq.s32.totalorder %s27, 1
      %p343 = por %p341, %p342
      %p345 = scmp.ne.s32.totalorder %s330, %s344
      %p346 = scmp.eq.s32.totalorder %s27, 0
      %p347 = por %p345, %p346
      %s348 = ssub.s32 %s28, %s40
      %p349 = scmp.eq.s32.totalorder %s348, 0
      %s351 = sadd.s32 %s350, 1
      %s352 = scalar_select %p349, %s350, %s351
      %p355 = pneg %p349
      %p356 = scmp.eq.s32.totalorder %s21, 1
      %p357 = por %p355, %p356
      %p358 = scmp.ne.s32.totalorder %s350, %s353
      %p359 = scmp.eq.s32.totalorder %s21, 0
      %p360 = por %p358, %p359
      %p361 = scmp.ne.s32.totalorder %s350, %s353
      %p362 = scmp.eq.s32.totalorder %s26, 1
      %p363 = por %p361, %p362
      %p364 = scmp.ne.s32.totalorder %s353, %s354
      %p365 = scmp.eq.s32.totalorder %s26, 0
      %p366 = por %p364, %p365
      %p367 = scmp.ne.s32.totalorder %s353, %s354
      %p368 = scmp.eq.s32.totalorder %s27, 1
      %p369 = por %p367, %p368
      %p371 = scmp.ne.s32.totalorder %s354, %s370
      %p372 = scmp.eq.s32.totalorder %s27, 0
      %p373 = por %p371, %p372
      %p374 = scmp.le.s32.totalorder 1, %s21
      %p375 = scmp.lt.s32.totalorder %s21, 3
      %p376 = pnand %p374, %p375
      %p377 = pneg %p376
      // Predicated region
      $region9: #{win_decoder_forward.1} parent=5 // pred_check
        _
      $region10: #{win_decoder_forward.1} parent=5 // pred_check_branch
        %379 = sbr.rel (%p376) target = $region12
      $region11: #{win_decoder_forward.1} parent=5 // pred_region
        %s380 = ssub.s32 %s21, 1
        // Predicated region
        $region13: #{win_decoder_forward.1} parent=11 // pred_check
          %p381 = pneg %p59
        $region14: #{win_decoder_forward.1} parent=11 // pred_check_branch
          %383 = sbr.rel (%p381) target = $region16
        $region15: #{win_decoder_forward.1} parent=11 // pred_region
          %s385 = ssub.s32 256, 256
          %386 = vsyncadd [#allocation7], %s385
          %s387 = smul.addr %s30, 32
          %s388 = scalar_lea.hbm %s0, %s387
          %s389 = sshll.u32 [#allocation6], 4
          %s390 = int_to_ptr.vmem [resolvable:$true] %s389
          %395 = dma.hbm_to_vmem [thread:$0]  %s388, 256, %s390, [#allocation7], 32, 32, 2
        $region16: #{win_decoder_forward.1} parent=11 // pred_fallthru
          _
        // Predicated region
        $region17: #{win_decoder_forward.1} parent=11 // pred_check
          %p396 = pneg %p85
        $region18: #{win_decoder_forward.1} parent=11 // pred_check_branch
          %398 = sbr.rel (%p396) target = $region20
        $region19: #{win_decoder_forward.1} parent=11 // pred_region
          %s400 = ssub.s32 512, 512
          %401 = vsyncadd [#allocation10], %s400
          %s402 = smul.addr %s30, 32
          %s403 = scalar_lea.hbm %s1, %s402
          %s404 = sshll.u32 [#allocation9], 4
          %s405 = int_to_ptr.vmem [resolvable:$true] %s404
          %410 = dma.hbm_to_vmem [thread:$0]  %s403, 512, %s405, [#allocation10], 32, 32, 2
        $region20: #{win_decoder_forward.1} parent=11 // pred_fallthru
          _
        // Predicated region
        $region21: #{win_decoder_forward.1} parent=11 // pred_check
          %p411 = pneg %p111
        $region22: #{win_decoder_forward.1} parent=11 // pred_check_branch
          %413 = sbr.rel (%p411) target = $region24
        $region23: #{win_decoder_forward.1} parent=11 // pred_region
          %p414 = scmp.lt.s32.totalorder %s30, 0
          %s415 = scalar_select %p414, %s30, 0
          %s416 = smul.addr %s415, 2
          %s417 = scalar_lea.vmem %s2, %s416
        $region24: #{win_decoder_forward.1} parent=11 // pred_fallthru
          _
        // Predicated region
        $region25: #{win_decoder_forward.1} parent=11 // pred_check
          %p418 = pneg %p137
        $region26: #{win_decoder_forward.1} parent=11 // pred_check_branch
          %420 = sbr.rel (%p418) target = $region28
        $region27: #{win_decoder_forward.1} parent=11 // pred_region
          %p421 = scmp.lt.s32.totalorder %s30, 0
          %s422 = scalar_select %p421, %s30, 0
          %s423 = smul.addr %s422, 2
          %s424 = scalar_lea.vmem %s3, %s423
        $region28: #{win_decoder_forward.1} parent=11 // pred_fallthru
          _
        // Predicated region
        $region29: #{win_decoder_forward.1} parent=11 // pred_check
          %p425 = pneg %p340
        $region30: #{win_decoder_forward.1} parent=11 // pred_check_branch
          %427 = sbr.rel (%p425) target = $region32
        $region31: #{win_decoder_forward.1} parent=11 // pred_region
          %s429 = ssub.s32 32, 32
          %430 = vsyncadd [#allocation10], %s429
          %s432 = sshll.u32 [#allocation13], 4
          %s433 = int_to_ptr.vmem [resolvable:$true] %s432
          %435 = dma.hbm_to_vmem [thread:$0]  %s11, 32, %s433, [#allocation10]
        $region32: #{win_decoder_forward.1} parent=11 // pred_fallthru
          _
      $region12: #{win_decoder_forward.1} parent=5 // pred_fallthru
        _
      %p436 = scmp.lt.s32.totalorder %s21, 2
      // Predicated region
      $region33: #{win_decoder_forward.1} parent=5 // pred_check
        %p437 = pneg %p436
      $region34: #{win_decoder_forward.1} parent=5 // pred_check_branch
        %439 = sbr.rel (%p437) target = $region36
      $region35: #{win_decoder_forward.1} parent=5 // pred_region
        // Predicated region
        $region37: #{win_decoder_forward.1} parent=35 // pred_check
          %p440 = pneg %p157
        $region38: #{win_decoder_forward.1} parent=35 // pred_check_branch
          %442 = sbr.rel (%p440) target = $region40
        $region39: #{win_decoder_forward.1} parent=35 // pred_region
          %p443 = scmp.lt.s32.totalorder %s29, 1
          %s444 = scalar_select %p443, %s29, 1
          %s445 = smul.addr %s444, 8
          %s446 = smul.addr %s445, 4
          %s447 = scalar_lea.vmem %s4, %s446
        $region40: #{win_decoder_forward.1} parent=35 // pred_fallthru
          _
        // Predicated region
        $region41: #{win_decoder_forward.1} parent=35 // pred_check
          %p448 = pneg %p183
        $region42: #{win_decoder_forward.1} parent=35 // pred_check_branch
          %450 = sbr.rel (%p448) target = $region44
        $region43: #{win_decoder_forward.1} parent=35 // pred_region
          %p451 = scmp.lt.s32.totalorder %s29, 1
          %s452 = scalar_select %p451, %s29, 1
          %s453 = smul.addr %s452, 8
          %s454 = smul.addr %s453, 4
          %s455 = scalar_lea.vmem %s5, %s454
        $region44: #{win_decoder_forward.1} parent=35 // pred_fallthru
          _
        // Predicated region
        $region45: #{win_decoder_forward.1} parent=35 // pred_check
          %p456 = pneg %p209
        $region46: #{win_decoder_forward.1} parent=35 // pred_check_branch
          %458 = sbr.rel (%p456) target = $region48
        $region47: #{win_decoder_forward.1} parent=35 // pred_region
          %p459 = scmp.lt.s32.totalorder %s29, 1
          %s460 = scalar_select %p459, %s29, 1
          %s461 = smul.addr %s460, 2
          %s462 = smul.addr %s461, 4
          %s463 = scalar_lea.vmem %s6, %s462
        $region48: #{win_decoder_forward.1} parent=35 // pred_fallthru
          _
        // Predicated region
        $region49: #{win_decoder_forward.1} parent=35 // pred_check
          %p464 = pneg %p235
        $region50: #{win_decoder_forward.1} parent=35 // pred_check_branch
          %466 = sbr.rel (%p464) target = $region52
        $region51: #{win_decoder_forward.1} parent=35 // pred_region
          %s467 = sand.u32 %s21, 1
          %s468 = scalar_lea.sflag [#allocation7], %s467
          %s469 = sand.u32 %s225, 1
          %s470 = smul.addr %s469, 16
          %s471 = scalar_lea.vmem [#allocation11], %s470
          %s473 = ssub.s32 256, 256
          %474 = vsyncadd %s468, %s473
          %s475 = smul.addr %s29, 4
          %s476 = smul.addr %s475, 64
          %s477 = scalar_lea.hbm %s7, %s476
          %s478 = sshll.u32 %s471, 4
          %s479 = int_to_ptr.vmem [resolvable:$true] %s478
          %484 = dma.hbm_to_vmem [thread:$0]  %s477, 256, %s479, %s468, 64, 64, 4
        $region52: #{win_decoder_forward.1} parent=35 // pred_fallthru
          _
        // Predicated region
        $region53: #{win_decoder_forward.1} parent=35 // pred_check
          %p485 = pneg %p261
        $region54: #{win_decoder_forward.1} parent=35 // pred_check_branch
          %487 = sbr.rel (%p485) target = $region56
        $region55: #{win_decoder_forward.1} parent=35 // pred_region
          %p488 = scmp.lt.s32.totalorder %s29, 1
          %s489 = scalar_select %p488, %s29, 1
          %s490 = smul.addr %s489, 8
          %s491 = smul.addr %s490, 4
          %s492 = scalar_lea.vmem %s8, %s491
        $region56: #{win_decoder_forward.1} parent=35 // pred_fallthru
          _
        // Predicated region
        $region57: #{win_decoder_forward.1} parent=35 // pred_check
          %p493 = pneg %p287
        $region58: #{win_decoder_forward.1} parent=35 // pred_check_branch
          %495 = sbr.rel (%p493) target = $region60
        $region59: #{win_decoder_forward.1} parent=35 // pred_region
          %s496 = sand.u32 %s21, 1
          %s497 = scalar_lea.sflag [#allocation7], %s496
          %s498 = sand.u32 %s277, 1
          %s499 = scalar_lea.vmem [#allocation12], %s498
          %s501 = ssub.s32 16, 16
          %502 = vsyncadd %s497, %s501
          %s503 = smul.addr %s29, 16
          %s504 = scalar_lea.hbm %s9, %s503
          %s506 = sshll.u32 %s499, 4
          %s507 = int_to_ptr.vmem [resolvable:$true] %s506
          %509 = dma.hbm_to_vmem [thread:$0]  %s504, 16, %s507, %s497
        $region60: #{win_decoder_forward.1} parent=35 // pred_fallthru
          _
        // Predicated region
        $region61: #{win_decoder_forward.1} parent=35 // pred_check
          %p510 = pneg %p313
        $region62: #{win_decoder_forward.1} parent=35 // pred_check_branch
          %512 = sbr.rel (%p510) target = $region64
        $region63: #{win_decoder_forward.1} parent=35 // pred_region
          %p513 = scmp.lt.s32.totalorder %s29, 1
          %s514 = scalar_select %p513, %s29, 1
          %s515 = smul.addr %s514, 2
          %s516 = smul.addr %s515, 8
          %s517 = scalar_lea.vmem %s10, %s516
        $region64: #{win_decoder_forward.1} parent=35 // pred_fallthru
          _
      $region36: #{win_decoder_forward.1} parent=5 // pred_fallthru
        _
      %p518 = scmp.le.s32.totalorder 1, %s21
      %p519 = scmp.lt.s32.totalorder %s21, 3
      %p520 = pnand %p518, %p519
      %p521 = pneg %p520
      // Predicated region
      $region65: #{win_decoder_forward.1} parent=5 // pred_check
        _
      $region66: #{win_decoder_forward.1} parent=5 // pred_check_branch
        %523 = sbr.rel (%p520) target = $region68
      $region67: #{win_decoder_forward.1} parent=5 // pred_region
        %s524 = ssub.s32 %s21, 1
        // Predicated region
        $region69: #{win_decoder_forward.1} parent=67 // pred_check
          %p525 = pneg %p59
        $region70: #{win_decoder_forward.1} parent=67 // pred_check_branch
          %527 = sbr.rel (%p525) target = $region72
        $region71: #{win_decoder_forward.1} parent=67 // pred_region
          %528 = dma.done [#allocation7], 256
        $region72: #{win_decoder_forward.1} parent=67 // pred_fallthru
          _
        // Predicated region
        $region73: #{win_decoder_forward.1} parent=67 // pred_check
          %p529 = pneg %p85
        $region74: #{win_decoder_forward.1} parent=67 // pred_check_branch
          %531 = sbr.rel (%p529) target = $region76
        $region75: #{win_decoder_forward.1} parent=67 // pred_region
          %532 = dma.done [#allocation10], 512
        $region76: #{win_decoder_forward.1} parent=67 // pred_fallthru
          _
        %s533 = sand.u32 %s26, 1
        %s534 = scalar_lea.sflag [#allocation7], %s533
        %s535 = sand.u32 %s228, 1
        %s536 = smul.addr %s535, 16
        %s537 = scalar_lea.vmem [#allocation11], %s536
        // Predicated region
        $region77: #{win_decoder_forward.1} parent=67 // pred_check
          %p538 = pneg %p241
        $region78: #{win_decoder_forward.1} parent=67 // pred_check_branch
          %540 = sbr.rel (%p538) target = $region80
        $region79: #{win_decoder_forward.1} parent=67 // pred_region
          %541 = dma.done %s534, 256
        $region80: #{win_decoder_forward.1} parent=67 // pred_fallthru
          _
        %s542 = sand.u32 %s26, 1
        %s543 = scalar_lea.sflag [#allocation7], %s542
        %s544 = sand.u32 %s280, 1
        %s545 = scalar_lea.vmem [#allocation12], %s544
        // Predicated region
        $region81: #{win_decoder_forward.1} parent=67 // pred_check
          %p546 = pneg %p293
        $region82: #{win_decoder_forward.1} parent=67 // pred_check_branch
          %548 = sbr.rel (%p546) target = $region84
        $region83: #{win_decoder_forward.1} parent=67 // pred_region
          %549 = dma.done %s543, 16
        $region84: #{win_decoder_forward.1} parent=67 // pred_fallthru
          _
        // Predicated region
        $region85: #{win_decoder_forward.1} parent=67 // pred_check
          %p550 = pneg %p340
        $region86: #{win_decoder_forward.1} parent=67 // pred_check_branch
          %552 = sbr.rel (%p550) target = $region88
        $region87: #{win_decoder_forward.1} parent=67 // pred_region
          %553 = dma.done [#allocation10], 32
        $region88: #{win_decoder_forward.1} parent=67 // pred_fallthru
          _
        %p554 = pneg %p59
        %p555 = pneg %p56
        %p556 = pneg %p85
        %p557 = pneg %p82
        %p558 = scmp.lt.s32.totalorder %s30, 0
        %s559 = scalar_select %p558, %s30, 0
        %s560 = smul.addr %s559, 2
        %s561 = scalar_lea.vmem %s2, %s560
        %p562 = pneg %p111
        %p563 = pneg %p108
        %p564 = scmp.lt.s32.totalorder %s30, 0
        %s565 = scalar_select %p564, %s30, 0
        %s566 = smul.addr %s565, 2
        %s567 = scalar_lea.vmem %s3, %s566
        %p568 = pneg %p137
        %p569 = pneg %p134
        %p570 = scmp.lt.s32.totalorder %s31, 1
        %s571 = scalar_select %p570, %s31, 1
        %s572 = smul.addr %s571, 8
        %s573 = smul.addr %s572, 4
        %s574 = scalar_lea.vmem %s4, %s573
        %p575 = pneg %p163
        %p576 = pneg %p160
        %p577 = scmp.lt.s32.totalorder %s31, 1
        %s578 = scalar_select %p577, %s31, 1
        %s579 = smul.addr %s578, 8
        %s580 = smul.addr %s579, 4
        %s581 = scalar_lea.vmem %s5, %s580
        %p582 = pneg %p189
        %p583 = pneg %p186
        %p584 = scmp.lt.s32.totalorder %s31, 1
        %s585 = scalar_select %p584, %s31, 1
        %s586 = smul.addr %s585, 2
        %s587 = smul.addr %s586, 4
        %s588 = scalar_lea.vmem %s6, %s587
        %p589 = pneg %p215
        %p590 = pneg %p212
        %s591 = sand.u32 %s26, 1
        %s592 = scalar_lea.sflag [#allocation7], %s591
        %s593 = sand.u32 %s228, 1
        %s594 = smul.addr %s593, 16
        %s595 = scalar_lea.vmem [#allocation11], %s594
        %p596 = pneg %p241
        %p597 = pneg %p238
        %p598 = scmp.lt.s32.totalorder %s31, 1
        %s599 = scalar_select %p598, %s31, 1
        %s600 = smul.addr %s599, 8
        %s601 = smul.addr %s600, 4
        %s602 = scalar_lea.vmem %s8, %s601
        %p603 = pneg %p267
        %p604 = pneg %p264
        %s605 = sand.u32 %s26, 1
        %s606 = scalar_lea.sflag [#allocation7], %s605
        %s607 = sand.u32 %s280, 1
        %s608 = scalar_lea.vmem [#allocation12], %s607
        %p609 = pneg %p293
        %p610 = pneg %p290
        %p611 = scmp.lt.s32.totalorder %s31, 1
        %s612 = scalar_select %p611, %s31, 1
        %s613 = smul.addr %s612, 2
        %s614 = smul.addr %s613, 8
        %s615 = scalar_lea.vmem %s10, %s614
        %p616 = pneg %p319
        %p617 = pneg %p316
        %p618 = pneg %p340
        %p619 = pneg %p337
        %p620 = pneg %p366
        %p621 = pneg %p363
        %p622 = scmp.lt.s32.totalorder %s30, 0
        %s623 = scalar_select %p622, %s30, 0
        %s624 = smul.addr %s623, 2
        %s625 = scalar_lea.vmem %s2, %s624
        %p626 = scmp.lt.s32.totalorder %s30, 0
        %s627 = scalar_select %p626, %s30, 0
        %s628 = smul.addr %s627, 2
        %s629 = scalar_lea.vmem %s3, %s628
        %p630 = scmp.lt.s32.totalorder %s31, 1
        %s631 = scalar_select %p630, %s31, 1
        %s632 = smul.addr %s631, 8
        %s633 = smul.addr %s632, 4
        %s634 = scalar_lea.vmem %s4, %s633
        %p635 = scmp.lt.s32.totalorder %s31, 1
        %s636 = scalar_select %p635, %s31, 1
        %s637 = smul.addr %s636, 8
        %s638 = smul.addr %s637, 4
        %s639 = scalar_lea.vmem %s5, %s638
        %p640 = scmp.lt.s32.totalorder %s31, 1
        %s641 = scalar_select %p640, %s31, 1
        %s642 = smul.addr %s641, 2
        %s643 = smul.addr %s642, 4
        %s644 = scalar_lea.vmem %s6, %s643
        %p645 = scmp.lt.s32.totalorder %s31, 1
        %s646 = scalar_select %p645, %s31, 1
        %s647 = smul.addr %s646, 8
        %s648 = smul.addr %s647, 4
        %s649 = scalar_lea.vmem %s8, %s648
        %p650 = scmp.lt.s32.totalorder %s31, 1
        %s651 = scalar_select %p650, %s31, 1
        %s652 = smul.addr %s651, 2
        %s653 = smul.addr %s652, 8
        %s654 = scalar_lea.vmem %s10, %s653
        %p656 = scmp.eq.s32.totalorder %s31, 0
        // Predicated region
        $region89: #{win_decoder_forward.1} parent=67 // pred_check
          %p657 = pneg %p656
        $region90: #{win_decoder_forward.1} parent=67 // pred_check_branch
          %659 = sbr.rel (%p657) target = $region92
        $region91: #{win_decoder_forward.1} parent=67 // pred_region
          %v660 = vld [vmem:[#allocation6] sm:$0x1]
          %v661 = vld [vmem:[#allocation6 + $0x2] sm:$0x1]
          %v662 = vld [vmem:[#allocation6 + $0x4] sm:$0x1]
          %v663 = vld [vmem:[#allocation6 + $0x6] sm:$0x1]
          %v664 = vld [vmem:[#allocation6 + $0x8] sm:$0x1]
          %v665 = vld [vmem:[#allocation6 + $0xa] sm:$0x1]
          %v666 = vld [vmem:[#allocation6 + $0xc] sm:$0x1]
          %v667 = vld [vmem:[#allocation6 + $0xe] sm:$0x1]
          %v676 = vrot.slane %v661, 7
          %vm677 = vcmask 1041409
          %v678 = vsel %vm677, %v676, %v660
          %v679 = vrot.slane %v662, 6
          %vm680 = vcmask 1042434
          %v681 = vsel %vm680, %v679, %v678
          %v682 = vrot.slane %v663, 5
          %vm683 = vcmask 1043459
          %v684 = vsel %vm683, %v682, %v681
          %v685 = vrot.slane %v664, 4
          %vm686 = vcmask 1044484
          %v687 = vsel %vm686, %v685, %v684
          %v688 = vrot.slane %v665, 3
          %vm689 = vcmask 1045509
          %v690 = vsel %vm689, %v688, %v687
          %v691 = vrot.slane %v666, 2
          %vm692 = vcmask 1046534
          %v693 = vsel %vm692, %v691, %v690
          %v694 = vrot.slane %v667, 1
          %vm695 = vcmask 1047559
          %v696 = vsel %vm695, %v694, %v693
          %vm698 = vcmask 261120
          %699 = vst.msk [vmem:[#allocation2] sm:$0xff] %vm698, %v696
          %v700 = vld [vmem:[%s625] sm:$0x1]
          %v701 = vld [vmem:[%s625 + $0x2] sm:$0x1]
          %v702 = vld [vmem:[%s625 + $0x4] sm:$0x1]
          %v703 = vld [vmem:[%s625 + $0x6] sm:$0x1]
          %v704 = vld [vmem:[%s625 + $0x8] sm:$0x1]
          %v705 = vld [vmem:[%s625 + $0xa] sm:$0x1]
          %v706 = vld [vmem:[%s625 + $0xc] sm:$0x1]
          %v707 = vld [vmem:[%s625 + $0xe] sm:$0x1]
          %v716 = vrot.slane %v701, 7
          %v717 = vsel %vm677, %v716, %v700
          %v718 = vrot.slane %v702, 6
          %v719 = vsel %vm680, %v718, %v717
          %v720 = vrot.slane %v703, 5
          %v721 = vsel %vm683, %v720, %v719
          %v722 = vrot.slane %v704, 4
          %v723 = vsel %vm686, %v722, %v721
          %v724 = vrot.slane %v705, 3
          %v725 = vsel %vm689, %v724, %v723
          %v726 = vrot.slane %v706, 2
          %v727 = vsel %vm692, %v726, %v725
          %v728 = vrot.slane %v707, 1
          %v729 = vsel %vm695, %v728, %v727
          %731 = vst.msk [vmem:[#allocation5] sm:$0xff] %vm698, %v729
          %v732 = vld [vmem:[#allocation9] sm:$0x1]
          %v733 = vld [vmem:[#allocation9 + $0x2] sm:$0x1]
          %v734 = vld [vmem:[#allocation9 + $0x4] sm:$0x1]
          %v735 = vld [vmem:[#allocation9 + $0x6] sm:$0x1]
          %v736 = vld [vmem:[#allocation9 + $0x8] sm:$0x1]
          %v737 = vld [vmem:[#allocation9 + $0xa] sm:$0x1]
          %v738 = vld [vmem:[#allocation9 + $0xc] sm:$0x1]
          %v739 = vld [vmem:[#allocation9 + $0xe] sm:$0x1]
          %v740 = vld [vmem:[#allocation9 + $0x10] sm:$0x1]
          %v741 = vld [vmem:[#allocation9 + $0x12] sm:$0x1]
          %v742 = vld [vmem:[#allocation9 + $0x14] sm:$0x1]
          %v743 = vld [vmem:[#allocation9 + $0x16] sm:$0x1]
          %v744 = vld [vmem:[#allocation9 + $0x18] sm:$0x1]
          %v745 = vld [vmem:[#allocation9 + $0x1a] sm:$0x1]
          %v746 = vld [vmem:[#allocation9 + $0x1c] sm:$0x1]
          %v747 = vld [vmem:[#allocation9 + $0x1e] sm:$0x1]
          %v748 = vpack.c.bf16 %v732, %v732
          %v749 = vpack.c.bf16 %v733, %v733
          %v750 = vpack.c.bf16 %v734, %v734
          %v751 = vpack.c.bf16 %v735, %v735
          %v752 = vpack.c.bf16 %v736, %v736
          %v753 = vpack.c.bf16 %v737, %v737
          %v754 = vpack.c.bf16 %v738, %v738
          %v755 = vpack.c.bf16 %v739, %v739
          %v756 = vpack.c.bf16 %v740, %v740
          %v757 = vpack.c.bf16 %v741, %v741
          %v758 = vpack.c.bf16 %v742, %v742
          %v759 = vpack.c.bf16 %v743, %v743
          %v760 = vpack.c.bf16 %v744, %v744
          %v761 = vpack.c.bf16 %v745, %v745
          %v762 = vpack.c.bf16 %v746, %v746
          %v763 = vpack.c.bf16 %v747, %v747
          %v780 = vunpack.c.l.b16 %v748
          %v781 = vunpack.c.l.b16 %v749
          %v782 = vunpack.c.l.b16 %v750
          %v783 = vunpack.c.l.b16 %v751
          %v784 = vunpack.c.l.b16 %v752
          %v785 = vunpack.c.l.b16 %v753
          %v786 = vunpack.c.l.b16 %v754
          %v787 = vunpack.c.l.b16 %v755
          %v788 = vunpack.c.l.b16 %v756
          %v789 = vunpack.c.l.b16 %v757
          %v790 = vunpack.c.l.b16 %v758
          %v791 = vunpack.c.l.b16 %v759
          %v792 = vunpack.c.l.b16 %v760
          %v793 = vunpack.c.l.b16 %v761
          %v794 = vunpack.c.l.b16 %v762
          %v795 = vunpack.c.l.b16 %v763
          %v796 = vrot.slane %v781, 7
          %v797 = vsel %vm677, %v796, %v780
          %v798 = vrot.slane %v782, 6
          %v799 = vsel %vm680, %v798, %v797
          %v800 = vrot.slane %v783, 5
          %v801 = vsel %vm683, %v800, %v799
          %v802 = vrot.slane %v784, 4
          %v803 = vsel %vm686, %v802, %v801
          %v804 = vrot.slane %v785, 3
          %v805 = vsel %vm689, %v804, %v803
          %v806 = vrot.slane %v786, 2
          %v807 = vsel %vm692, %v806, %v805
          %v808 = vrot.slane %v787, 1
          %v809 = vsel %vm695, %v808, %v807
          %v810 = vrot.slane %v789, 7
          %v811 = vsel %vm677, %v810, %v788
          %v812 = vrot.slane %v790, 6
          %v813 = vsel %vm680, %v812, %v811
          %v814 = vrot.slane %v791, 5
          %v815 = vsel %vm683, %v814, %v813
          %v816 = vrot.slane %v792, 4
          %v817 = vsel %vm686, %v816, %v815
          %v818 = vrot.slane %v793, 3
          %v819 = vsel %vm689, %v818, %v817
          %v820 = vrot.slane %v794, 2
          %v821 = vsel %vm692, %v820, %v819
          %v822 = vrot.slane %v795, 1
          %v823 = vsel %vm695, %v822, %v821
          %v824 = vpack.c.b16 %v823, %v809
          %826 = vst.msk [vmem:[#allocation3] sm:$0xff] %vm698, %v824
          %v827 = vld [vmem:[%s629] sm:$0x1]
          %v828 = vld [vmem:[%s629 + $0x2] sm:$0x1]
          %v829 = vld [vmem:[%s629 + $0x4] sm:$0x1]
          %v830 = vld [vmem:[%s629 + $0x6] sm:$0x1]
          %v831 = vld [vmem:[%s629 + $0x8] sm:$0x1]
          %v832 = vld [vmem:[%s629 + $0xa] sm:$0x1]
          %v833 = vld [vmem:[%s629 + $0xc] sm:$0x1]
          %v834 = vld [vmem:[%s629 + $0xe] sm:$0x1]
          %v835 = vld [vmem:[%s629 + $0x10] sm:$0x1]
          %v836 = vld [vmem:[%s629 + $0x12] sm:$0x1]
          %v837 = vld [vmem:[%s629 + $0x14] sm:$0x1]
          %v838 = vld [vmem:[%s629 + $0x16] sm:$0x1]
          %v839 = vld [vmem:[%s629 + $0x18] sm:$0x1]
          %v840 = vld [vmem:[%s629 + $0x1a] sm:$0x1]
          %v841 = vld [vmem:[%s629 + $0x1c] sm:$0x1]
          %v842 = vld [vmem:[%s629 + $0x1e] sm:$0x1]
          %v843 = vadd.f32 %v732, %v827
          %v844 = vadd.f32 %v733, %v828
          %v845 = vadd.f32 %v734, %v829
          %v846 = vadd.f32 %v735, %v830
          %v847 = vadd.f32 %v736, %v831
          %v848 = vadd.f32 %v737, %v832
          %v849 = vadd.f32 %v738, %v833
          %v850 = vadd.f32 %v739, %v834
          %v851 = vadd.f32 %v740, %v835
          %v852 = vadd.f32 %v741, %v836
          %v853 = vadd.f32 %v742, %v837
          %v854 = vadd.f32 %v743, %v838
          %v855 = vadd.f32 %v744, %v839
          %v856 = vadd.f32 %v745, %v840
          %v857 = vadd.f32 %v746, %v841
          %v858 = vadd.f32 %v747, %v842
          %v859 = vpack.c.bf16 %v843, %v843
          %v860 = vpack.c.bf16 %v844, %v844
          %v861 = vpack.c.bf16 %v845, %v845
          %v862 = vpack.c.bf16 %v846, %v846
          %v863 = vpack.c.bf16 %v847, %v847
          %v864 = vpack.c.bf16 %v848, %v848
          %v865 = vpack.c.bf16 %v849, %v849
          %v866 = vpack.c.bf16 %v850, %v850
          %v867 = vpack.c.bf16 %v851, %v851
          %v868 = vpack.c.bf16 %v852, %v852
          %v869 = vpack.c.bf16 %v853, %v853
          %v870 = vpack.c.bf16 %v854, %v854
          %v871 = vpack.c.bf16 %v855, %v855
          %v872 = vpack.c.bf16 %v856, %v856
          %v873 = vpack.c.bf16 %v857, %v857
          %v874 = vpack.c.bf16 %v858, %v858
          %v891 = vunpack.c.l.b16 %v859
          %v892 = vunpack.c.l.b16 %v860
          %v893 = vunpack.c.l.b16 %v861
          %v894 = vunpack.c.l.b16 %v862
          %v895 = vunpack.c.l.b16 %v863
          %v896 = vunpack.c.l.b16 %v864
          %v897 = vunpack.c.l.b16 %v865
          %v898 = vunpack.c.l.b16 %v866
          %v899 = vunpack.c.l.b16 %v867
          %v900 = vunpack.c.l.b16 %v868
          %v901 = vunpack.c.l.b16 %v869
          %v902 = vunpack.c.l.b16 %v870
          %v903 = vunpack.c.l.b16 %v871
          %v904 = vunpack.c.l.b16 %v872
          %v905 = vunpack.c.l.b16 %v873
          %v906 = vunpack.c.l.b16 %v874
          %v907 = vrot.slane %v892, 7
          %v908 = vsel %vm677, %v907, %v891
          %v909 = vrot.slane %v893, 6
          %v910 = vsel %vm680, %v909, %v908
          %v911 = vrot.slane %v894, 5
          %v912 = vsel %vm683, %v911, %v910
          %v913 = vrot.slane %v895, 4
          %v914 = vsel %vm686, %v913, %v912
          %v915 = vrot.slane %v896, 3
          %v916 = vsel %vm689, %v915, %v914
          %v917 = vrot.slane %v897, 2
          %v918 = vsel %vm692, %v917, %v916
          %v919 = vrot.slane %v898, 1
          %v920 = vsel %vm695, %v919, %v918
          %v921 = vrot.slane %v900, 7
          %v922 = vsel %vm677, %v921, %v899
          %v923 = vrot.slane %v901, 6
          %v924 = vsel %vm680, %v923, %v922
          %v925 = vrot.slane %v902, 5
          %v926 = vsel %vm683, %v925, %v924
          %v927 = vrot.slane %v903, 4
          %v928 = vsel %vm686, %v927, %v926
          %v929 = vrot.slane %v904, 3
          %v930 = vsel %vm689, %v929, %v928
          %v931 = vrot.slane %v905, 2
          %v932 = vsel %vm692, %v931, %v930
          %v933 = vrot.slane %v906, 1
          %v934 = vsel %vm695, %v933, %v932
          %v935 = vpack.c.b16 %v934, %v920
          %937 = vst.msk [vmem:[#allocation4] sm:$0xff] %vm698, %v935
          %v938 = vld [vmem:[#allocation6 + $0x1] sm:$0x1]
          %v939 = vld [vmem:[#allocation6 + $0x3] sm:$0x1]
          %v940 = vld [vmem:[#allocation6 + $0x5] sm:$0x1]
          %v941 = vld [vmem:[#allocation6 + $0x7] sm:$0x1]
          %v942 = vld [vmem:[#allocation6 + $0x9] sm:$0x1]
          %v943 = vld [vmem:[#allocation6 + $0xb] sm:$0x1]
          %v944 = vld [vmem:[#allocation6 + $0xd] sm:$0x1]
          %v945 = vld [vmem:[#allocation6 + $0xf] sm:$0x1]
          %v954 = vrot.slane %v939, 7
          %v955 = vsel %vm677, %v954, %v938
          %v956 = vrot.slane %v940, 6
          %v957 = vsel %vm680, %v956, %v955
          %v958 = vrot.slane %v941, 5
          %v959 = vsel %vm683, %v958, %v957
          %v960 = vrot.slane %v942, 4
          %v961 = vsel %vm686, %v960, %v959
          %v962 = vrot.slane %v943, 3
          %v963 = vsel %vm689, %v962, %v961
          %v964 = vrot.slane %v944, 2
          %v965 = vsel %vm692, %v964, %v963
          %v966 = vrot.slane %v945, 1
          %v967 = vsel %vm695, %v966, %v965
          %969 = vst.msk [vmem:[#allocation2 + $0x8] sm:$0xff] %vm698, %v967
          %v970 = vld [vmem:[%s625 + $0x1] sm:$0x1]
          %v971 = vld [vmem:[%s625 + $0x3] sm:$0x1]
          %v972 = vld [vmem:[%s625 + $0x5] sm:$0x1]
          %v973 = vld [vmem:[%s625 + $0x7] sm:$0x1]
          %v974 = vld [vmem:[%s625 + $0x9] sm:$0x1]
          %v975 = vld [vmem:[%s625 + $0xb] sm:$0x1]
          %v976 = vld [vmem:[%s625 + $0xd] sm:$0x1]
          %v977 = vld [vmem:[%s625 + $0xf] sm:$0x1]
          %v986 = vrot.slane %v971, 7
          %v987 = vsel %vm677, %v986, %v970
          %v988 = vrot.slane %v972, 6
          %v989 = vsel %vm680, %v988, %v987
          %v990 = vrot.slane %v973, 5
          %v991 = vsel %vm683, %v990, %v989
          %v992 = vrot.slane %v974, 4
          %v993 = vsel %vm686, %v992, %v991
          %v994 = vrot.slane %v975, 3
          %v995 = vsel %vm689, %v994, %v993
          %v996 = vrot.slane %v976, 2
          %v997 = vsel %vm692, %v996, %v995
          %v998 = vrot.slane %v977, 1
          %v999 = vsel %vm695, %v998, %v997
          %1001 = vst.msk [vmem:[#allocation5 + $0x8] sm:$0xff] %vm698, %v999
          %v1002 = vld [vmem:[#allocation9 + $0x1] sm:$0x1]
          %v1003 = vld [vmem:[#allocation9 + $0x3] sm:$0x1]
          %v1004 = vld [vmem:[#allocation9 + $0x5] sm:$0x1]
          %v1005 = vld [vmem:[#allocation9 + $0x7] sm:$0x1]
          %v1006 = vld [vmem:[#allocation9 + $0x9] sm:$0x1]
          %v1007 = vld [vmem:[#allocation9 + $0xb] sm:$0x1]
          %v1008 = vld [vmem:[#allocation9 + $0xd] sm:$0x1]
          %v1009 = vld [vmem:[#allocation9 + $0xf] sm:$0x1]
          %v1010 = vld [vmem:[#allocation9 + $0x11] sm:$0x1]
          %v1011 = vld [vmem:[#allocation9 + $0x13] sm:$0x1]
          %v1012 = vld [vmem:[#allocation9 + $0x15] sm:$0x1]
          %v1013 = vld [vmem:[#allocation9 + $0x17] sm:$0x1]
          %v1014 = vld [vmem:[#allocation9 + $0x19] sm:$0x1]
          %v1015 = vld [vmem:[#allocation9 + $0x1b] sm:$0x1]
          %v1016 = vld [vmem:[#allocation9 + $0x1d] sm:$0x1]
          %v1017 = vld [vmem:[#allocation9 + $0x1f] sm:$0x1]
          %v1018 = vpack.c.bf16 %v1002, %v1002
          %v1019 = vpack.c.bf16 %v1003, %v1003
          %v1020 = vpack.c.bf16 %v1004, %v1004
          %v1021 = vpack.c.bf16 %v1005, %v1005
          %v1022 = vpack.c.bf16 %v1006, %v1006
          %v1023 = vpack.c.bf16 %v1007, %v1007
          %v1024 = vpack.c.bf16 %v1008, %v1008
          %v1025 = vpack.c.bf16 %v1009, %v1009
          %v1026 = vpack.c.bf16 %v1010, %v1010
          %v1027 = vpack.c.bf16 %v1011, %v1011
          %v1028 = vpack.c.bf16 %v1012, %v1012
          %v1029 = vpack.c.bf16 %v1013, %v1013
          %v1030 = vpack.c.bf16 %v1014, %v1014
          %v1031 = vpack.c.bf16 %v1015, %v1015
          %v1032 = vpack.c.bf16 %v1016, %v1016
          %v1033 = vpack.c.bf16 %v1017, %v1017
          %v1050 = vunpack.c.l.b16 %v1018
          %v1051 = vunpack.c.l.b16 %v1019
          %v1052 = vunpack.c.l.b16 %v1020
          %v1053 = vunpack.c.l.b16 %v1021
          %v1054 = vunpack.c.l.b16 %v1022
          %v1055 = vunpack.c.l.b16 %v1023
          %v1056 = vunpack.c.l.b16 %v1024
          %v1057 = vunpack.c.l.b16 %v1025
          %v1058 = vunpack.c.l.b16 %v1026
          %v1059 = vunpack.c.l.b16 %v1027
          %v1060 = vunpack.c.l.b16 %v1028
          %v1061 = vunpack.c.l.b16 %v1029
          %v1062 = vunpack.c.l.b16 %v1030
          %v1063 = vunpack.c.l.b16 %v1031
          %v1064 = vunpack.c.l.b16 %v1032
          %v1065 = vunpack.c.l.b16 %v1033
          %v1066 = vrot.slane %v1051, 7
          %v1067 = vsel %vm677, %v1066, %v1050
          %v1068 = vrot.slane %v1052, 6
          %v1069 = vsel %vm680, %v1068, %v1067
          %v1070 = vrot.slane %v1053, 5
          %v1071 = vsel %vm683, %v1070, %v1069
          %v1072 = vrot.slane %v1054, 4
          %v1073 = vsel %vm686, %v1072, %v1071
          %v1074 = vrot.slane %v1055, 3
          %v1075 = vsel %vm689, %v1074, %v1073
          %v1076 = vrot.slane %v1056, 2
          %v1077 = vsel %vm692, %v1076, %v1075
          %v1078 = vrot.slane %v1057, 1
          %v1079 = vsel %vm695, %v1078, %v1077
          %v1080 = vrot.slane %v1059, 7
          %v1081 = vsel %vm677, %v1080, %v1058
          %v1082 = vrot.slane %v1060, 6
          %v1083 = vsel %vm680, %v1082, %v1081
          %v1084 = vrot.slane %v1061, 5
          %v1085 = vsel %vm683, %v1084, %v1083
          %v1086 = vrot.slane %v1062, 4
          %v1087 = vsel %vm686, %v1086, %v1085
          %v1088 = vrot.slane %v1063, 3
          %v1089 = vsel %vm689, %v1088, %v1087
          %v1090 = vrot.slane %v1064, 2
          %v1091 = vsel %vm692, %v1090, %v1089
          %v1092 = vrot.slane %v1065, 1
          %v1093 = vsel %vm695, %v1092, %v1091
          %v1094 = vpack.c.b16 %v1093, %v1079
          %1096 = vst.msk [vmem:[#allocation3 + $0x8] sm:$0xff] %vm698, %v1094
          %v1097 = vld [vmem:[%s629 + $0x1] sm:$0x1]
          %v1098 = vld [vmem:[%s629 + $0x3] sm:$0x1]
          %v1099 = vld [vmem:[%s629 + $0x5] sm:$0x1]
          %v1100 = vld [vmem:[%s629 + $0x7] sm:$0x1]
          %v1101 = vld [vmem:[%s629 + $0x9] sm:$0x1]
          %v1102 = vld [vmem:[%s629 + $0xb] sm:$0x1]
          %v1103 = vld [vmem:[%s629 + $0xd] sm:$0x1]
          %v1104 = vld [vmem:[%s629 + $0xf] sm:$0x1]
          %v1105 = vld [vmem:[%s629 + $0x11] sm:$0x1]
          %v1106 = vld [vmem:[%s629 + $0x13] sm:$0x1]
          %v1107 = vld [vmem:[%s629 + $0x15] sm:$0x1]
          %v1108 = vld [vmem:[%s629 + $0x17] sm:$0x1]
          %v1109 = vld [vmem:[%s629 + $0x19] sm:$0x1]
          %v1110 = vld [vmem:[%s629 + $0x1b] sm:$0x1]
          %v1111 = vld [vmem:[%s629 + $0x1d] sm:$0x1]
          %v1112 = vld [vmem:[%s629 + $0x1f] sm:$0x1]
          %v1113 = vadd.f32 %v1002, %v1097
          %v1114 = vadd.f32 %v1003, %v1098
          %v1115 = vadd.f32 %v1004, %v1099
          %v1116 = vadd.f32 %v1005, %v1100
          %v1117 = vadd.f32 %v1006, %v1101
          %v1118 = vadd.f32 %v1007, %v1102
          %v1119 = vadd.f32 %v1008, %v1103
          %v1120 = vadd.f32 %v1009, %v1104
          %v1121 = vadd.f32 %v1010, %v1105
          %v1122 = vadd.f32 %v1011, %v1106
          %v1123 = vadd.f32 %v1012, %v1107
          %v1124 = vadd.f32 %v1013, %v1108
          %v1125 = vadd.f32 %v1014, %v1109
          %v1126 = vadd.f32 %v1015, %v1110
          %v1127 = vadd.f32 %v1016, %v1111
          %v1128 = vadd.f32 %v1017, %v1112
          %v1129 = vpack.c.bf16 %v1113, %v1113
          %v1130 = vpack.c.bf16 %v1114, %v1114
          %v1131 = vpack.c.bf16 %v1115, %v1115
          %v1132 = vpack.c.bf16 %v1116, %v1116
          %v1133 = vpack.c.bf16 %v1117, %v1117
          %v1134 = vpack.c.bf16 %v1118, %v1118
          %v1135 = vpack.c.bf16 %v1119, %v1119
          %v1136 = vpack.c.bf16 %v1120, %v1120
          %v1137 = vpack.c.bf16 %v1121, %v1121
          %v1138 = vpack.c.bf16 %v1122, %v1122
          %v1139 = vpack.c.bf16 %v1123, %v1123
          %v1140 = vpack.c.bf16 %v1124, %v1124
          %v1141 = vpack.c.bf16 %v1125, %v1125
          %v1142 = vpack.c.bf16 %v1126, %v1126
          %v1143 = vpack.c.bf16 %v1127, %v1127
          %v1144 = vpack.c.bf16 %v1128, %v1128
          %v1161 = vunpack.c.l.b16 %v1129
          %v1162 = vunpack.c.l.b16 %v1130
          %v1163 = vunpack.c.l.b16 %v1131
          %v1164 = vunpack.c.l.b16 %v1132
          %v1165 = vunpack.c.l.b16 %v1133
          %v1166 = vunpack.c.l.b16 %v1134
          %v1167 = vunpack.c.l.b16 %v1135
          %v1168 = vunpack.c.l.b16 %v1136
          %v1169 = vunpack.c.l.b16 %v1137
          %v1170 = vunpack.c.l.b16 %v1138
          %v1171 = vunpack.c.l.b16 %v1139
          %v1172 = vunpack.c.l.b16 %v1140
          %v1173 = vunpack.c.l.b16 %v1141
          %v1174 = vunpack.c.l.b16 %v1142
          %v1175 = vunpack.c.l.b16 %v1143
          %v1176 = vunpack.c.l.b16 %v1144
          %v1177 = vrot.slane %v1162, 7
          %v1178 = vsel %vm677, %v1177, %v1161
          %v1179 = vrot.slane %v1163, 6
          %v1180 = vsel %vm680, %v1179, %v1178
          %v1181 = vrot.slane %v1164, 5
          %v1182 = vsel %vm683, %v1181, %v1180
          %v1183 = vrot.slane %v1165, 4
          %v1184 = vsel %vm686, %v1183, %v1182
          %v1185 = vrot.slane %v1166, 3
          %v1186 = vsel %vm689, %v1185, %v1184
          %v1187 = vrot.slane %v1167, 2
          %v1188 = vsel %vm692, %v1187, %v1186
          %v1189 = vrot.slane %v1168, 1
          %v1190 = vsel %vm695, %v1189, %v1188
          %v1191 = vrot.slane %v1170, 7
          %v1192 = vsel %vm677, %v1191, %v1169
          %v1193 = vrot.slane %v1171, 6
          %v1194 = vsel %vm680, %v1193, %v1192
          %v1195 = vrot.slane %v1172, 5
          %v1196 = vsel %vm683, %v1195, %v1194
          %v1197 = vrot.slane %v1173, 4
          %v1198 = vsel %vm686, %v1197, %v1196
          %v1199 = vrot.slane %v1174, 3
          %v1200 = vsel %vm689, %v1199, %v1198
          %v1201 = vrot.slane %v1175, 2
          %v1202 = vsel %vm692, %v1201, %v1200
          %v1203 = vrot.slane %v1176, 1
          %v1204 = vsel %vm695, %v1203, %v1202
          %v1205 = vpack.c.b16 %v1204, %v1190
          %1207 = vst.msk [vmem:[#allocation4 + $0x8] sm:$0xff] %vm698, %v1205
        $region92: #{win_decoder_forward.1} parent=67 // pred_fallthru
          _
        %v1208 = vld [vmem:[#allocation2] sm:$0xff]
        %v1209 = vld [vmem:[#allocation2 + $0x8] sm:$0xff]
        %v1210 = vld [vmem:[#allocation5] sm:$0xff]
        %v1211 = vld [vmem:[#allocation5 + $0x8] sm:$0xff]
        %v1212 = vadd.f32 %v1208, %v1210
        %v1213 = vadd.f32 %v1209, %v1211
        %v1214 = vpack.c.bf16 %v1213, %v1212
        %v1215 = vpack.c.bf16 %v1209, %v1208
        %v1216 = vld [vmem:[%s654] sm:$0x1]
        %v1217 = vld [vmem:[%s634] sm:$0xf]
        %v1218 = vld [vmem:[%s634 + $0x4] sm:$0xf]
        %v1219 = vld [vmem:[%s634 + $0x8] sm:$0xf]
        %v1220 = vld [vmem:[%s634 + $0xc] sm:$0xf]
        %v1225 = vunpack.c.l.b16 %v1217
        %v1226 = vunpack.c.l.b16 %v1218
        %v1227 = vunpack.c.l.b16 %v1219
        %v1228 = vunpack.c.l.b16 %v1220
        %v1229 = vpack.c.b16 %v1226, %v1225
        %v1230 = vpack.c.b16 %v1228, %v1227
        %vm1233 = vcmask 261120
        %v1235 = vsel %vm1233, %v1214, 0
        %1237 = vmatprep.subr.bf16.mxu0 0
        %1238 = vmatpush1.bf16.msra.mxu0 %v1229
        %1239 = vmatprep.subr.bf16.mxu0 0
        %1240 = vmatpush1.bf16.msra.mxu0 %v1230
        %1241 = vmatprep.subr.bf16.mxu0 0
        %1242 = vmatpush1.bf16.msra.mxu0 0
        %1243 = vmatprep.subr.bf16.mxu0 0
        %1244 = vmatpush1.bf16.msra.mxu0 0
        %1245 = vmatprep.subr.bf16.mxu0 0
        %1246 = vmatpush1.bf16.msra.mxu0 0
        %1247 = vmatprep.subr.bf16.mxu0 0
        %1248 = vmatpush1.bf16.msra.mxu0 0
        %1249 = vmatprep.subr.bf16.mxu0 0
        %1250 = vmatpush1.bf16.msra.mxu0 0
        %1251 = vmatprep.subr.bf16.mxu0 0
        %1252 = vmatpush1.bf16.msra.mxu0 0
        %1253 = vmatprep.subr.bf16.mxu0 0
        %1254 = vmatpush1.bf16.msra.mxu0 0
        %1255 = vmatprep.subr.bf16.mxu0 0
        %1256 = vmatpush1.bf16.msra.mxu0 0
        %1257 = vmatprep.subr.bf16.mxu0 0
        %1258 = vmatpush1.bf16.msra.mxu0 0
        %1259 = vmatprep.subr.bf16.mxu0 0
        %1260 = vmatpush1.bf16.msra.mxu0 0
        %1261 = vmatprep.subr.bf16.mxu0 0
        %1262 = vmatpush1.bf16.msra.mxu0 0
        %1263 = vmatprep.subr.bf16.mxu0 0
        %1264 = vmatpush1.bf16.msra.mxu0 0
        %1265 = vmatprep.subr.bf16.mxu0 0
        %1266 = vmatpush1.bf16.msra.mxu0 0
        %1267 = vmatprep.subr.bf16.mxu0 0
        %1268 = vmatpush1.bf16.msra.mxu0 0
        %1269 = vmatprep.mubr.bf16.mxu0 0
        %1270 = vmatmul.mubr.bf16.gmra.mrb[0].mxu0 %v1235
        %v1271 = vpop.f32.mrb[0].mxu0
        %v1272 = vadd.f32 0.0, %v1271
        %v1273 = vpop.f32.mrb[0].mxu0
        %v1274 = vpop.f32.mrb[0].mxu0
        %v1275 = vadd.f32 0.0, %v1274
        %v1276 = vpop.f32.mrb[0].mxu0
        %1277 = vdwg.mxu0
        %v1278 = vld [vmem:[%s644] sm:$0x1]
        %v1279 = vlaneseq
        %v1280 = vshrl.u32 %v1279, 7
        %v1281 = vsub.s32 0, %v1280
        %v1282 = vrot.slane %v1278, %v1281
        %v1283 = vadd.f32 %v1272, %v1282
        %v1284 = vadd.f32 %v1275, %v1282
        %v1285 = vld [vmem:[%s644 + $0x1] sm:$0x1]
        %v1286 = vlaneseq
        %v1287 = vshrl.u32 %v1286, 7
        %v1288 = vsub.s32 0, %v1287
        %v1289 = vrot.slane %v1285, %v1288
        %1291 = vrot.lane.b32.xlu0 %v1289, 32
        %v1292 = vpop.permute.xlu0 %1291
        %v1294 = vadd.f32 %v1272, %v1292
        %v1295 = vadd.f32 %v1275, %v1292
        %v1296 = vld [vmem:[%s644 + $0x2] sm:$0x1]
        %v1297 = vlaneseq
        %v1298 = vshrl.u32 %v1297, 7
        %v1299 = vsub.s32 0, %v1298
        %v1300 = vrot.slane %v1296, %v1299
        %1301 = vrot.lane.b32.xlu0 %v1229, 64
        %v1302 = vpop.permute.xlu0 %1301
        %1303 = vrot.lane.b32.xlu0 %v1230, 64
        %v1304 = vpop.permute.xlu0 %1303
        %v1308 = vsel %vm1233, %v1215, 0
        %1310 = vmatprep.subr.bf16.mxu0 0
        %1311 = vmatpush1.bf16.msra.mxu0 %v1302
        %1312 = vmatprep.subr.bf16.mxu0 0
        %1313 = vmatpush1.bf16.msra.mxu0 %v1304
        %1314 = vmatprep.subr.bf16.mxu0 0
        %1315 = vmatpush1.bf16.msra.mxu0 0
        %1316 = vmatprep.subr.bf16.mxu0 0
        %1317 = vmatpush1.bf16.msra.mxu0 0
        %1318 = vmatprep.subr.bf16.mxu0 0
        %1319 = vmatpush1.bf16.msra.mxu0 0
        %1320 = vmatprep.subr.bf16.mxu0 0
        %1321 = vmatpush1.bf16.msra.mxu0 0
        %1322 = vmatprep.subr.bf16.mxu0 0
        %1323 = vmatpush1.bf16.msra.mxu0 0
        %1324 = vmatprep.subr.bf16.mxu0 0
        %1325 = vmatpush1.bf16.msra.mxu0 0
        %1326 = vmatprep.subr.bf16.mxu0 0
        %1327 = vmatpush1.bf16.msra.mxu0 0
        %1328 = vmatprep.subr.bf16.mxu0 0
        %1329 = vmatpush1.bf16.msra.mxu0 0
        %1330 = vmatprep.subr.bf16.mxu0 0
        %1331 = vmatpush1.bf16.msra.mxu0 0
        %1332 = vmatprep.subr.bf16.mxu0 0
        %1333 = vmatpush1.bf16.msra.mxu0 0
        %1334 = vmatprep.subr.bf16.mxu0 0
        %1335 = vmatpush1.bf16.msra.mxu0 0
        %1336 = vmatprep.subr.bf16.mxu0 0
        %1337 = vmatpush1.bf16.msra.mxu0 0
        %1338 = vmatprep.subr.bf16.mxu0 0
        %1339 = vmatpush1.bf16.msra.mxu0 0
        %1340 = vmatprep.subr.bf16.mxu0 0
        %1341 = vmatpush1.bf16.msra.mxu0 0
        %1342 = vmatprep.mubr.bf16.mxu0 0
        %1343 = vmatmul.mubr.bf16.gmra.mrb[0].mxu0 %v1308
        %v1344 = vpop.f32.mrb[0].mxu0
        %v1345 = vadd.f32 %v1300, %v1344
        %v1346 = vpop.f32.mrb[0].mxu0
        %v1347 = vpop.f32.mrb[0].mxu0
        %v1348 = vadd.f32 %v1300, %v1347
        %v1349 = vpop.f32.mrb[0].mxu0
        %1350 = vdwg.mxu0
        %v1351 = vpack.c.bf16 %v1284, %v1283
        %v1353 = vunpack.c.l.b16 %v1351
        %v1354 = vunpack.c.h.b16 %v1351
        %v1355 = vpack.c.b16 %v1353, %v1353
        %v1356 = vpack.c.b16 %v1354, %v1354
        %v1357 = vpack.c.bf16 %v1295, %v1294
        %v1359 = vunpack.c.l.b16 %v1357
        %v1360 = vunpack.c.h.b16 %v1357
        %v1361 = vpack.c.bf16 %v1348, %v1345
        %v1363 = vunpack.c.l.b16 %v1361
        %v1364 = vunpack.c.h.b16 %v1361
        %v1365 = vpack.c.b16 %v1363, %v1363
        %v1366 = vpack.c.b16 %v1364, %v1364
        %v1367 = vpack.c.b16 %v1359, %v1359
        %1368 = vrot.lane.b32.xlu0 %v1367, 96
        %v1369 = vpop.permute.xlu0 %1368
        %vm1370 = vcmask 64512
        %v1372 = vsel %vm1370, %v1355, 0
        %v1375 = vsel %vm1370, %v1369, 0
        %1377 = vmatprep.subr.bf16.mxu0 0
        %1378 = vmatpush1.bf16.xpose.msra.mxu0 %v1375
        %1379 = vmatprep.subr.bf16.mxu0 0
        %1380 = vmatpush1.bf16.xpose.msra.mxu0 0
        %1381 = vmatprep.subr.bf16.mxu0 0
        %1382 = vmatpush1.bf16.xpose.msra.mxu0 0
        %1383 = vmatprep.subr.bf16.mxu0 0
        %1384 = vmatpush1.bf16.xpose.msra.mxu0 0
        %1385 = vmatprep.subr.bf16.mxu0 0
        %1386 = vmatpush1.bf16.xpose.msra.mxu0 0
        %1387 = vmatprep.subr.bf16.mxu0 0
        %1388 = vmatpush1.bf16.xpose.msra.mxu0 0
        %1389 = vmatprep.subr.bf16.mxu0 0
        %1390 = vmatpush1.bf16.xpose.msra.mxu0 0
        %1391 = vmatprep.subr.bf16.mxu0 0
        %1392 = vmatpush1.bf16.xpose.msra.mxu0 0
        %1393 = vmatprep.subr.bf16.mxu0 0
        %1394 = vmatpush1.bf16.xpose.msra.mxu0 0
        %1395 = vmatprep.subr.bf16.mxu0 0
        %1396 = vmatpush1.bf16.xpose.msra.mxu0 0
        %1397 = vmatprep.subr.bf16.mxu0 0
        %1398 = vmatpush1.bf16.xpose.msra.mxu0 0
        %1399 = vmatprep.subr.bf16.mxu0 0
        %1400 = vmatpush1.bf16.xpose.msra.mxu0 0
        %1401 = vmatprep.subr.bf16.mxu0 0
        %1402 = vmatpush1.bf16.xpose.msra.mxu0 0
        %1403 = vmatprep.subr.bf16.mxu0 0
        %1404 = vmatpush1.bf16.xpose.msra.mxu0 0
        %1405 = vmatprep.subr.bf16.mxu0 0
        %1406 = vmatpush1.bf16.xpose.msra.mxu0 0
        %1407 = vmatprep.subr.bf16.mxu0 0
        %1408 = vmatpush1.bf16.xpose.msra.mxu0 0
        %1409 = vmatprep.mubr.bf16.mxu0 0
        %1410 = vmatmul.mubr.bf16.gmra.mrb[0].mxu0 %v1372
        %v1411 = vpop.f32.mrb[0].mxu0
        %v1412 = vadd.f32 0.0, %v1411
        %v1413 = vpop.f32.mrb[0].mxu0
        %v1414 = vpop.f32.mrb[0].mxu0
        %v1415 = vpop.f32.mrb[0].mxu0
        %1416 = vdwg.mxu0
        %v1417 = vpack.c.b16 %v1360, %v1360
        %1418 = vrot.lane.b32.xlu0 %v1417, 96
        %v1419 = vpop.permute.xlu0 %1418
        %v1421 = vsel %vm1370, %v1356, 0
        %v1424 = vsel %vm1370, %v1419, 0
        %1426 = vmatprep.subr.bf16.mxu0 0
        %1427 = vmatpush1.bf16.xpose.msra.mxu0 %v1424
        %1428 = vmatprep.subr.bf16.mxu0 0
        %1429 = vmatpush1.bf16.xpose.msra.mxu0 0
        %1430 = vmatprep.subr.bf16.mxu0 0
        %1431 = vmatpush1.bf16.xpose.msra.mxu0 0
        %1432 = vmatprep.subr.bf16.mxu0 0
        %1433 = vmatpush1.bf16.xpose.msra.mxu0 0
        %1434 = vmatprep.subr.bf16.mxu0 0
        %1435 = vmatpush1.bf16.xpose.msra.mxu0 0
        %1436 = vmatprep.subr.bf16.mxu0 0
        %1437 = vmatpush1.bf16.xpose.msra.mxu0 0
        %1438 = vmatprep.subr.bf16.mxu0 0
        %1439 = vmatpush1.bf16.xpose.msra.mxu0 0
        %1440 = vmatprep.subr.bf16.mxu0 0
        %1441 = vmatpush1.bf16.xpose.msra.mxu0 0
        %1442 = vmatprep.subr.bf16.mxu0 0
        %1443 = vmatpush1.bf16.xpose.msra.mxu0 0
        %1444 = vmatprep.subr.bf16.mxu0 0
        %1445 = vmatpush1.bf16.xpose.msra.mxu0 0
        %1446 = vmatprep.subr.bf16.mxu0 0
        %1447 = vmatpush1.bf16.xpose.msra.mxu0 0
        %1448 = vmatprep.subr.bf16.mxu0 0
        %1449 = vmatpush1.bf16.xpose.msra.mxu0 0
        %1450 = vmatprep.subr.bf16.mxu0 0
        %1451 = vmatpush1.bf16.xpose.msra.mxu0 0
        %1452 = vmatprep.subr.bf16.mxu0 0
        %1453 = vmatpush1.bf16.xpose.msra.mxu0 0
        %1454 = vmatprep.subr.bf16.mxu0 0
        %1455 = vmatpush1.bf16.xpose.msra.mxu0 0
        %1456 = vmatprep.subr.bf16.mxu0 0
        %1457 = vmatpush1.bf16.xpose.msra.mxu0 0
        %1458 = vmatprep.mubr.bf16.mxu0 0
        %1459 = vmatmul.mubr.bf16.gmra.mrb[0].mxu0 %v1421
        %v1460 = vpop.f32.mrb[0].mxu0
        %v1461 = vadd.f32 0.0, %v1460
        %v1462 = vpop.f32.mrb[0].mxu0
        %v1463 = vpop.f32.mrb[0].mxu0
        %v1464 = vpop.f32.mrb[0].mxu0
        %1465 = vdwg.mxu0
        %v1466 = vsel %vm1370, %v1412, -inf
        %1467 = vmax.xlane.f32.xlu0 %v1466
        %v1468 = vpop.xlane.xlu0 %1467
        %v1469 = vsel %vm1370, %v1461, -inf
        %1470 = vmax.xlane.f32.xlu0 %v1469
        %v1471 = vpop.xlane.xlu0 %1470
        %v1472 = vsub.f32 %v1412, %v1468
        %v1473 = vsub.f32 %v1461, %v1471
        %v1474 = vmul.f32 %v1472, 1.442695
        %v1475 = vpow.pop %v1474
        %v1476 = vmul.f32 %v1473, 1.442695
        %v1477 = vpow.pop %v1476
        %v1478 = vsel %vm1370, %v1475, 0.0
        %1479 = vadd.xlane.f32.xlu0 %v1478
        %v1480 = vpop.xlane.xlu0 %1479
        %v1481 = vsel %vm1370, %v1477, 0.0
        %1482 = vadd.xlane.f32.xlu0 %v1481
        %v1483 = vpop.xlane.xlu0 %1482
        %v1484 = vrcp.pop %v1480
        %v1485 = vrcp.pop %v1483
        %v1486 = vmul.f32 %v1475, %v1484
        %v1487 = vmul.f32 %v1477, %v1485
        %v1488 = vpack.c.bf16 %v1486, %v1486
        %v1489 = vpack.c.bf16 %v1487, %v1487
        %v1491 = vsel %vm1370, %v1488, 0
        %vm1493 = vcmask 1043456
        %v1495 = vsel %vm1493, %v1365, 0
        %1497 = vmatprep.subr.bf16.mxu0 0
        %1498 = vmatpush1.bf16.msra.mxu0 %v1495
        %1499 = vmatprep.subr.bf16.mxu0 0
        %1500 = vmatpush1.bf16.msra.mxu0 0
        %1501 = vmatprep.subr.bf16.mxu0 0
        %1502 = vmatpush1.bf16.msra.mxu0 0
        %1503 = vmatprep.subr.bf16.mxu0 0
        %1504 = vmatpush1.bf16.msra.mxu0 0
        %1505 = vmatprep.subr.bf16.mxu0 0
        %1506 = vmatpush1.bf16.msra.mxu0 0
        %1507 = vmatprep.subr.bf16.mxu0 0
        %1508 = vmatpush1.bf16.msra.mxu0 0
        %1509 = vmatprep.subr.bf16.mxu0 0
        %1510 = vmatpush1.bf16.msra.mxu0 0
        %1511 = vmatprep.subr.bf16.mxu0 0
        %1512 = vmatpush1.bf16.msra.mxu0 0
        %1513 = vmatprep.subr.bf16.mxu0 0
        %1514 = vmatpush1.bf16.msra.mxu0 0
        %1515 = vmatprep.subr.bf16.mxu0 0
        %1516 = vmatpush1.bf16.msra.mxu0 0
        %1517 = vmatprep.subr.bf16.mxu0 0
        %1518 = vmatpush1.bf16.msra.mxu0 0
        %1519 = vmatprep.subr.bf16.mxu0 0
        %1520 = vmatpush1.bf16.msra.mxu0 0
        %1521 = vmatprep.subr.bf16.mxu0 0
        %1522 = vmatpush1.bf16.msra.mxu0 0
        %1523 = vmatprep.subr.bf16.mxu0 0
        %1524 = vmatpush1.bf16.msra.mxu0 0
        %1525 = vmatprep.subr.bf16.mxu0 0
        %1526 = vmatpush1.bf16.msra.mxu0 0
        %1527 = vmatprep.subr.bf16.mxu0 0
        %1528 = vmatpush1.bf16.msra.mxu0 0
        %1529 = vmatprep.mubr.bf16.mxu0 0
        %1530 = vmatmul.mubr.bf16.gmra.mrb[0].mxu0 %v1491
        %v1531 = vpop.f32.mrb[0].mxu0
        %v1532 = vadd.f32 0.0, %v1531
        %v1533 = vpop.f32.mrb[0].mxu0
        %v1534 = vpop.f32.mrb[0].mxu0
        %v1535 = vpop.f32.mrb[0].mxu0
        %1536 = vdwg.mxu0
        %v1538 = vsel %vm1370, %v1489, 0
        %v1541 = vsel %vm1493, %v1366, 0
        %1543 = vmatprep.subr.bf16.mxu0 0
        %1544 = vmatpush1.bf16.msra.mxu0 %v1541
        %1545 = vmatprep.subr.bf16.mxu0 0
        %1546 = vmatpush1.bf16.msra.mxu0 0
        %1547 = vmatprep.subr.bf16.mxu0 0
        %1548 = vmatpush1.bf16.msra.mxu0 0
        %1549 = vmatprep.subr.bf16.mxu0 0
        %1550 = vmatpush1.bf16.msra.mxu0 0
        %1551 = vmatprep.subr.bf16.mxu0 0
        %1552 = vmatpush1.bf16.msra.mxu0 0
        %1553 = vmatprep.subr.bf16.mxu0 0
        %1554 = vmatpush1.bf16.msra.mxu0 0
        %1555 = vmatprep.subr.bf16.mxu0 0
        %1556 = vmatpush1.bf16.msra.mxu0 0
        %1557 = vmatprep.subr.bf16.mxu0 0
        %1558 = vmatpush1.bf16.msra.mxu0 0
        %1559 = vmatprep.subr.bf16.mxu0 0
        %1560 = vmatpush1.bf16.msra.mxu0 0
        %1561 = vmatprep.subr.bf16.mxu0 0
        %1562 = vmatpush1.bf16.msra.mxu0 0
        %1563 = vmatprep.subr.bf16.mxu0 0
        %1564 = vmatpush1.bf16.msra.mxu0 0
        %1565 = vmatprep.subr.bf16.mxu0 0
        %1566 = vmatpush1.bf16.msra.mxu0 0
        %1567 = vmatprep.subr.bf16.mxu0 0
        %1568 = vmatpush1.bf16.msra.mxu0 0
        %1569 = vmatprep.subr.bf16.mxu0 0
        %1570 = vmatpush1.bf16.msra.mxu0 0
        %1571 = vmatprep.subr.bf16.mxu0 0
        %1572 = vmatpush1.bf16.msra.mxu0 0
        %1573 = vmatprep.subr.bf16.mxu0 0
        %1574 = vmatpush1.bf16.msra.mxu0 0
        %1575 = vmatprep.mubr.bf16.mxu0 0
        %1576 = vmatmul.mubr.bf16.gmra.mrb[0].mxu0 %v1538
        %v1577 = vpop.f32.mrb[0].mxu0
        %v1578 = vadd.f32 0.0, %v1577
        %v1579 = vpop.f32.mrb[0].mxu0
        %v1580 = vpop.f32.mrb[0].mxu0
        %v1581 = vpop.f32.mrb[0].mxu0
        %1582 = vdwg.mxu0
        %1583 = vrot.lane.b32.xlu0 %v1355, 120
        %v1584 = vpop.permute.xlu0 %1583
        %1585 = vrot.lane.b32.xlu0 %v1367, 88
        %v1586 = vpop.permute.xlu0 %1585
        %v1588 = vsel %vm1370, %v1584, 0
        %v1591 = vsel %vm1370, %v1586, 0
        %1593 = vmatprep.subr.bf16.mxu0 0
        %1594 = vmatpush1.bf16.xpose.msra.mxu0 %v1591
        %1595 = vmatprep.subr.bf16.mxu0 0
        %1596 = vmatpush1.bf16.xpose.msra.mxu0 0
        %1597 = vmatprep.subr.bf16.mxu0 0
        %1598 = vmatpush1.bf16.xpose.msra.mxu0 0
        %1599 = vmatprep.subr.bf16.mxu0 0
        %1600 = vmatpush1.bf16.xpose.msra.mxu0 0
        %1601 = vmatprep.subr.bf16.mxu0 0
        %1602 = vmatpush1.bf16.xpose.msra.mxu0 0
        %1603 = vmatprep.subr.bf16.mxu0 0
        %1604 = vmatpush1.bf16.xpose.msra.mxu0 0
        %1605 = vmatprep.subr.bf16.mxu0 0
        %1606 = vmatpush1.bf16.xpose.msra.mxu0 0
        %1607 = vmatprep.subr.bf16.mxu0 0
        %1608 = vmatpush1.bf16.xpose.msra.mxu0 0
        %1609 = vmatprep.subr.bf16.mxu0 0
        %1610 = vmatpush1.bf16.xpose.msra.mxu0 0
        %1611 = vmatprep.subr.bf16.mxu0 0
        %1612 = vmatpush1.bf16.xpose.msra.mxu0 0
        %1613 = vmatprep.subr.bf16.mxu0 0
        %1614 = vmatpush1.bf16.xpose.msra.mxu0 0
        %1615 = vmatprep.subr.bf16.mxu0 0
        %1616 = vmatpush1.bf16.xpose.msra.mxu0 0
        %1617 = vmatprep.subr.bf16.mxu0 0
        %1618 = vmatpush1.bf16.xpose.msra.mxu0 0
        %1619 = vmatprep.subr.bf16.mxu0 0
        %1620 = vmatpush1.bf16.xpose.msra.mxu0 0
        %1621 = vmatprep.subr.bf16.mxu0 0
        %1622 = vmatpush1.bf16.xpose.msra.mxu0 0
        %1623 = vmatprep.subr.bf16.mxu0 0
        %1624 = vmatpush1.bf16.xpose.msra.mxu0 0
        %1625 = vmatprep.mubr.bf16.mxu0 0
        %1626 = vmatmul.mubr.bf16.gmra.mrb[0].mxu0 %v1588
        %v1627 = vpop.f32.mrb[0].mxu0
        %v1628 = vadd.f32 0.0, %v1627
        %v1629 = vpop.f32.mrb[0].mxu0
        %v1630 = vpop.f32.mrb[0].mxu0
        %v1631 = vpop.f32.mrb[0].mxu0
        %1632 = vdwg.mxu0
        %1633 = vrot.lane.b32.xlu0 %v1356, 120
        %v1634 = vpop.permute.xlu0 %1633
        %1635 = vrot.lane.b32.xlu0 %v1417, 88
        %v1636 = vpop.permute.xlu0 %1635
        %v1638 = vsel %vm1370, %v1634, 0
        %v1641 = vsel %vm1370, %v1636, 0
        %1643 = vmatprep.subr.bf16.mxu0 0
        %1644 = vmatpush1.bf16.xpose.msra.mxu0 %v1641
        %1645 = vmatprep.subr.bf16.mxu0 0
        %1646 = vmatpush1.bf16.xpose.msra.mxu0 0
        %1647 = vmatprep.subr.bf16.mxu0 0
        %1648 = vmatpush1.bf16.xpose.msra.mxu0 0
        %1649 = vmatprep.subr.bf16.mxu0 0
        %1650 = vmatpush1.bf16.xpose.msra.mxu0 0
        %1651 = vmatprep.subr.bf16.mxu0 0
        %1652 = vmatpush1.bf16.xpose.msra.mxu0 0
        %1653 = vmatprep.subr.bf16.mxu0 0
        %1654 = vmatpush1.bf16.xpose.msra.mxu0 0
        %1655 = vmatprep.subr.bf16.mxu0 0
        %1656 = vmatpush1.bf16.xpose.msra.mxu0 0
        %1657 = vmatprep.subr.bf16.mxu0 0
        %1658 = vmatpush1.bf16.xpose.msra.mxu0 0
        %1659 = vmatprep.subr.bf16.mxu0 0
        %1660 = vmatpush1.bf16.xpose.msra.mxu0 0
        %1661 = vmatprep.subr.bf16.mxu0 0
        %1662 = vmatpush1.bf16.xpose.msra.mxu0 0
        %1663 = vmatprep.subr.bf16.mxu0 0
        %1664 = vmatpush1.bf16.xpose.msra.mxu0 0
        %1665 = vmatprep.subr.bf16.mxu0 0
        %1666 = vmatpush1.bf16.xpose.msra.mxu0 0
        %1667 = vmatprep.subr.bf16.mxu0 0
        %1668 = vmatpush1.bf16.xpose.msra.mxu0 0
        %1669 = vmatprep.subr.bf16.mxu0 0
        %1670 = vmatpush1.bf16.xpose.msra.mxu0 0
        %1671 = vmatprep.subr.bf16.mxu0 0
        %1672 = vmatpush1.bf16.xpose.msra.mxu0 0
        %1673 = vmatprep.subr.bf16.mxu0 0
        %1674 = vmatpush1.bf16.xpose.msra.mxu0 0
        %1675 = vmatprep.mubr.bf16.mxu0 0
        %1676 = vmatmul.mubr.bf16.gmra.mrb[0].mxu0 %v1638
        %v1677 = vpop.f32.mrb[0].mxu0
        %v1678 = vadd.f32 0.0, %v1677
        %v1679 = vpop.f32.mrb[0].mxu0
        %v1680 = vpop.f32.mrb[0].mxu0
        %v1681 = vpop.f32.mrb[0].mxu0
        %1682 = vdwg.mxu0
        %v1683 = vsel %vm1370, %v1628, -inf
        %1684 = vmax.xlane.f32.xlu0 %v1683
        %v1685 = vpop.xlane.xlu0 %1684
        %v1686 = vsel %vm1370, %v1678, -inf
        %1687 = vmax.xlane.f32.xlu0 %v1686
        %v1688 = vpop.xlane.xlu0 %1687
        %v1689 = vsub.f32 %v1628, %v1685
        %v1690 = vsub.f32 %v1678, %v1688
        %v1691 = vmul.f32 %v1689, 1.442695
        %v1692 = vpow.pop %v1691
        %v1693 = vmul.f32 %v1690, 1.442695
        %v1694 = vpow.pop %v1693
        %v1695 = vsel %vm1370, %v1692, 0.0
        %1696 = vadd.xlane.f32.xlu0 %v1695
        %v1697 = vpop.xlane.xlu0 %1696
        %v1698 = vsel %vm1370, %v1694, 0.0
        %1699 = vadd.xlane.f32.xlu0 %v1698
        %v1700 = vpop.xlane.xlu0 %1699
        %v1701 = vrcp.pop %v1697
        %v1702 = vrcp.pop %v1700
        %v1703 = vmul.f32 %v1692, %v1701
        %v1704 = vmul.f32 %v1694, %v1702
        %v1705 = vpack.c.bf16 %v1703, %v1703
        %v1706 = vpack.c.bf16 %v1704, %v1704
        %1707 = vrot.lane.b32.xlu0 %v1365, 120
        %v1708 = vpop.permute.xlu0 %1707
        %v1710 = vsel %vm1370, %v1705, 0
        %v1713 = vsel %vm1493, %v1708, 0
        %1715 = vmatprep.subr.bf16.mxu0 0
        %1716 = vmatpush1.bf16.msra.mxu0 %v1713
        %1717 = vmatprep.subr.bf16.mxu0 0
        %1718 = vmatpush1.bf16.msra.mxu0 0
        %1719 = vmatprep.subr.bf16.mxu0 0
        %1720 = vmatpush1.bf16.msra.mxu0 0
        %1721 = vmatprep.subr.bf16.mxu0 0
        %1722 = vmatpush1.bf16.msra.mxu0 0
        %1723 = vmatprep.subr.bf16.mxu0 0
        %1724 = vmatpush1.bf16.msra.mxu0 0
        %1725 = vmatprep.subr.bf16.mxu0 0
        %1726 = vmatpush1.bf16.msra.mxu0 0
        %1727 = vmatprep.subr.bf16.mxu0 0
        %1728 = vmatpush1.bf16.msra.mxu0 0
        %1729 = vmatprep.subr.bf16.mxu0 0
        %1730 = vmatpush1.bf16.msra.mxu0 0
        %1731 = vmatprep.subr.bf16.mxu0 0
        %1732 = vmatpush1.bf16.msra.mxu0 0
        %1733 = vmatprep.subr.bf16.mxu0 0
        %1734 = vmatpush1.bf16.msra.mxu0 0
        %1735 = vmatprep.subr.bf16.mxu0 0
        %1736 = vmatpush1.bf16.msra.mxu0 0
        %1737 = vmatprep.subr.bf16.mxu0 0
        %1738 = vmatpush1.bf16.msra.mxu0 0
        %1739 = vmatprep.subr.bf16.mxu0 0
        %1740 = vmatpush1.bf16.msra.mxu0 0
        %1741 = vmatprep.subr.bf16.mxu0 0
        %1742 = vmatpush1.bf16.msra.mxu0 0
        %1743 = vmatprep.subr.bf16.mxu0 0
        %1744 = vmatpush1.bf16.msra.mxu0 0
        %1745 = vmatprep.subr.bf16.mxu0 0
        %1746 = vmatpush1.bf16.msra.mxu0 0
        %1747 = vmatprep.mubr.bf16.mxu0 0
        %1748 = vmatmul.mubr.bf16.gmra.mrb[0].mxu0 %v1710
        %v1749 = vpop.f32.mrb[0].mxu0
        %v1750 = vadd.f32 0.0, %v1749
        %v1751 = vpop.f32.mrb[0].mxu0
        %v1752 = vpop.f32.mrb[0].mxu0
        %v1753 = vpop.f32.mrb[0].mxu0
        %1754 = vdwg.mxu0
        %1755 = vrot.lane.b32.xlu0 %v1366, 120
        %v1756 = vpop.permute.xlu0 %1755
        %v1758 = vsel %vm1370, %v1706, 0
        %v1761 = vsel %vm1493, %v1756, 0
        %1763 = vmatprep.subr.bf16.mxu0 0
        %1764 = vmatpush1.bf16.msra.mxu0 %v1761
        %1765 = vmatprep.subr.bf16.mxu0 0
        %1766 = vmatpush1.bf16.msra.mxu0 0
        %1767 = vmatprep.subr.bf16.mxu0 0
        %1768 = vmatpush1.bf16.msra.mxu0 0
        %1769 = vmatprep.subr.bf16.mxu0 0
        %1770 = vmatpush1.bf16.msra.mxu0 0
        %1771 = vmatprep.subr.bf16.mxu0 0
        %1772 = vmatpush1.bf16.msra.mxu0 0
        %1773 = vmatprep.subr.bf16.mxu0 0
        %1774 = vmatpush1.bf16.msra.mxu0 0
        %1775 = vmatprep.subr.bf16.mxu0 0
        %1776 = vmatpush1.bf16.msra.mxu0 0
        %1777 = vmatprep.subr.bf16.mxu0 0
        %1778 = vmatpush1.bf16.msra.mxu0 0
        %1779 = vmatprep.subr.bf16.mxu0 0
        %1780 = vmatpush1.bf16.msra.mxu0 0
        %1781 = vmatprep.subr.bf16.mxu0 0
        %1782 = vmatpush1.bf16.msra.mxu0 0
        %1783 = vmatprep.subr.bf16.mxu0 0
        %1784 = vmatpush1.bf16.msra.mxu0 0
        %1785 = vmatprep.subr.bf16.mxu0 0
        %1786 = vmatpush1.bf16.msra.mxu0 0
        %1787 = vmatprep.subr.bf16.mxu0 0
        %1788 = vmatpush1.bf16.msra.mxu0 0
        %1789 = vmatprep.subr.bf16.mxu0 0
        %1790 = vmatpush1.bf16.msra.mxu0 0
        %1791 = vmatprep.subr.bf16.mxu0 0
        %1792 = vmatpush1.bf16.msra.mxu0 0
        %1793 = vmatprep.subr.bf16.mxu0 0
        %1794 = vmatpush1.bf16.msra.mxu0 0
        %1795 = vmatprep.mubr.bf16.mxu0 0
        %1796 = vmatmul.mubr.bf16.gmra.mrb[0].mxu0 %v1758
        %v1797 = vpop.f32.mrb[0].mxu0
        %v1798 = vadd.f32 0.0, %v1797
        %v1799 = vpop.f32.mrb[0].mxu0
        %v1800 = vpop.f32.mrb[0].mxu0
        %v1801 = vpop.f32.mrb[0].mxu0
        %1802 = vdwg.mxu0
        %1803 = vrot.lane.b32.xlu0 %v1355, 112
        %v1804 = vpop.permute.xlu0 %1803
        %1805 = vrot.lane.b32.xlu0 %v1367, 80
        %v1806 = vpop.permute.xlu0 %1805
        %v1808 = vsel %vm1370, %v1804, 0
        %v1811 = vsel %vm1370, %v1806, 0
        %1813 = vmatprep.subr.bf16.mxu0 0
        %1814 = vmatpush1.bf16.xpose.msra.mxu0 %v1811
        %1815 = vmatprep.subr.bf16.mxu0 0
        %1816 = vmatpush1.bf16.xpose.msra.mxu0 0
        %1817 = vmatprep.subr.bf16.mxu0 0
        %1818 = vmatpush1.bf16.xpose.msra.mxu0 0
        %1819 = vmatprep.subr.bf16.mxu0 0
        %1820 = vmatpush1.bf16.xpose.msra.mxu0 0
        %1821 = vmatprep.subr.bf16.mxu0 0
        %1822 = vmatpush1.bf16.xpose.msra.mxu0 0
        %1823 = vmatprep.subr.bf16.mxu0 0
        %1824 = vmatpush1.bf16.xpose.msra.mxu0 0
        %1825 = vmatprep.subr.bf16.mxu0 0
        %1826 = vmatpush1.bf16.xpose.msra.mxu0 0
        %1827 = vmatprep.subr.bf16.mxu0 0
        %1828 = vmatpush1.bf16.xpose.msra.mxu0 0
        %1829 = vmatprep.subr.bf16.mxu0 0
        %1830 = vmatpush1.bf16.xpose.msra.mxu0 0
        %1831 = vmatprep.subr.bf16.mxu0 0
        %1832 = vmatpush1.bf16.xpose.msra.mxu0 0
        %1833 = vmatprep.subr.bf16.mxu0 0
        %1834 = vmatpush1.bf16.xpose.msra.mxu0 0
        %1835 = vmatprep.subr.bf16.mxu0 0
        %1836 = vmatpush1.bf16.xpose.msra.mxu0 0
        %1837 = vmatprep.subr.bf16.mxu0 0
        %1838 = vmatpush1.bf16.xpose.msra.mxu0 0
        %1839 = vmatprep.subr.bf16.mxu0 0
        %1840 = vmatpush1.bf16.xpose.msra.mxu0 0
        %1841 = vmatprep.subr.bf16.mxu0 0
        %1842 = vmatpush1.bf16.xpose.msra.mxu0 0
        %1843 = vmatprep.subr.bf16.mxu0 0
        %1844 = vmatpush1.bf16.xpose.msra.mxu0 0
        %1845 = vmatprep.mubr.bf16.mxu0 0
        %1846 = vmatmul.mubr.bf16.gmra.mrb[0].mxu0 %v1808
        %v1847 = vpop.f32.mrb[0].mxu0
        %v1848 = vadd.f32 0.0, %v1847
        %v1849 = vpop.f32.mrb[0].mxu0
        %v1850 = vpop.f32.mrb[0].mxu0
        %v1851 = vpop.f32.mrb[0].mxu0
        %1852 = vdwg.mxu0
        %1853 = vrot.lane.b32.xlu0 %v1356, 112
        %v1854 = vpop.permute.xlu0 %1853
        %1855 = vrot.lane.b32.xlu0 %v1417, 80
        %v1856 = vpop.permute.xlu0 %1855
        %v1858 = vsel %vm1370, %v1854, 0
        %v1861 = vsel %vm1370, %v1856, 0
        %1863 = vmatprep.subr.bf16.mxu0 0
        %1864 = vmatpush1.bf16.xpose.msra.mxu0 %v1861
        %1865 = vmatprep.subr.bf16.mxu0 0
        %1866 = vmatpush1.bf16.xpose.msra.mxu0 0
        %1867 = vmatprep.subr.bf16.mxu0 0
        %1868 = vmatpush1.bf16.xpose.msra.mxu0 0
        %1869 = vmatprep.subr.bf16.mxu0 0
        %1870 = vmatpush1.bf16.xpose.msra.mxu0 0
        %1871 = vmatprep.subr.bf16.mxu0 0
        %1872 = vmatpush1.bf16.xpose.msra.mxu0 0
        %1873 = vmatprep.subr.bf16.mxu0 0
        %1874 = vmatpush1.bf16.xpose.msra.mxu0 0
        %1875 = vmatprep.subr.bf16.mxu0 0
        %1876 = vmatpush1.bf16.xpose.msra.mxu0 0
        %1877 = vmatprep.subr.bf16.mxu0 0
        %1878 = vmatpush1.bf16.xpose.msra.mxu0 0
        %1879 = vmatprep.subr.bf16.mxu0 0
        %1880 = vmatpush1.bf16.xpose.msra.mxu0 0
        %1881 = vmatprep.subr.bf16.mxu0 0
        %1882 = vmatpush1.bf16.xpose.msra.mxu0 0
        %1883 = vmatprep.subr.bf16.mxu0 0
        %1884 = vmatpush1.bf16.xpose.msra.mxu0 0
        %1885 = vmatprep.subr.bf16.mxu0 0
        %1886 = vmatpush1.bf16.xpose.msra.mxu0 0
        %1887 = vmatprep.subr.bf16.mxu0 0
        %1888 = vmatpush1.bf16.xpose.msra.mxu0 0
        %1889 = vmatprep.subr.bf16.mxu0 0
        %1890 = vmatpush1.bf16.xpose.msra.mxu0 0
        %1891 = vmatprep.subr.bf16.mxu0 0
        %1892 = vmatpush1.bf16.xpose.msra.mxu0 0
        %1893 = vmatprep.subr.bf16.mxu0 0
        %1894 = vmatpush1.bf16.xpose.msra.mxu0 0
        %1895 = vmatprep.mubr.bf16.mxu0 0
        %1896 = vmatmul.mubr.bf16.gmra.mrb[0].mxu0 %v1858
        %v1897 = vpop.f32.mrb[0].mxu0
        %v1898 = vadd.f32 0.0, %v1897
        %v1899 = vpop.f32.mrb[0].mxu0
        %v1900 = vpop.f32.mrb[0].mxu0
        %v1901 = vpop.f32.mrb[0].mxu0
        %1902 = vdwg.mxu0
        %v1903 = vsel %vm1370, %v1848, -inf
        %1904 = vmax.xlane.f32.xlu0 %v1903
        %v1905 = vpop.xlane.xlu0 %1904
        %v1906 = vsel %vm1370, %v1898, -inf
        %1907 = vmax.xlane.f32.xlu0 %v1906
        %v1908 = vpop.xlane.xlu0 %1907
        %v1909 = vsub.f32 %v1848, %v1905
        %v1910 = vsub.f32 %v1898, %v1908
        %v1911 = vmul.f32 %v1909, 1.442695
        %v1912 = vpow.pop %v1911
        %v1913 = vmul.f32 %v1910, 1.442695
        %v1914 = vpow.pop %v1913
        %v1915 = vsel %vm1370, %v1912, 0.0
        %1916 = vadd.xlane.f32.xlu0 %v1915
        %v1917 = vpop.xlane.xlu0 %1916
        %v1918 = vsel %vm1370, %v1914, 0.0
        %1919 = vadd.xlane.f32.xlu0 %v1918
        %v1920 = vpop.xlane.xlu0 %1919
        %v1921 = vrcp.pop %v1917
        %v1922 = vrcp.pop %v1920
        %v1923 = vmul.f32 %v1912, %v1921
        %v1924 = vmul.f32 %v1914, %v1922
        %v1925 = vpack.c.bf16 %v1923, %v1923
        %v1926 = vpack.c.bf16 %v1924, %v1924
        %1927 = vrot.lane.b32.xlu0 %v1365, 112
        %v1928 = vpop.permute.xlu0 %1927
        %v1930 = vsel %vm1370, %v1925, 0
        %v1933 = vsel %vm1493, %v1928, 0
        %1935 = vmatprep.subr.bf16.mxu0 0
        %1936 = vmatpush1.bf16.msra.mxu0 %v1933
        %1937 = vmatprep.subr.bf16.mxu0 0
        %1938 = vmatpush1.bf16.msra.mxu0 0
        %1939 = vmatprep.subr.bf16.mxu0 0
        %1940 = vmatpush1.bf16.msra.mxu0 0
        %1941 = vmatprep.subr.bf16.mxu0 0
        %1942 = vmatpush1.bf16.msra.mxu0 0
        %1943 = vmatprep.subr.bf16.mxu0 0
        %1944 = vmatpush1.bf16.msra.mxu0 0
        %1945 = vmatprep.subr.bf16.mxu0 0
        %1946 = vmatpush1.bf16.msra.mxu0 0
        %1947 = vmatprep.subr.bf16.mxu0 0
        %1948 = vmatpush1.bf16.msra.mxu0 0
        %1949 = vmatprep.subr.bf16.mxu0 0
        %1950 = vmatpush1.bf16.msra.mxu0 0
        %1951 = vmatprep.subr.bf16.mxu0 0
        %1952 = vmatpush1.bf16.msra.mxu0 0
        %1953 = vmatprep.subr.bf16.mxu0 0
        %1954 = vmatpush1.bf16.msra.mxu0 0
        %1955 = vmatprep.subr.bf16.mxu0 0
        %1956 = vmatpush1.bf16.msra.mxu0 0
        %1957 = vmatprep.subr.bf16.mxu0 0
        %1958 = vmatpush1.bf16.msra.mxu0 0
        %1959 = vmatprep.subr.bf16.mxu0 0
        %1960 = vmatpush1.bf16.msra.mxu0 0
        %1961 = vmatprep.subr.bf16.mxu0 0
        %1962 = vmatpush1.bf16.msra.mxu0 0
        %1963 = vmatprep.subr.bf16.mxu0 0
        %1964 = vmatpush1.bf16.msra.mxu0 0
        %1965 = vmatprep.subr.bf16.mxu0 0
        %1966 = vmatpush1.bf16.msra.mxu0 0
        %1967 = vmatprep.mubr.bf16.mxu0 0
        %1968 = vmatmul.mubr.bf16.gmra.mrb[0].mxu0 %v1930
        %v1969 = vpop.f32.mrb[0].mxu0
        %v1970 = vadd.f32 0.0, %v1969
        %v1971 = vpop.f32.mrb[0].mxu0
        %v1972 = vpop.f32.mrb[0].mxu0
        %v1973 = vpop.f32.mrb[0].mxu0
        %1974 = vdwg.mxu0
        %1975 = vrot.lane.b32.xlu0 %v1366, 112
        %v1976 = vpop.permute.xlu0 %1975
        %v1978 = vsel %vm1370, %v1926, 0
        %v1981 = vsel %vm1493, %v1976, 0
        %1983 = vmatprep.subr.bf16.mxu0 0
        %1984 = vmatpush1.bf16.msra.mxu0 %v1981
        %1985 = vmatprep.subr.bf16.mxu0 0
        %1986 = vmatpush1.bf16.msra.mxu0 0
        %1987 = vmatprep.subr.bf16.mxu0 0
        %1988 = vmatpush1.bf16.msra.mxu0 0
        %1989 = vmatprep.subr.bf16.mxu0 0
        %1990 = vmatpush1.bf16.msra.mxu0 0
        %1991 = vmatprep.subr.bf16.mxu0 0
        %1992 = vmatpush1.bf16.msra.mxu0 0
        %1993 = vmatprep.subr.bf16.mxu0 0
        %1994 = vmatpush1.bf16.msra.mxu0 0
        %1995 = vmatprep.subr.bf16.mxu0 0
        %1996 = vmatpush1.bf16.msra.mxu0 0
        %1997 = vmatprep.subr.bf16.mxu0 0
        %1998 = vmatpush1.bf16.msra.mxu0 0
        %1999 = vmatprep.subr.bf16.mxu0 0
        %2000 = vmatpush1.bf16.msra.mxu0 0
        %2001 = vmatprep.subr.bf16.mxu0 0
        %2002 = vmatpush1.bf16.msra.mxu0 0
        %2003 = vmatprep.subr.bf16.mxu0 0
        %2004 = vmatpush1.bf16.msra.mxu0 0
        %2005 = vmatprep.subr.bf16.mxu0 0
        %2006 = vmatpush1.bf16.msra.mxu0 0
        %2007 = vmatprep.subr.bf16.mxu0 0
        %2008 = vmatpush1.bf16.msra.mxu0 0
        %2009 = vmatprep.subr.bf16.mxu0 0
        %2010 = vmatpush1.bf16.msra.mxu0 0
        %2011 = vmatprep.subr.bf16.mxu0 0
        %2012 = vmatpush1.bf16.msra.mxu0 0
        %2013 = vmatprep.subr.bf16.mxu0 0
        %2014 = vmatpush1.bf16.msra.mxu0 0
        %2015 = vmatprep.mubr.bf16.mxu0 0
        %2016 = vmatmul.mubr.bf16.gmra.mrb[0].mxu0 %v1978
        %v2017 = vpop.f32.mrb[0].mxu0
        %v2018 = vadd.f32 0.0, %v2017
        %v2019 = vpop.f32.mrb[0].mxu0
        %v2020 = vpop.f32.mrb[0].mxu0
        %v2021 = vpop.f32.mrb[0].mxu0
        %2022 = vdwg.mxu0
        %2023 = vrot.lane.b32.xlu0 %v1355, 104
        %v2024 = vpop.permute.xlu0 %2023
        %2025 = vrot.lane.b32.xlu0 %v1367, 72
        %v2026 = vpop.permute.xlu0 %2025
        %v2028 = vsel %vm1370, %v2024, 0
        %v2031 = vsel %vm1370, %v2026, 0
        %2033 = vmatprep.subr.bf16.mxu0 0
        %2034 = vmatpush1.bf16.xpose.msra.mxu0 %v2031
        %2035 = vmatprep.subr.bf16.mxu0 0
        %2036 = vmatpush1.bf16.xpose.msra.mxu0 0
        %2037 = vmatprep.subr.bf16.mxu0 0
        %2038 = vmatpush1.bf16.xpose.msra.mxu0 0
        %2039 = vmatprep.subr.bf16.mxu0 0
        %2040 = vmatpush1.bf16.xpose.msra.mxu0 0
        %2041 = vmatprep.subr.bf16.mxu0 0
        %2042 = vmatpush1.bf16.xpose.msra.mxu0 0
        %2043 = vmatprep.subr.bf16.mxu0 0
        %2044 = vmatpush1.bf16.xpose.msra.mxu0 0
        %2045 = vmatprep.subr.bf16.mxu0 0
        %2046 = vmatpush1.bf16.xpose.msra.mxu0 0
        %2047 = vmatprep.subr.bf16.mxu0 0
        %2048 = vmatpush1.bf16.xpose.msra.mxu0 0
        %2049 = vmatprep.subr.bf16.mxu0 0
        %2050 = vmatpush1.bf16.xpose.msra.mxu0 0
        %2051 = vmatprep.subr.bf16.mxu0 0
        %2052 = vmatpush1.bf16.xpose.msra.mxu0 0
        %2053 = vmatprep.subr.bf16.mxu0 0
        %2054 = vmatpush1.bf16.xpose.msra.mxu0 0
        %2055 = vmatprep.subr.bf16.mxu0 0
        %2056 = vmatpush1.bf16.xpose.msra.mxu0 0
        %2057 = vmatprep.subr.bf16.mxu0 0
        %2058 = vmatpush1.bf16.xpose.msra.mxu0 0
        %2059 = vmatprep.subr.bf16.mxu0 0
        %2060 = vmatpush1.bf16.xpose.msra.mxu0 0
        %2061 = vmatprep.subr.bf16.mxu0 0
        %2062 = vmatpush1.bf16.xpose.msra.mxu0 0
        %2063 = vmatprep.subr.bf16.mxu0 0
        %2064 = vmatpush1.bf16.xpose.msra.mxu0 0
        %2065 = vmatprep.mubr.bf16.mxu0 0
        %2066 = vmatmul.mubr.bf16.gmra.mrb[0].mxu0 %v2028
        %v2067 = vpop.f32.mrb[0].mxu0
        %v2068 = vadd.f32 0.0, %v2067
        %v2069 = vpop.f32.mrb[0].mxu0
        %v2070 = vpop.f32.mrb[0].mxu0
        %v2071 = vpop.f32.mrb[0].mxu0
        %2072 = vdwg.mxu0
        %2073 = vrot.lane.b32.xlu0 %v1356, 104
        %v2074 = vpop.permute.xlu0 %2073
        %2075 = vrot.lane.b32.xlu0 %v1417, 72
        %v2076 = vpop.permute.xlu0 %2075
        %v2078 = vsel %vm1370, %v2074, 0
        %v2081 = vsel %vm1370, %v2076, 0
        %2083 = vmatprep.subr.bf16.mxu0 0
        %2084 = vmatpush1.bf16.xpose.msra.mxu0 %v2081
        %2085 = vmatprep.subr.bf16.mxu0 0
        %2086 = vmatpush1.bf16.xpose.msra.mxu0 0
        %2087 = vmatprep.subr.bf16.mxu0 0
        %2088 = vmatpush1.bf16.xpose.msra.mxu0 0
        %2089 = vmatprep.subr.bf16.mxu0 0
        %2090 = vmatpush1.bf16.xpose.msra.mxu0 0
        %2091 = vmatprep.subr.bf16.mxu0 0
        %2092 = vmatpush1.bf16.xpose.msra.mxu0 0
        %2093 = vmatprep.subr.bf16.mxu0 0
        %2094 = vmatpush1.bf16.xpose.msra.mxu0 0
        %2095 = vmatprep.subr.bf16.mxu0 0
        %2096 = vmatpush1.bf16.xpose.msra.mxu0 0
        %2097 = vmatprep.subr.bf16.mxu0 0
        %2098 = vmatpush1.bf16.xpose.msra.mxu0 0
        %2099 = vmatprep.subr.bf16.mxu0 0
        %2100 = vmatpush1.bf16.xpose.msra.mxu0 0
        %2101 = vmatprep.subr.bf16.mxu0 0
        %2102 = vmatpush1.bf16.xpose.msra.mxu0 0
        %2103 = vmatprep.subr.bf16.mxu0 0
        %2104 = vmatpush1.bf16.xpose.msra.mxu0 0
        %2105 = vmatprep.subr.bf16.mxu0 0
        %2106 = vmatpush1.bf16.xpose.msra.mxu0 0
        %2107 = vmatprep.subr.bf16.mxu0 0
        %2108 = vmatpush1.bf16.xpose.msra.mxu0 0
        %2109 = vmatprep.subr.bf16.mxu0 0
        %2110 = vmatpush1.bf16.xpose.msra.mxu0 0
        %2111 = vmatprep.subr.bf16.mxu0 0
        %2112 = vmatpush1.bf16.xpose.msra.mxu0 0
        %2113 = vmatprep.subr.bf16.mxu0 0
        %2114 = vmatpush1.bf16.xpose.msra.mxu0 0
        %2115 = vmatprep.mubr.bf16.mxu0 0
        %2116 = vmatmul.mubr.bf16.gmra.mrb[0].mxu0 %v2078
        %v2117 = vpop.f32.mrb[0].mxu0
        %v2118 = vadd.f32 0.0, %v2117
        %v2119 = vpop.f32.mrb[0].mxu0
        %v2120 = vpop.f32.mrb[0].mxu0
        %v2121 = vpop.f32.mrb[0].mxu0
        %2122 = vdwg.mxu0
        %v2123 = vsel %vm1370, %v2068, -inf
        %2124 = vmax.xlane.f32.xlu0 %v2123
        %v2125 = vpop.xlane.xlu0 %2124
        %v2126 = vsel %vm1370, %v2118, -inf
        %2127 = vmax.xlane.f32.xlu0 %v2126
        %v2128 = vpop.xlane.xlu0 %2127
        %v2129 = vsub.f32 %v2068, %v2125
        %v2130 = vsub.f32 %v2118, %v2128
        %v2131 = vmul.f32 %v2129, 1.442695
        %v2132 = vpow.pop %v2131
        %v2133 = vmul.f32 %v2130, 1.442695
        %v2134 = vpow.pop %v2133
        %v2135 = vsel %vm1370, %v2132, 0.0
        %2136 = vadd.xlane.f32.xlu0 %v2135
        %v2137 = vpop.xlane.xlu0 %2136
        %v2138 = vsel %vm1370, %v2134, 0.0
        %2139 = vadd.xlane.f32.xlu0 %v2138
        %v2140 = vpop.xlane.xlu0 %2139
        %v2141 = vrcp.pop %v2137
        %v2142 = vrcp.pop %v2140
        %v2143 = vmul.f32 %v2132, %v2141
        %v2144 = vmul.f32 %v2134, %v2142
        %v2145 = vpack.c.bf16 %v2143, %v2143
        %v2146 = vpack.c.bf16 %v2144, %v2144
        %2147 = vrot.lane.b32.xlu0 %v1365, 104
        %v2148 = vpop.permute.xlu0 %2147
        %v2150 = vsel %vm1370, %v2145, 0
        %v2153 = vsel %vm1493, %v2148, 0
        %2155 = vmatprep.subr.bf16.mxu0 0
        %2156 = vmatpush1.bf16.msra.mxu0 %v2153
        %2157 = vmatprep.subr.bf16.mxu0 0
        %2158 = vmatpush1.bf16.msra.mxu0 0
        %2159 = vmatprep.subr.bf16.mxu0 0
        %2160 = vmatpush1.bf16.msra.mxu0 0
        %2161 = vmatprep.subr.bf16.mxu0 0
        %2162 = vmatpush1.bf16.msra.mxu0 0
        %2163 = vmatprep.subr.bf16.mxu0 0
        %2164 = vmatpush1.bf16.msra.mxu0 0
        %2165 = vmatprep.subr.bf16.mxu0 0
        %2166 = vmatpush1.bf16.msra.mxu0 0
        %2167 = vmatprep.subr.bf16.mxu0 0
        %2168 = vmatpush1.bf16.msra.mxu0 0
        %2169 = vmatprep.subr.bf16.mxu0 0
        %2170 = vmatpush1.bf16.msra.mxu0 0
        %2171 = vmatprep.subr.bf16.mxu0 0
        %2172 = vmatpush1.bf16.msra.mxu0 0
        %2173 = vmatprep.subr.bf16.mxu0 0
        %2174 = vmatpush1.bf16.msra.mxu0 0
        %2175 = vmatprep.subr.bf16.mxu0 0
        %2176 = vmatpush1.bf16.msra.mxu0 0
        %2177 = vmatprep.subr.bf16.mxu0 0
        %2178 = vmatpush1.bf16.msra.mxu0 0
        %2179 = vmatprep.subr.bf16.mxu0 0
        %2180 = vmatpush1.bf16.msra.mxu0 0
        %2181 = vmatprep.subr.bf16.mxu0 0
        %2182 = vmatpush1.bf16.msra.mxu0 0
        %2183 = vmatprep.subr.bf16.mxu0 0
        %2184 = vmatpush1.bf16.msra.mxu0 0
        %2185 = vmatprep.subr.bf16.mxu0 0
        %2186 = vmatpush1.bf16.msra.mxu0 0
        %2187 = vmatprep.mubr.bf16.mxu0 0
        %2188 = vmatmul.mubr.bf16.gmra.mrb[0].mxu0 %v2150
        %v2189 = vpop.f32.mrb[0].mxu0
        %v2190 = vadd.f32 0.0, %v2189
        %v2191 = vpop.f32.mrb[0].mxu0
        %v2192 = vpop.f32.mrb[0].mxu0
        %v2193 = vpop.f32.mrb[0].mxu0
        %2194 = vdwg.mxu0
        %2195 = vrot.lane.b32.xlu0 %v1366, 104
        %v2196 = vpop.permute.xlu0 %2195
        %v2198 = vsel %vm1370, %v2146, 0
        %v2201 = vsel %vm1493, %v2196, 0
        %2203 = vmatprep.subr.bf16.mxu0 0
        %2204 = vmatpush1.bf16.msra.mxu0 %v2201
        %2205 = vmatprep.subr.bf16.mxu0 0
        %2206 = vmatpush1.bf16.msra.mxu0 0
        %2207 = vmatprep.subr.bf16.mxu0 0
        %2208 = vmatpush1.bf16.msra.mxu0 0
        %2209 = vmatprep.subr.bf16.mxu0 0
        %2210 = vmatpush1.bf16.msra.mxu0 0
        %2211 = vmatprep.subr.bf16.mxu0 0
        %2212 = vmatpush1.bf16.msra.mxu0 0
        %2213 = vmatprep.subr.bf16.mxu0 0
        %2214 = vmatpush1.bf16.msra.mxu0 0
        %2215 = vmatprep.subr.bf16.mxu0 0
        %2216 = vmatpush1.bf16.msra.mxu0 0
        %2217 = vmatprep.subr.bf16.mxu0 0
        %2218 = vmatpush1.bf16.msra.mxu0 0
        %2219 = vmatprep.subr.bf16.mxu0 0
        %2220 = vmatpush1.bf16.msra.mxu0 0
        %2221 = vmatprep.subr.bf16.mxu0 0
        %2222 = vmatpush1.bf16.msra.mxu0 0
        %2223 = vmatprep.subr.bf16.mxu0 0
        %2224 = vmatpush1.bf16.msra.mxu0 0
        %2225 = vmatprep.subr.bf16.mxu0 0
        %2226 = vmatpush1.bf16.msra.mxu0 0
        %2227 = vmatprep.subr.bf16.mxu0 0
        %2228 = vmatpush1.bf16.msra.mxu0 0
        %2229 = vmatprep.subr.bf16.mxu0 0
        %2230 = vmatpush1.bf16.msra.mxu0 0
        %2231 = vmatprep.subr.bf16.mxu0 0
        %2232 = vmatpush1.bf16.msra.mxu0 0
        %2233 = vmatprep.subr.bf16.mxu0 0
        %2234 = vmatpush1.bf16.msra.mxu0 0
        %2235 = vmatprep.mubr.bf16.mxu0 0
        %2236 = vmatmul.mubr.bf16.gmra.mrb[0].mxu0 %v2198
        %v2237 = vpop.f32.mrb[0].mxu0
        %v2238 = vadd.f32 0.0, %v2237
        %v2239 = vpop.f32.mrb[0].mxu0
        %v2240 = vpop.f32.mrb[0].mxu0
        %v2241 = vpop.f32.mrb[0].mxu0
        %2242 = vdwg.mxu0
        %2245 = vrot.lane.b32.xlu0 %v1750, 8
        %v2246 = vpop.permute.xlu0 %2245
        %2247 = vrot.lane.b32.xlu0 %v1798, 8
        %v2248 = vpop.permute.xlu0 %2247
        %2253 = vrot.lane.b32.xlu0 %v1970, 16
        %v2254 = vpop.permute.xlu0 %2253
        %2255 = vrot.lane.b32.xlu0 %v2018, 16
        %v2256 = vpop.permute.xlu0 %2255
        %2261 = vrot.lane.b32.xlu0 %v2190, 24
        %v2262 = vpop.permute.xlu0 %2261
        %2263 = vrot.lane.b32.xlu0 %v2238, 24
        %v2264 = vpop.permute.xlu0 %2263
        %v2267 = vsel %vm1370, %v1532, %v2246
        %v2268 = vsel %vm1370, %v1578, %v2248
        %vm2269 = vcmask 130048
        %v2270 = vsel %vm2269, %v2267, %v2254
        %v2271 = vsel %vm2269, %v2268, %v2256
        %vm2272 = vcmask 195584
        %v2273 = vsel %vm2272, %v2270, %v2262
        %v2274 = vsel %vm2272, %v2271, %v2264
        %v2275 = vpack.c.bf16 %v2274, %v2273
        %v2276 = vld [vmem:[%s639] sm:$0xf]
        %v2277 = vld [vmem:[%s639 + $0x4] sm:$0xf]
        %v2278 = vld [vmem:[%s639 + $0x8] sm:$0xf]
        %v2279 = vld [vmem:[%s639 + $0xc] sm:$0xf]
        %v2280 = vlaneseq
        %v2281 = vshrl.u32 %v2280, 7
        %v2282 = vsub.s32 0, %v2281
        %v2283 = vrot.slane %v1216, %v2282
        %v2288 = vunpack.c.l.b16 %v2276
        %v2289 = vunpack.c.l.b16 %v2277
        %v2290 = vunpack.c.l.b16 %v2278
        %v2291 = vunpack.c.l.b16 %v2279
        %v2292 = vpack.c.b16 %v2289, %v2288
        %v2293 = vpack.c.b16 %v2291, %v2290
        %v2297 = vsel %vm1233, %v2275, 0
        %2299 = vmatprep.subr.bf16.mxu0 0
        %2300 = vmatpush1.bf16.msra.mxu0 %v2292
        %2301 = vmatprep.subr.bf16.mxu0 0
        %2302 = vmatpush1.bf16.msra.mxu0 %v2293
        %2303 = vmatprep.subr.bf16.mxu0 0
        %2304 = vmatpush1.bf16.msra.mxu0 0
        %2305 = vmatprep.subr.bf16.mxu0 0
        %2306 = vmatpush1.bf16.msra.mxu0 0
        %2307 = vmatprep.subr.bf16.mxu0 0
        %2308 = vmatpush1.bf16.msra.mxu0 0
        %2309 = vmatprep.subr.bf16.mxu0 0
        %2310 = vmatpush1.bf16.msra.mxu0 0
        %2311 = vmatprep.subr.bf16.mxu0 0
        %2312 = vmatpush1.bf16.msra.mxu0 0
        %2313 = vmatprep.subr.bf16.mxu0 0
        %2314 = vmatpush1.bf16.msra.mxu0 0
        %2315 = vmatprep.subr.bf16.mxu0 0
        %2316 = vmatpush1.bf16.msra.mxu0 0
        %2317 = vmatprep.subr.bf16.mxu0 0
        %2318 = vmatpush1.bf16.msra.mxu0 0
        %2319 = vmatprep.subr.bf16.mxu0 0
        %2320 = vmatpush1.bf16.msra.mxu0 0
        %2321 = vmatprep.subr.bf16.mxu0 0
        %2322 = vmatpush1.bf16.msra.mxu0 0
        %2323 = vmatprep.subr.bf16.mxu0 0
        %2324 = vmatpush1.bf16.msra.mxu0 0
        %2325 = vmatprep.subr.bf16.mxu0 0
        %2326 = vmatpush1.bf16.msra.mxu0 0
        %2327 = vmatprep.subr.bf16.mxu0 0
        %2328 = vmatpush1.bf16.msra.mxu0 0
        %2329 = vmatprep.subr.bf16.mxu0 0
        %2330 = vmatpush1.bf16.msra.mxu0 0
        %2331 = vmatprep.mubr.bf16.mxu0 0
        %2332 = vmatmul.mubr.bf16.gmra.mrb[0].mxu0 %v2297
        %v2333 = vpop.f32.mrb[0].mxu0
        %v2334 = vadd.f32 %v2283, %v2333
        %v2335 = vpop.f32.mrb[0].mxu0
        %v2336 = vpop.f32.mrb[0].mxu0
        %v2337 = vadd.f32 %v2283, %v2336
        %v2338 = vpop.f32.mrb[0].mxu0
        %2339 = vdwg.mxu0
        %v2340 = vadd.f32 %v1208, %v2334
        %v2341 = vadd.f32 %v1209, %v2337
        %v2342 = vld [vmem:[%s654 + $0x3] sm:$0x1]
        %v2343 = vld [vmem:[%s654 + $0x4] sm:$0x1]
        %v2344 = vsel %vm1233, %v2340, 0.0
        %2345 = vadd.xlane.f32.xlu0 %v2344
        %v2346 = vpop.xlane.xlu0 %2345
        %v2347 = vsel %vm1233, %v2341, 0.0
        %2348 = vadd.xlane.f32.xlu0 %v2347
        %v2349 = vpop.xlane.xlu0 %2348
        %v2350 = vrcp.pop 32.0
        %v2351 = vmul.f32 %v2346, %v2350
        %v2352 = vmul.f32 %v2349, %v2350
        %v2353 = vsub.f32 %v2340, %v2351
        %v2354 = vsub.f32 %v2341, %v2352
        %v2355 = vmul.f32 %v2353, %v2353
        %v2356 = vmul.f32 %v2354, %v2354
        %v2357 = vsel %vm1233, %v2355, 0.0
        %2358 = vadd.xlane.f32.xlu0 %v2357
        %v2359 = vpop.xlane.xlu0 %2358
        %v2360 = vsel %vm1233, %v2356, 0.0
        %2361 = vadd.xlane.f32.xlu0 %v2360
        %v2362 = vpop.xlane.xlu0 %2361
        %v2363 = vmul.f32 %v2359, %v2350
        %v2364 = vmul.f32 %v2362, %v2350
        %v2365 = vadd.f32 %v2363, 1e-05
        %v2366 = vadd.f32 %v2364, 1e-05
        %v2367 = vrsqrt.pop %v2365
        %v2368 = vrsqrt.pop %v2366
        %v2369 = vmul.f32 %v2353, %v2367
        %v2370 = vmul.f32 %v2354, %v2368
        %v2371 = vlaneseq
        %v2372 = vshrl.u32 %v2371, 7
        %v2373 = vsub.s32 0, %v2372
        %v2374 = vrot.slane %v2342, %v2373
        %v2375 = vmul.f32 %v2369, %v2374
        %v2376 = vmul.f32 %v2370, %v2374
        %v2377 = vlaneseq
        %v2378 = vshrl.u32 %v2377, 7
        %v2379 = vsub.s32 0, %v2378
        %v2380 = vrot.slane %v2343, %v2379
        %v2381 = vadd.f32 %v2375, %v2380
        %v2382 = vadd.f32 %v2376, %v2380
        %v2383 = vadd.f32 %v2381, %v1210
        %v2384 = vadd.f32 %v2382, %v1211
        %v2385 = vpack.c.bf16 %v2384, %v2383
        %v2386 = vld [vmem:[#allocation4] sm:$0xff]
        %v2387 = vld [vmem:[#allocation4 + $0x8] sm:$0xff]
        %v2388 = vld [vmem:[#allocation3] sm:$0xff]
        %v2389 = vld [vmem:[#allocation3 + $0x8] sm:$0xff]
        %v2390 = vld [vmem:[%s654 + $0x1] sm:$0x1]
        %s2391 = scalar_lea.vmem %s634, 16
        %v2392 = vld [vmem:[%s2391] sm:$0xf]
        %v2393 = vld [vmem:[%s2391 + $0x4] sm:$0xf]
        %v2394 = vld [vmem:[%s2391 + $0x8] sm:$0xf]
        %v2395 = vld [vmem:[%s2391 + $0xc] sm:$0xf]
        %s2396 = scalar_lea.vmem %s644, 4
        %v2397 = vld [vmem:[%s2396] sm:$0x1]
        %v2398 = vlaneseq
        %v2399 = vshrl.u32 %v2398, 7
        %v2400 = vsub.s32 0, %v2399
        %v2401 = vrot.slane %v2397, %v2400
        %v2406 = vunpack.c.l.b16 %v2392
        %v2407 = vunpack.c.l.b16 %v2393
        %v2408 = vunpack.c.l.b16 %v2394
        %v2409 = vunpack.c.l.b16 %v2395
        %v2410 = vpack.c.b16 %v2407, %v2406
        %v2411 = vpack.c.b16 %v2409, %v2408
        %v2415 = vsel %vm1233, %v2385, 0
        %2417 = vmatprep.subr.bf16.mxu0 0
        %2418 = vmatpush1.bf16.msra.mxu0 %v2410
        %2419 = vmatprep.subr.bf16.mxu0 0
        %2420 = vmatpush1.bf16.msra.mxu0 %v2411
        %2421 = vmatprep.subr.bf16.mxu0 0
        %2422 = vmatpush1.bf16.msra.mxu0 0
        %2423 = vmatprep.subr.bf16.mxu0 0
        %2424 = vmatpush1.bf16.msra.mxu0 0
        %2425 = vmatprep.subr.bf16.mxu0 0
        %2426 = vmatpush1.bf16.msra.mxu0 0
        %2427 = vmatprep.subr.bf16.mxu0 0
        %2428 = vmatpush1.bf16.msra.mxu0 0
        %2429 = vmatprep.subr.bf16.mxu0 0
        %2430 = vmatpush1.bf16.msra.mxu0 0
        %2431 = vmatprep.subr.bf16.mxu0 0
        %2432 = vmatpush1.bf16.msra.mxu0 0
        %2433 = vmatprep.subr.bf16.mxu0 0
        %2434 = vmatpush1.bf16.msra.mxu0 0
        %2435 = vmatprep.subr.bf16.mxu0 0
        %2436 = vmatpush1.bf16.msra.mxu0 0
        %2437 = vmatprep.subr.bf16.mxu0 0
        %2438 = vmatpush1.bf16.msra.mxu0 0
        %2439 = vmatprep.subr.bf16.mxu0 0
        %2440 = vmatpush1.bf16.msra.mxu0 0
        %2441 = vmatprep.subr.bf16.mxu0 0
        %2442 = vmatpush1.bf16.msra.mxu0 0
        %2443 = vmatprep.subr.bf16.mxu0 0
        %2444 = vmatpush1.bf16.msra.mxu0 0
        %2445 = vmatprep.subr.bf16.mxu0 0
        %2446 = vmatpush1.bf16.msra.mxu0 0
        %2447 = vmatprep.subr.bf16.mxu0 0
        %2448 = vmatpush1.bf16.msra.mxu0 0
        %2449 = vmatprep.mubr.bf16.mxu0 0
        %2450 = vmatmul.mubr.bf16.gmra.mrb[0].mxu0 %v2415
        %v2451 = vpop.f32.mrb[0].mxu0
        %v2452 = vadd.f32 %v2401, %v2451
        %v2453 = vpop.f32.mrb[0].mxu0
        %v2454 = vpop.f32.mrb[0].mxu0
        %v2455 = vadd.f32 %v2401, %v2454
        %v2456 = vpop.f32.mrb[0].mxu0
        %2457 = vdwg.mxu0
        %v2458 = vld [vmem:[%s2396 + $0x1] sm:$0x1]
        %v2459 = vlaneseq
        %v2460 = vshrl.u32 %v2459, 7
        %v2461 = vsub.s32 0, %v2460
        %v2462 = vrot.slane %v2458, %v2461
        %2463 = vrot.lane.b32.xlu0 %v2410, 96
        %v2464 = vpop.permute.xlu0 %2463
        %2465 = vrot.lane.b32.xlu0 %v2411, 96
        %v2466 = vpop.permute.xlu0 %2465
        %v2470 = vsel %vm1233, %v2386, 0
        %v2473 = vsel %vm1233, %v2387, 0
        %2475 = vmatprep.subr.bf16.mxu0 0
        %2476 = vmatpush1.bf16.msra.mxu0 %v2464
        %2477 = vmatprep.subr.bf16.mxu0 0
        %2478 = vmatpush1.bf16.msra.mxu0 %v2466
        %2479 = vmatprep.subr.bf16.mxu0 0
        %2480 = vmatpush1.bf16.msra.mxu0 0
        %2481 = vmatprep.subr.bf16.mxu0 0
        %2482 = vmatpush1.bf16.msra.mxu0 0
        %2483 = vmatprep.subr.bf16.mxu0 0
        %2484 = vmatpush1.bf16.msra.mxu0 0
        %2485 = vmatprep.subr.bf16.mxu0 0
        %2486 = vmatpush1.bf16.msra.mxu0 0
        %2487 = vmatprep.subr.bf16.mxu0 0
        %2488 = vmatpush1.bf16.msra.mxu0 0
        %2489 = vmatprep.subr.bf16.mxu0 0
        %2490 = vmatpush1.bf16.msra.mxu0 0
        %2491 = vmatprep.subr.bf16.mxu0 0
        %2492 = vmatpush1.bf16.msra.mxu0 0
        %2493 = vmatprep.subr.bf16.mxu0 0
        %2494 = vmatpush1.bf16.msra.mxu0 0
        %2495 = vmatprep.subr.bf16.mxu0 0
        %2496 = vmatpush1.bf16.msra.mxu0 0
        %2497 = vmatprep.subr.bf16.mxu0 0
        %2498 = vmatpush1.bf16.msra.mxu0 0
        %2499 = vmatprep.subr.bf16.mxu0 0
        %2500 = vmatpush1.bf16.msra.mxu0 0
        %2501 = vmatprep.subr.bf16.mxu0 0
        %2502 = vmatpush1.bf16.msra.mxu0 0
        %2503 = vmatprep.subr.bf16.mxu0 0
        %2504 = vmatpush1.bf16.msra.mxu0 0
        %2505 = vmatprep.subr.bf16.mxu0 0
        %2506 = vmatpush1.bf16.msra.mxu0 0
        %2507 = vmatprep.mubr.bf16.mxu0 0
        %2508 = vmatmul.mubr.bf16.gmra.mrb[0].mxu0 %v2470
        %v2509 = vpop.f32.mrb[0].mxu0
        %v2510 = vadd.f32 %v2462, %v2509
        %v2511 = vpop.f32.mrb[0].mxu0
        %v2512 = vpop.f32.mrb[0].mxu0
        %v2513 = vadd.f32 %v2462, %v2512
        %v2514 = vpop.f32.mrb[0].mxu0
        %2515 = vmatprep.mubr.bf16.mxu0 0
        %2516 = vmatmul.mubr.bf16.gmra.mrb[0].mxu0 %v2473
        %v2517 = vpop.f32.mrb[0].mxu0
        %v2518 = vadd.f32 %v2462, %v2517
        %v2519 = vpop.f32.mrb[0].mxu0
        %v2520 = vpop.f32.mrb[0].mxu0
        %v2521 = vadd.f32 %v2462, %v2520
        %v2522 = vpop.f32.mrb[0].mxu0
        %2523 = vdwg.mxu0
        %v2524 = vld [vmem:[%s2396 + $0x2] sm:$0x1]
        %v2525 = vlaneseq
        %v2526 = vshrl.u32 %v2525, 7
        %v2527 = vsub.s32 0, %v2526
        %v2528 = vrot.slane %v2524, %v2527
        %2529 = vrot.lane.b32.xlu0 %v2410, 64
        %v2530 = vpop.permute.xlu0 %2529
        %2531 = vrot.lane.b32.xlu0 %v2411, 64
        %v2532 = vpop.permute.xlu0 %2531
        %v2536 = vsel %vm1233, %v2388, 0
        %v2539 = vsel %vm1233, %v2389, 0
        %2541 = vmatprep.subr.bf16.mxu0 0
        %2542 = vmatpush1.bf16.msra.mxu0 %v2530
        %2543 = vmatprep.subr.bf16.mxu0 0
        %2544 = vmatpush1.bf16.msra.mxu0 %v2532
        %2545 = vmatprep.subr.bf16.mxu0 0
        %2546 = vmatpush1.bf16.msra.mxu0 0
        %2547 = vmatprep.subr.bf16.mxu0 0
        %2548 = vmatpush1.bf16.msra.mxu0 0
        %2549 = vmatprep.subr.bf16.mxu0 0
        %2550 = vmatpush1.bf16.msra.mxu0 0
        %2551 = vmatprep.subr.bf16.mxu0 0
        %2552 = vmatpush1.bf16.msra.mxu0 0
        %2553 = vmatprep.subr.bf16.mxu0 0
        %2554 = vmatpush1.bf16.msra.mxu0 0
        %2555 = vmatprep.subr.bf16.mxu0 0
        %2556 = vmatpush1.bf16.msra.mxu0 0
        %2557 = vmatprep.subr.bf16.mxu0 0
        %2558 = vmatpush1.bf16.msra.mxu0 0
        %2559 = vmatprep.subr.bf16.mxu0 0
        %2560 = vmatpush1.bf16.msra.mxu0 0
        %2561 = vmatprep.subr.bf16.mxu0 0
        %2562 = vmatpush1.bf16.msra.mxu0 0
        %2563 = vmatprep.subr.bf16.mxu0 0
        %2564 = vmatpush1.bf16.msra.mxu0 0
        %2565 = vmatprep.subr.bf16.mxu0 0
        %2566 = vmatpush1.bf16.msra.mxu0 0
        %2567 = vmatprep.subr.bf16.mxu0 0
        %2568 = vmatpush1.bf16.msra.mxu0 0
        %2569 = vmatprep.subr.bf16.mxu0 0
        %2570 = vmatpush1.bf16.msra.mxu0 0
        %2571 = vmatprep.subr.bf16.mxu0 0
        %2572 = vmatpush1.bf16.msra.mxu0 0
        %2573 = vmatprep.mubr.bf16.mxu0 0
        %2574 = vmatmul.mubr.bf16.gmra.mrb[0].mxu0 %v2536
        %v2575 = vpop.f32.mrb[0].mxu0
        %v2576 = vadd.f32 %v2528, %v2575
        %v2577 = vpop.f32.mrb[0].mxu0
        %v2578 = vpop.f32.mrb[0].mxu0
        %v2579 = vadd.f32 %v2528, %v2578
        %v2580 = vpop.f32.mrb[0].mxu0
        %2581 = vmatprep.mubr.bf16.mxu0 0
        %2582 = vmatmul.mubr.bf16.gmra.mrb[0].mxu0 %v2539
        %v2583 = vpop.f32.mrb[0].mxu0
        %v2584 = vadd.f32 %v2528, %v2583
        %v2585 = vpop.f32.mrb[0].mxu0
        %v2586 = vpop.f32.mrb[0].mxu0
        %v2587 = vadd.f32 %v2528, %v2586
        %v2588 = vpop.f32.mrb[0].mxu0
        %2589 = vdwg.mxu0
        %v2590 = vpack.c.bf16 %v2455, %v2452
        %v2592 = vunpack.c.l.b16 %v2590
        %v2593 = vunpack.c.h.b16 %v2590
        %v2594 = vpack.c.b16 %v2592, %v2592
        %v2595 = vpack.c.b16 %v2593, %v2593
        %v2596 = vpack.c.bf16 %v2513, %v2510
        %v2597 = vpack.c.bf16 %v2521, %v2518
        %v2598 = vpack.c.bf16 %v2579, %v2576
        %v2599 = vpack.c.bf16 %v2587, %v2584
        %v2601 = vsel %vm1370, %v2594, 0
        %v2604 = vsel %vm1370, %v2596, 0
        %2606 = vmatprep.subr.bf16.mxu0 0
        %2607 = vmatpush1.bf16.xpose.msra.mxu0 %v2604
        %2608 = vmatprep.subr.bf16.mxu0 0
        %2609 = vmatpush1.bf16.xpose.msra.mxu0 0
        %2610 = vmatprep.subr.bf16.mxu0 0
        %2611 = vmatpush1.bf16.xpose.msra.mxu0 0
        %2612 = vmatprep.subr.bf16.mxu0 0
        %2613 = vmatpush1.bf16.xpose.msra.mxu0 0
        %2614 = vmatprep.subr.bf16.mxu0 0
        %2615 = vmatpush1.bf16.xpose.msra.mxu0 0
        %2616 = vmatprep.subr.bf16.mxu0 0
        %2617 = vmatpush1.bf16.xpose.msra.mxu0 0
        %2618 = vmatprep.subr.bf16.mxu0 0
        %2619 = vmatpush1.bf16.xpose.msra.mxu0 0
        %2620 = vmatprep.subr.bf16.mxu0 0
        %2621 = vmatpush1.bf16.xpose.msra.mxu0 0
        %2622 = vmatprep.subr.bf16.mxu0 0
        %2623 = vmatpush1.bf16.xpose.msra.mxu0 0
        %2624 = vmatprep.subr.bf16.mxu0 0
        %2625 = vmatpush1.bf16.xpose.msra.mxu0 0
        %2626 = vmatprep.subr.bf16.mxu0 0
        %2627 = vmatpush1.bf16.xpose.msra.mxu0 0
        %2628 = vmatprep.subr.bf16.mxu0 0
        %2629 = vmatpush1.bf16.xpose.msra.mxu0 0
        %2630 = vmatprep.subr.bf16.mxu0 0
        %2631 = vmatpush1.bf16.xpose.msra.mxu0 0
        %2632 = vmatprep.subr.bf16.mxu0 0
        %2633 = vmatpush1.bf16.xpose.msra.mxu0 0
        %2634 = vmatprep.subr.bf16.mxu0 0
        %2635 = vmatpush1.bf16.xpose.msra.mxu0 0
        %2636 = vmatprep.subr.bf16.mxu0 0
        %2637 = vmatpush1.bf16.xpose.msra.mxu0 0
        %2638 = vmatprep.mubr.bf16.mxu0 0
        %2639 = vmatmul.mubr.bf16.gmra.mrb[0].mxu0 %v2601
        %v2640 = vpop.f32.mrb[0].mxu0
        %v2641 = vadd.f32 0.0, %v2640
        %v2642 = vpop.f32.mrb[0].mxu0
        %v2643 = vpop.f32.mrb[0].mxu0
        %v2644 = vpop.f32.mrb[0].mxu0
        %2645 = vdwg.mxu0
        %v2647 = vsel %vm1370, %v2595, 0
        %v2650 = vsel %vm1370, %v2597, 0
        %2652 = vmatprep.subr.bf16.mxu0 0
        %2653 = vmatpush1.bf16.xpose.msra.mxu0 %v2650
        %2654 = vmatprep.subr.bf16.mxu0 0
        %2655 = vmatpush1.bf16.xpose.msra.mxu0 0
        %2656 = vmatprep.subr.bf16.mxu0 0
        %2657 = vmatpush1.bf16.xpose.msra.mxu0 0
        %2658 = vmatprep.subr.bf16.mxu0 0
        %2659 = vmatpush1.bf16.xpose.msra.mxu0 0
        %2660 = vmatprep.subr.bf16.mxu0 0
        %2661 = vmatpush1.bf16.xpose.msra.mxu0 0
        %2662 = vmatprep.subr.bf16.mxu0 0
        %2663 = vmatpush1.bf16.xpose.msra.mxu0 0
        %2664 = vmatprep.subr.bf16.mxu0 0
        %2665 = vmatpush1.bf16.xpose.msra.mxu0 0
        %2666 = vmatprep.subr.bf16.mxu0 0
        %2667 = vmatpush1.bf16.xpose.msra.mxu0 0
        %2668 = vmatprep.subr.bf16.mxu0 0
        %2669 = vmatpush1.bf16.xpose.msra.mxu0 0
        %2670 = vmatprep.subr.bf16.mxu0 0
        %2671 = vmatpush1.bf16.xpose.msra.mxu0 0
        %2672 = vmatprep.subr.bf16.mxu0 0
        %2673 = vmatpush1.bf16.xpose.msra.mxu0 0
        %2674 = vmatprep.subr.bf16.mxu0 0
        %2675 = vmatpush1.bf16.xpose.msra.mxu0 0
        %2676 = vmatprep.subr.bf16.mxu0 0
        %2677 = vmatpush1.bf16.xpose.msra.mxu0 0
        %2678 = vmatprep.subr.bf16.mxu0 0
        %2679 = vmatpush1.bf16.xpose.msra.mxu0 0
        %2680 = vmatprep.subr.bf16.mxu0 0
        %2681 = vmatpush1.bf16.xpose.msra.mxu0 0
        %2682 = vmatprep.subr.bf16.mxu0 0
        %2683 = vmatpush1.bf16.xpose.msra.mxu0 0
        %2684 = vmatprep.mubr.bf16.mxu0 0
        %2685 = vmatmul.mubr.bf16.gmra.mrb[0].mxu0 %v2647
        %v2686 = vpop.f32.mrb[0].mxu0
        %v2687 = vadd.f32 0.0, %v2686
        %v2688 = vpop.f32.mrb[0].mxu0
        %v2689 = vpop.f32.mrb[0].mxu0
        %v2690 = vpop.f32.mrb[0].mxu0
        %2691 = vdwg.mxu0
        %v2692 = vsel %vm2269, %v2641, -inf
        %2693 = vmax.xlane.f32.xlu0 %v2692
        %v2694 = vpop.xlane.xlu0 %2693
        %v2695 = vsel %vm2269, %v2687, -inf
        %2696 = vmax.xlane.f32.xlu0 %v2695
        %v2697 = vpop.xlane.xlu0 %2696
        %v2698 = vsub.f32 %v2641, %v2694
        %v2699 = vsub.f32 %v2687, %v2697
        %v2700 = vmul.f32 %v2698, 1.442695
        %v2701 = vpow.pop %v2700
        %v2702 = vmul.f32 %v2699, 1.442695
        %v2703 = vpow.pop %v2702
        %v2704 = vsel %vm2269, %v2701, 0.0
        %2705 = vadd.xlane.f32.xlu0 %v2704
        %v2706 = vpop.xlane.xlu0 %2705
        %v2707 = vsel %vm2269, %v2703, 0.0
        %2708 = vadd.xlane.f32.xlu0 %v2707
        %v2709 = vpop.xlane.xlu0 %2708
        %v2710 = vrcp.pop %v2706
        %v2711 = vrcp.pop %v2709
        %v2712 = vmul.f32 %v2701, %v2710
        %v2713 = vmul.f32 %v2703, %v2711
        %v2714 = vpack.c.bf16 %v2712, %v2712
        %v2715 = vpack.c.bf16 %v2713, %v2713
        %v2717 = vsel %vm2269, %v2714, 0
        %2719 = vmatprep.subr.bf16.mxu0 0
        %2720 = vmatpush1.bf16.msra.mxu0 %v2598
        %2721 = vmatprep.subr.bf16.mxu0 0
        %2722 = vmatpush1.bf16.msra.mxu0 0
        %2723 = vmatprep.subr.bf16.mxu0 0
        %2724 = vmatpush1.bf16.msra.mxu0 0
        %2725 = vmatprep.subr.bf16.mxu0 0
        %2726 = vmatpush1.bf16.msra.mxu0 0
        %2727 = vmatprep.subr.bf16.mxu0 0
        %2728 = vmatpush1.bf16.msra.mxu0 0
        %2729 = vmatprep.subr.bf16.mxu0 0
        %2730 = vmatpush1.bf16.msra.mxu0 0
        %2731 = vmatprep.subr.bf16.mxu0 0
        %2732 = vmatpush1.bf16.msra.mxu0 0
        %2733 = vmatprep.subr.bf16.mxu0 0
        %2734 = vmatpush1.bf16.msra.mxu0 0
        %2735 = vmatprep.subr.bf16.mxu0 0
        %2736 = vmatpush1.bf16.msra.mxu0 0
        %2737 = vmatprep.subr.bf16.mxu0 0
        %2738 = vmatpush1.bf16.msra.mxu0 0
        %2739 = vmatprep.subr.bf16.mxu0 0
        %2740 = vmatpush1.bf16.msra.mxu0 0
        %2741 = vmatprep.subr.bf16.mxu0 0
        %2742 = vmatpush1.bf16.msra.mxu0 0
        %2743 = vmatprep.subr.bf16.mxu0 0
        %2744 = vmatpush1.bf16.msra.mxu0 0
        %2745 = vmatprep.subr.bf16.mxu0 0
        %2746 = vmatpush1.bf16.msra.mxu0 0
        %2747 = vmatprep.subr.bf16.mxu0 0
        %2748 = vmatpush1.bf16.msra.mxu0 0
        %2749 = vmatprep.subr.bf16.mxu0 0
        %2750 = vmatpush1.bf16.msra.mxu0 0
        %2751 = vmatprep.mubr.bf16.mxu0 0
        %2752 = vmatmul.mubr.bf16.gmra.mrb[0].mxu0 %v2717
        %v2753 = vpop.f32.mrb[0].mxu0
        %v2754 = vadd.f32 0.0, %v2753
        %v2755 = vpop.f32.mrb[0].mxu0
        %v2756 = vpop.f32.mrb[0].mxu0
        %v2757 = vpop.f32.mrb[0].mxu0
        %2758 = vdwg.mxu0
        %v2760 = vsel %vm2269, %v2715, 0
        %2762 = vmatprep.subr.bf16.mxu0 0
        %2763 = vmatpush1.bf16.msra.mxu0 %v2599
        %2764 = vmatprep.subr.bf16.mxu0 0
        %2765 = vmatpush1.bf16.msra.mxu0 0
        %2766 = vmatprep.subr.bf16.mxu0 0
        %2767 = vmatpush1.bf16.msra.mxu0 0
        %2768 = vmatprep.subr.bf16.mxu0 0
        %2769 = vmatpush1.bf16.msra.mxu0 0
        %2770 = vmatprep.subr.bf16.mxu0 0
        %2771 = vmatpush1.bf16.msra.mxu0 0
        %2772 = vmatprep.subr.bf16.mxu0 0
        %2773 = vmatpush1.bf16.msra.mxu0 0
        %2774 = vmatprep.subr.bf16.mxu0 0
        %2775 = vmatpush1.bf16.msra.mxu0 0
        %2776 = vmatprep.subr.bf16.mxu0 0
        %2777 = vmatpush1.bf16.msra.mxu0 0
        %2778 = vmatprep.subr.bf16.mxu0 0
        %2779 = vmatpush1.bf16.msra.mxu0 0
        %2780 = vmatprep.subr.bf16.mxu0 0
        %2781 = vmatpush1.bf16.msra.mxu0 0
        %2782 = vmatprep.subr.bf16.mxu0 0
        %2783 = vmatpush1.bf16.msra.mxu0 0
        %2784 = vmatprep.subr.bf16.mxu0 0
        %2785 = vmatpush1.bf16.msra.mxu0 0
        %2786 = vmatprep.subr.bf16.mxu0 0
        %2787 = vmatpush1.bf16.msra.mxu0 0
        %2788 = vmatprep.subr.bf16.mxu0 0
        %2789 = vmatpush1.bf16.msra.mxu0 0
        %2790 = vmatprep.subr.bf16.mxu0 0
        %2791 = vmatpush1.bf16.msra.mxu0 0
        %2792 = vmatprep.subr.bf16.mxu0 0
        %2793 = vmatpush1.bf16.msra.mxu0 0
        %2794 = vmatprep.mubr.bf16.mxu0 0
        %2795 = vmatmul.mubr.bf16.gmra.mrb[0].mxu0 %v2760
        %v2796 = vpop.f32.mrb[0].mxu0
        %v2797 = vadd.f32 0.0, %v2796
        %v2798 = vpop.f32.mrb[0].mxu0
        %v2799 = vpop.f32.mrb[0].mxu0
        %v2800 = vpop.f32.mrb[0].mxu0
        %2801 = vdwg.mxu0
        %2802 = vrot.lane.b32.xlu0 %v2594, 120
        %v2803 = vpop.permute.xlu0 %2802
        %2805 = vrot.lane.b32.xlu0 %v2596, 120
        %v2806 = vpop.permute.xlu0 %2805
        %v2808 = vsel %vm1370, %v2803, 0
        %v2811 = vsel %vm1370, %v2806, 0
        %2813 = vmatprep.subr.bf16.mxu0 0
        %2814 = vmatpush1.bf16.xpose.msra.mxu0 %v2811
        %2815 = vmatprep.subr.bf16.mxu0 0
        %2816 = vmatpush1.bf16.xpose.msra.mxu0 0
        %2817 = vmatprep.subr.bf16.mxu0 0
        %2818 = vmatpush1.bf16.xpose.msra.mxu0 0
        %2819 = vmatprep.subr.bf16.mxu0 0
        %2820 = vmatpush1.bf16.xpose.msra.mxu0 0
        %2821 = vmatprep.subr.bf16.mxu0 0
        %2822 = vmatpush1.bf16.xpose.msra.mxu0 0
        %2823 = vmatprep.subr.bf16.mxu0 0
        %2824 = vmatpush1.bf16.xpose.msra.mxu0 0
        %2825 = vmatprep.subr.bf16.mxu0 0
        %2826 = vmatpush1.bf16.xpose.msra.mxu0 0
        %2827 = vmatprep.subr.bf16.mxu0 0
        %2828 = vmatpush1.bf16.xpose.msra.mxu0 0
        %2829 = vmatprep.subr.bf16.mxu0 0
        %2830 = vmatpush1.bf16.xpose.msra.mxu0 0
        %2831 = vmatprep.subr.bf16.mxu0 0
        %2832 = vmatpush1.bf16.xpose.msra.mxu0 0
        %2833 = vmatprep.subr.bf16.mxu0 0
        %2834 = vmatpush1.bf16.xpose.msra.mxu0 0
        %2835 = vmatprep.subr.bf16.mxu0 0
        %2836 = vmatpush1.bf16.xpose.msra.mxu0 0
        %2837 = vmatprep.subr.bf16.mxu0 0
        %2838 = vmatpush1.bf16.xpose.msra.mxu0 0
        %2839 = vmatprep.subr.bf16.mxu0 0
        %2840 = vmatpush1.bf16.xpose.msra.mxu0 0
        %2841 = vmatprep.subr.bf16.mxu0 0
        %2842 = vmatpush1.bf16.xpose.msra.mxu0 0
        %2843 = vmatprep.subr.bf16.mxu0 0
        %2844 = vmatpush1.bf16.xpose.msra.mxu0 0
        %2845 = vmatprep.mubr.bf16.mxu0 0
        %2846 = vmatmul.mubr.bf16.gmra.mrb[0].mxu0 %v2808
        %v2847 = vpop.f32.mrb[0].mxu0
        %v2848 = vadd.f32 0.0, %v2847
        %v2849 = vpop.f32.mrb[0].mxu0
        %v2850 = vpop.f32.mrb[0].mxu0
        %v2851 = vpop.f32.mrb[0].mxu0
        %2852 = vdwg.mxu0
        %2853 = vrot.lane.b32.xlu0 %v2595, 120
        %v2854 = vpop.permute.xlu0 %2853
        %2856 = vrot.lane.b32.xlu0 %v2597, 120
        %v2857 = vpop.permute.xlu0 %2856
        %v2859 = vsel %vm1370, %v2854, 0
        %v2862 = vsel %vm1370, %v2857, 0
        %2864 = vmatprep.subr.bf16.mxu0 0
        %2865 = vmatpush1.bf16.xpose.msra.mxu0 %v2862
        %2866 = vmatprep.subr.bf16.mxu0 0
        %2867 = vmatpush1.bf16.xpose.msra.mxu0 0
        %2868 = vmatprep.subr.bf16.mxu0 0
        %2869 = vmatpush1.bf16.xpose.msra.mxu0 0
        %2870 = vmatprep.subr.bf16.mxu0 0
        %2871 = vmatpush1.bf16.xpose.msra.mxu0 0
        %2872 = vmatprep.subr.bf16.mxu0 0
        %2873 = vmatpush1.bf16.xpose.msra.mxu0 0
        %2874 = vmatprep.subr.bf16.mxu0 0
        %2875 = vmatpush1.bf16.xpose.msra.mxu0 0
        %2876 = vmatprep.subr.bf16.mxu0 0
        %2877 = vmatpush1.bf16.xpose.msra.mxu0 0
        %2878 = vmatprep.subr.bf16.mxu0 0
        %2879 = vmatpush1.bf16.xpose.msra.mxu0 0
        %2880 = vmatprep.subr.bf16.mxu0 0
        %2881 = vmatpush1.bf16.xpose.msra.mxu0 0
        %2882 = vmatprep.subr.bf16.mxu0 0
        %2883 = vmatpush1.bf16.xpose.msra.mxu0 0
        %2884 = vmatprep.subr.bf16.mxu0 0
        %2885 = vmatpush1.bf16.xpose.msra.mxu0 0
        %2886 = vmatprep.subr.bf16.mxu0 0
        %2887 = vmatpush1.bf16.xpose.msra.mxu0 0
        %2888 = vmatprep.subr.bf16.mxu0 0
        %2889 = vmatpush1.bf16.xpose.msra.mxu0 0
        %2890 = vmatprep.subr.bf16.mxu0 0
        %2891 = vmatpush1.bf16.xpose.msra.mxu0 0
        %2892 = vmatprep.subr.bf16.mxu0 0
        %2893 = vmatpush1.bf16.xpose.msra.mxu0 0
        %2894 = vmatprep.subr.bf16.mxu0 0
        %2895 = vmatpush1.bf16.xpose.msra.mxu0 0
        %2896 = vmatprep.mubr.bf16.mxu0 0
        %2897 = vmatmul.mubr.bf16.gmra.mrb[0].mxu0 %v2859
        %v2898 = vpop.f32.mrb[0].mxu0
        %v2899 = vadd.f32 0.0, %v2898
        %v2900 = vpop.f32.mrb[0].mxu0
        %v2901 = vpop.f32.mrb[0].mxu0
        %v2902 = vpop.f32.mrb[0].mxu0
        %2903 = vdwg.mxu0
        %v2904 = vsel %vm2269, %v2848, -inf
        %2905 = vmax.xlane.f32.xlu0 %v2904
        %v2906 = vpop.xlane.xlu0 %2905
        %v2907 = vsel %vm2269, %v2899, -inf
        %2908 = vmax.xlane.f32.xlu0 %v2907
        %v2909 = vpop.xlane.xlu0 %2908
        %v2910 = vsub.f32 %v2848, %v2906
        %v2911 = vsub.f32 %v2899, %v2909
        %v2912 = vmul.f32 %v2910, 1.442695
        %v2913 = vpow.pop %v2912
        %v2914 = vmul.f32 %v2911, 1.442695
        %v2915 = vpow.pop %v2914
        %v2916 = vsel %vm2269, %v2913, 0.0
        %2917 = vadd.xlane.f32.xlu0 %v2916
        %v2918 = vpop.xlane.xlu0 %2917
        %v2919 = vsel %vm2269, %v2915, 0.0
        %2920 = vadd.xlane.f32.xlu0 %v2919
        %v2921 = vpop.xlane.xlu0 %2920
        %v2922 = vrcp.pop %v2918
        %v2923 = vrcp.pop %v2921
        %v2924 = vmul.f32 %v2913, %v2922
        %v2925 = vmul.f32 %v2915, %v2923
        %v2926 = vpack.c.bf16 %v2924, %v2924
        %v2927 = vpack.c.bf16 %v2925, %v2925
        %2929 = vrot.lane.b32.xlu0 %v2598, 120
        %v2930 = vpop.permute.xlu0 %2929
        %v2933 = vsel %vm2269, %v2926, 0
        %2935 = vmatprep.subr.bf16.mxu0 0
        %2936 = vmatpush1.bf16.msra.mxu0 %v2930
        %2937 = vmatprep.subr.bf16.mxu0 0
        %2938 = vmatpush1.bf16.msra.mxu0 0
        %2939 = vmatprep.subr.bf16.mxu0 0
        %2940 = vmatpush1.bf16.msra.mxu0 0
        %2941 = vmatprep.subr.bf16.mxu0 0
        %2942 = vmatpush1.bf16.msra.mxu0 0
        %2943 = vmatprep.subr.bf16.mxu0 0
        %2944 = vmatpush1.bf16.msra.mxu0 0
        %2945 = vmatprep.subr.bf16.mxu0 0
        %2946 = vmatpush1.bf16.msra.mxu0 0
        %2947 = vmatprep.subr.bf16.mxu0 0
        %2948 = vmatpush1.bf16.msra.mxu0 0
        %2949 = vmatprep.subr.bf16.mxu0 0
        %2950 = vmatpush1.bf16.msra.mxu0 0
        %2951 = vmatprep.subr.bf16.mxu0 0
        %2952 = vmatpush1.bf16.msra.mxu0 0
        %2953 = vmatprep.subr.bf16.mxu0 0
        %2954 = vmatpush1.bf16.msra.mxu0 0
        %2955 = vmatprep.subr.bf16.mxu0 0
        %2956 = vmatpush1.bf16.msra.mxu0 0
        %2957 = vmatprep.subr.bf16.mxu0 0
        %2958 = vmatpush1.bf16.msra.mxu0 0
        %2959 = vmatprep.subr.bf16.mxu0 0
        %2960 = vmatpush1.bf16.msra.mxu0 0
        %2961 = vmatprep.subr.bf16.mxu0 0
        %2962 = vmatpush1.bf16.msra.mxu0 0
        %2963 = vmatprep.subr.bf16.mxu0 0
        %2964 = vmatpush1.bf16.msra.mxu0 0
        %2965 = vmatprep.subr.bf16.mxu0 0
        %2966 = vmatpush1.bf16.msra.mxu0 0
        %2967 = vmatprep.mubr.bf16.mxu0 0
        %2968 = vmatmul.mubr.bf16.gmra.mrb[0].mxu0 %v2933
        %v2969 = vpop.f32.mrb[0].mxu0
        %v2970 = vadd.f32 0.0, %v2969
        %v2971 = vpop.f32.mrb[0].mxu0
        %v2972 = vpop.f32.mrb[0].mxu0
        %v2973 = vpop.f32.mrb[0].mxu0
        %2974 = vdwg.mxu0
        %2976 = vrot.lane.b32.xlu0 %v2599, 120
        %v2977 = vpop.permute.xlu0 %2976
        %v2980 = vsel %vm2269, %v2927, 0
        %2982 = vmatprep.subr.bf16.mxu0 0
        %2983 = vmatpush1.bf16.msra.mxu0 %v2977
        %2984 = vmatprep.subr.bf16.mxu0 0
        %2985 = vmatpush1.bf16.msra.mxu0 0
        %2986 = vmatprep.subr.bf16.mxu0 0
        %2987 = vmatpush1.bf16.msra.mxu0 0
        %2988 = vmatprep.subr.bf16.mxu0 0
        %2989 = vmatpush1.bf16.msra.mxu0 0
        %2990 = vmatprep.subr.bf16.mxu0 0
        %2991 = vmatpush1.bf16.msra.mxu0 0
        %2992 = vmatprep.subr.bf16.mxu0 0
        %2993 = vmatpush1.bf16.msra.mxu0 0
        %2994 = vmatprep.subr.bf16.mxu0 0
        %2995 = vmatpush1.bf16.msra.mxu0 0
        %2996 = vmatprep.subr.bf16.mxu0 0
        %2997 = vmatpush1.bf16.msra.mxu0 0
        %2998 = vmatprep.subr.bf16.mxu0 0
        %2999 = vmatpush1.bf16.msra.mxu0 0
        %3000 = vmatprep.subr.bf16.mxu0 0
        %3001 = vmatpush1.bf16.msra.mxu0 0
        %3002 = vmatprep.subr.bf16.mxu0 0
        %3003 = vmatpush1.bf16.msra.mxu0 0
        %3004 = vmatprep.subr.bf16.mxu0 0
        %3005 = vmatpush1.bf16.msra.mxu0 0
        %3006 = vmatprep.subr.bf16.mxu0 0
        %3007 = vmatpush1.bf16.msra.mxu0 0
        %3008 = vmatprep.subr.bf16.mxu0 0
        %3009 = vmatpush1.bf16.msra.mxu0 0
        %3010 = vmatprep.subr.bf16.mxu0 0
        %3011 = vmatpush1.bf16.msra.mxu0 0
        %3012 = vmatprep.subr.bf16.mxu0 0
        %3013 = vmatpush1.bf16.msra.mxu0 0
        %3014 = vmatprep.mubr.bf16.mxu0 0
        %3015 = vmatmul.mubr.bf16.gmra.mrb[0].mxu0 %v2980
        %v3016 = vpop.f32.mrb[0].mxu0
        %v3017 = vadd.f32 0.0, %v3016
        %v3018 = vpop.f32.mrb[0].mxu0
        %v3019 = vpop.f32.mrb[0].mxu0
        %v3020 = vpop.f32.mrb[0].mxu0
        %3021 = vdwg.mxu0
        %3022 = vrot.lane.b32.xlu0 %v2594, 112
        %v3023 = vpop.permute.xlu0 %3022
        %3024 = vrot.lane.b32.xlu0 %v2596, 112
        %v3025 = vpop.permute.xlu0 %3024
        %v3027 = vsel %vm1370, %v3023, 0
        %v3030 = vsel %vm1370, %v3025, 0
        %3032 = vmatprep.subr.bf16.mxu0 0
        %3033 = vmatpush1.bf16.xpose.msra.mxu0 %v3030
        %3034 = vmatprep.subr.bf16.mxu0 0
        %3035 = vmatpush1.bf16.xpose.msra.mxu0 0
        %3036 = vmatprep.subr.bf16.mxu0 0
        %3037 = vmatpush1.bf16.xpose.msra.mxu0 0
        %3038 = vmatprep.subr.bf16.mxu0 0
        %3039 = vmatpush1.bf16.xpose.msra.mxu0 0
        %3040 = vmatprep.subr.bf16.mxu0 0
        %3041 = vmatpush1.bf16.xpose.msra.mxu0 0
        %3042 = vmatprep.subr.bf16.mxu0 0
        %3043 = vmatpush1.bf16.xpose.msra.mxu0 0
        %3044 = vmatprep.subr.bf16.mxu0 0
        %3045 = vmatpush1.bf16.xpose.msra.mxu0 0
        %3046 = vmatprep.subr.bf16.mxu0 0
        %3047 = vmatpush1.bf16.xpose.msra.mxu0 0
        %3048 = vmatprep.subr.bf16.mxu0 0
        %3049 = vmatpush1.bf16.xpose.msra.mxu0 0
        %3050 = vmatprep.subr.bf16.mxu0 0
        %3051 = vmatpush1.bf16.xpose.msra.mxu0 0
        %3052 = vmatprep.subr.bf16.mxu0 0
        %3053 = vmatpush1.bf16.xpose.msra.mxu0 0
        %3054 = vmatprep.subr.bf16.mxu0 0
        %3055 = vmatpush1.bf16.xpose.msra.mxu0 0
        %3056 = vmatprep.subr.bf16.mxu0 0
        %3057 = vmatpush1.bf16.xpose.msra.mxu0 0
        %3058 = vmatprep.subr.bf16.mxu0 0
        %3059 = vmatpush1.bf16.xpose.msra.mxu0 0
        %3060 = vmatprep.subr.bf16.mxu0 0
        %3061 = vmatpush1.bf16.xpose.msra.mxu0 0
        %3062 = vmatprep.subr.bf16.mxu0 0
        %3063 = vmatpush1.bf16.xpose.msra.mxu0 0
        %3064 = vmatprep.mubr.bf16.mxu0 0
        %3065 = vmatmul.mubr.bf16.gmra.mrb[0].mxu0 %v3027
        %v3066 = vpop.f32.mrb[0].mxu0
        %v3067 = vadd.f32 0.0, %v3066
        %v3068 = vpop.f32.mrb[0].mxu0
        %v3069 = vpop.f32.mrb[0].mxu0
        %v3070 = vpop.f32.mrb[0].mxu0
        %3071 = vdwg.mxu0
        %3072 = vrot.lane.b32.xlu0 %v2595, 112
        %v3073 = vpop.permute.xlu0 %3072
        %3074 = vrot.lane.b32.xlu0 %v2597, 112
        %v3075 = vpop.permute.xlu0 %3074
        %v3077 = vsel %vm1370, %v3073, 0
        %v3080 = vsel %vm1370, %v3075, 0
        %3082 = vmatprep.subr.bf16.mxu0 0
        %3083 = vmatpush1.bf16.xpose.msra.mxu0 %v3080
        %3084 = vmatprep.subr.bf16.mxu0 0
        %3085 = vmatpush1.bf16.xpose.msra.mxu0 0
        %3086 = vmatprep.subr.bf16.mxu0 0
        %3087 = vmatpush1.bf16.xpose.msra.mxu0 0
        %3088 = vmatprep.subr.bf16.mxu0 0
        %3089 = vmatpush1.bf16.xpose.msra.mxu0 0
        %3090 = vmatprep.subr.bf16.mxu0 0
        %3091 = vmatpush1.bf16.xpose.msra.mxu0 0
        %3092 = vmatprep.subr.bf16.mxu0 0
        %3093 = vmatpush1.bf16.xpose.msra.mxu0 0
        %3094 = vmatprep.subr.bf16.mxu0 0
        %3095 = vmatpush1.bf16.xpose.msra.mxu0 0
        %3096 = vmatprep.subr.bf16.mxu0 0
        %3097 = vmatpush1.bf16.xpose.msra.mxu0 0
        %3098 = vmatprep.subr.bf16.mxu0 0
        %3099 = vmatpush1.bf16.xpose.msra.mxu0 0
        %3100 = vmatprep.subr.bf16.mxu0 0
        %3101 = vmatpush1.bf16.xpose.msra.mxu0 0
        %3102 = vmatprep.subr.bf16.mxu0 0
        %3103 = vmatpush1.bf16.xpose.msra.mxu0 0
        %3104 = vmatprep.subr.bf16.mxu0 0
        %3105 = vmatpush1.bf16.xpose.msra.mxu0 0
        %3106 = vmatprep.subr.bf16.mxu0 0
        %3107 = vmatpush1.bf16.xpose.msra.mxu0 0
        %3108 = vmatprep.subr.bf16.mxu0 0
        %3109 = vmatpush1.bf16.xpose.msra.mxu0 0
        %3110 = vmatprep.subr.bf16.mxu0 0
        %3111 = vmatpush1.bf16.xpose.msra.mxu0 0
        %3112 = vmatprep.subr.bf16.mxu0 0
        %3113 = vmatpush1.bf16.xpose.msra.mxu0 0
        %3114 = vmatprep.mubr.bf16.mxu0 0
        %3115 = vmatmul.mubr.bf16.gmra.mrb[0].mxu0 %v3077
        %v3116 = vpop.f32.mrb[0].mxu0
        %v3117 = vadd.f32 0.0, %v3116
        %v3118 = vpop.f32.mrb[0].mxu0
        %v3119 = vpop.f32.mrb[0].mxu0
        %v3120 = vpop.f32.mrb[0].mxu0
        %3121 = vdwg.mxu0
        %v3122 = vsel %vm2269, %v3067, -inf
        %3123 = vmax.xlane.f32.xlu0 %v3122
        %v3124 = vpop.xlane.xlu0 %3123
        %v3125 = vsel %vm2269, %v3117, -inf
        %3126 = vmax.xlane.f32.xlu0 %v3125
        %v3127 = vpop.xlane.xlu0 %3126
        %v3128 = vsub.f32 %v3067, %v3124
        %v3129 = vsub.f32 %v3117, %v3127
        %v3130 = vmul.f32 %v3128, 1.442695
        %v3131 = vpow.pop %v3130
        %v3132 = vmul.f32 %v3129, 1.442695
        %v3133 = vpow.pop %v3132
        %v3134 = vsel %vm2269, %v3131, 0.0
        %3135 = vadd.xlane.f32.xlu0 %v3134
        %v3136 = vpop.xlane.xlu0 %3135
        %v3137 = vsel %vm2269, %v3133, 0.0
        %3138 = vadd.xlane.f32.xlu0 %v3137
        %v3139 = vpop.xlane.xlu0 %3138
        %v3140 = vrcp.pop %v3136
        %v3141 = vrcp.pop %v3139
        %v3142 = vmul.f32 %v3131, %v3140
        %v3143 = vmul.f32 %v3133, %v3141
        %v3144 = vpack.c.bf16 %v3142, %v3142
        %v3145 = vpack.c.bf16 %v3143, %v3143
        %3146 = vrot.lane.b32.xlu0 %v2598, 112
        %v3147 = vpop.permute.xlu0 %3146
        %v3150 = vsel %vm2269, %v3144, 0
        %3152 = vmatprep.subr.bf16.mxu0 0
        %3153 = vmatpush1.bf16.msra.mxu0 %v3147
        %3154 = vmatprep.subr.bf16.mxu0 0
        %3155 = vmatpush1.bf16.msra.mxu0 0
        %3156 = vmatprep.subr.bf16.mxu0 0
        %3157 = vmatpush1.bf16.msra.mxu0 0
        %3158 = vmatprep.subr.bf16.mxu0 0
        %3159 = vmatpush1.bf16.msra.mxu0 0
        %3160 = vmatprep.subr.bf16.mxu0 0
        %3161 = vmatpush1.bf16.msra.mxu0 0
        %3162 = vmatprep.subr.bf16.mxu0 0
        %3163 = vmatpush1.bf16.msra.mxu0 0
        %3164 = vmatprep.subr.bf16.mxu0 0
        %3165 = vmatpush1.bf16.msra.mxu0 0
        %3166 = vmatprep.subr.bf16.mxu0 0
        %3167 = vmatpush1.bf16.msra.mxu0 0
        %3168 = vmatprep.subr.bf16.mxu0 0
        %3169 = vmatpush1.bf16.msra.mxu0 0
        %3170 = vmatprep.subr.bf16.mxu0 0
        %3171 = vmatpush1.bf16.msra.mxu0 0
        %3172 = vmatprep.subr.bf16.mxu0 0
        %3173 = vmatpush1.bf16.msra.mxu0 0
        %3174 = vmatprep.subr.bf16.mxu0 0
        %3175 = vmatpush1.bf16.msra.mxu0 0
        %3176 = vmatprep.subr.bf16.mxu0 0
        %3177 = vmatpush1.bf16.msra.mxu0 0
        %3178 = vmatprep.subr.bf16.mxu0 0
        %3179 = vmatpush1.bf16.msra.mxu0 0
        %3180 = vmatprep.subr.bf16.mxu0 0
        %3181 = vmatpush1.bf16.msra.mxu0 0
        %3182 = vmatprep.subr.bf16.mxu0 0
        %3183 = vmatpush1.bf16.msra.mxu0 0
        %3184 = vmatprep.mubr.bf16.mxu0 0
        %3185 = vmatmul.mubr.bf16.gmra.mrb[0].mxu0 %v3150
        %v3186 = vpop.f32.mrb[0].mxu0
        %v3187 = vadd.f32 0.0, %v3186
        %v3188 = vpop.f32.mrb[0].mxu0
        %v3189 = vpop.f32.mrb[0].mxu0
        %v3190 = vpop.f32.mrb[0].mxu0
        %3191 = vdwg.mxu0
        %3192 = vrot.lane.b32.xlu0 %v2599, 112
        %v3193 = vpop.permute.xlu0 %3192
        %v3196 = vsel %vm2269, %v3145, 0
        %3198 = vmatprep.subr.bf16.mxu0 0
        %3199 = vmatpush1.bf16.msra.mxu0 %v3193
        %3200 = vmatprep.subr.bf16.mxu0 0
        %3201 = vmatpush1.bf16.msra.mxu0 0
        %3202 = vmatprep.subr.bf16.mxu0 0
        %3203 = vmatpush1.bf16.msra.mxu0 0
        %3204 = vmatprep.subr.bf16.mxu0 0
        %3205 = vmatpush1.bf16.msra.mxu0 0
        %3206 = vmatprep.subr.bf16.mxu0 0
        %3207 = vmatpush1.bf16.msra.mxu0 0
        %3208 = vmatprep.subr.bf16.mxu0 0
        %3209 = vmatpush1.bf16.msra.mxu0 0
        %3210 = vmatprep.subr.bf16.mxu0 0
        %3211 = vmatpush1.bf16.msra.mxu0 0
        %3212 = vmatprep.subr.bf16.mxu0 0
        %3213 = vmatpush1.bf16.msra.mxu0 0
        %3214 = vmatprep.subr.bf16.mxu0 0
        %3215 = vmatpush1.bf16.msra.mxu0 0
        %3216 = vmatprep.subr.bf16.mxu0 0
        %3217 = vmatpush1.bf16.msra.mxu0 0
        %3218 = vmatprep.subr.bf16.mxu0 0
        %3219 = vmatpush1.bf16.msra.mxu0 0
        %3220 = vmatprep.subr.bf16.mxu0 0
        %3221 = vmatpush1.bf16.msra.mxu0 0
        %3222 = vmatprep.subr.bf16.mxu0 0
        %3223 = vmatpush1.bf16.msra.mxu0 0
        %3224 = vmatprep.subr.bf16.mxu0 0
        %3225 = vmatpush1.bf16.msra.mxu0 0
        %3226 = vmatprep.subr.bf16.mxu0 0
        %3227 = vmatpush1.bf16.msra.mxu0 0
        %3228 = vmatprep.subr.bf16.mxu0 0
        %3229 = vmatpush1.bf16.msra.mxu0 0
        %3230 = vmatprep.mubr.bf16.mxu0 0
        %3231 = vmatmul.mubr.bf16.gmra.mrb[0].mxu0 %v3196
        %v3232 = vpop.f32.mrb[0].mxu0
        %v3233 = vadd.f32 0.0, %v3232
        %v3234 = vpop.f32.mrb[0].mxu0
        %v3235 = vpop.f32.mrb[0].mxu0
        %v3236 = vpop.f32.mrb[0].mxu0
        %3237 = vdwg.mxu0
        %3238 = vrot.lane.b32.xlu0 %v2594, 104
        %v3239 = vpop.permute.xlu0 %3238
        %3240 = vrot.lane.b32.xlu0 %v2596, 104
        %v3241 = vpop.permute.xlu0 %3240
        %v3243 = vsel %vm1370, %v3239, 0
        %v3246 = vsel %vm1370, %v3241, 0
        %3248 = vmatprep.subr.bf16.mxu0 0
        %3249 = vmatpush1.bf16.xpose.msra.mxu0 %v3246
        %3250 = vmatprep.subr.bf16.mxu0 0
        %3251 = vmatpush1.bf16.xpose.msra.mxu0 0
        %3252 = vmatprep.subr.bf16.mxu0 0
        %3253 = vmatpush1.bf16.xpose.msra.mxu0 0
        %3254 = vmatprep.subr.bf16.mxu0 0
        %3255 = vmatpush1.bf16.xpose.msra.mxu0 0
        %3256 = vmatprep.subr.bf16.mxu0 0
        %3257 = vmatpush1.bf16.xpose.msra.mxu0 0
        %3258 = vmatprep.subr.bf16.mxu0 0
        %3259 = vmatpush1.bf16.xpose.msra.mxu0 0
        %3260 = vmatprep.subr.bf16.mxu0 0
        %3261 = vmatpush1.bf16.xpose.msra.mxu0 0
        %3262 = vmatprep.subr.bf16.mxu0 0
        %3263 = vmatpush1.bf16.xpose.msra.mxu0 0
        %3264 = vmatprep.subr.bf16.mxu0 0
        %3265 = vmatpush1.bf16.xpose.msra.mxu0 0
        %3266 = vmatprep.subr.bf16.mxu0 0
        %3267 = vmatpush1.bf16.xpose.msra.mxu0 0
        %3268 = vmatprep.subr.bf16.mxu0 0
        %3269 = vmatpush1.bf16.xpose.msra.mxu0 0
        %3270 = vmatprep.subr.bf16.mxu0 0
        %3271 = vmatpush1.bf16.xpose.msra.mxu0 0
        %3272 = vmatprep.subr.bf16.mxu0 0
        %3273 = vmatpush1.bf16.xpose.msra.mxu0 0
        %3274 = vmatprep.subr.bf16.mxu0 0
        %3275 = vmatpush1.bf16.xpose.msra.mxu0 0
        %3276 = vmatprep.subr.bf16.mxu0 0
        %3277 = vmatpush1.bf16.xpose.msra.mxu0 0
        %3278 = vmatprep.subr.bf16.mxu0 0
        %3279 = vmatpush1.bf16.xpose.msra.mxu0 0
        %3280 = vmatprep.mubr.bf16.mxu0 0
        %3281 = vmatmul.mubr.bf16.gmra.mrb[0].mxu0 %v3243
        %v3282 = vpop.f32.mrb[0].mxu0
        %v3283 = vadd.f32 0.0, %v3282
        %v3284 = vpop.f32.mrb[0].mxu0
        %v3285 = vpop.f32.mrb[0].mxu0
        %v3286 = vpop.f32.mrb[0].mxu0
        %3287 = vdwg.mxu0
        %3288 = vrot.lane.b32.xlu0 %v2595, 104
        %v3289 = vpop.permute.xlu0 %3288
        %3290 = vrot.lane.b32.xlu0 %v2597, 104
        %v3291 = vpop.permute.xlu0 %3290
        %v3293 = vsel %vm1370, %v3289, 0
        %v3296 = vsel %vm1370, %v3291, 0
        %3298 = vmatprep.subr.bf16.mxu0 0
        %3299 = vmatpush1.bf16.xpose.msra.mxu0 %v3296
        %3300 = vmatprep.subr.bf16.mxu0 0
        %3301 = vmatpush1.bf16.xpose.msra.mxu0 0
        %3302 = vmatprep.subr.bf16.mxu0 0
        %3303 = vmatpush1.bf16.xpose.msra.mxu0 0
        %3304 = vmatprep.subr.bf16.mxu0 0
        %3305 = vmatpush1.bf16.xpose.msra.mxu0 0
        %3306 = vmatprep.subr.bf16.mxu0 0
        %3307 = vmatpush1.bf16.xpose.msra.mxu0 0
        %3308 = vmatprep.subr.bf16.mxu0 0
        %3309 = vmatpush1.bf16.xpose.msra.mxu0 0
        %3310 = vmatprep.subr.bf16.mxu0 0
        %3311 = vmatpush1.bf16.xpose.msra.mxu0 0
        %3312 = vmatprep.subr.bf16.mxu0 0
        %3313 = vmatpush1.bf16.xpose.msra.mxu0 0
        %3314 = vmatprep.subr.bf16.mxu0 0
        %3315 = vmatpush1.bf16.xpose.msra.mxu0 0
        %3316 = vmatprep.subr.bf16.mxu0 0
        %3317 = vmatpush1.bf16.xpose.msra.mxu0 0
        %3318 = vmatprep.subr.bf16.mxu0 0
        %3319 = vmatpush1.bf16.xpose.msra.mxu0 0
        %3320 = vmatprep.subr.bf16.mxu0 0
        %3321 = vmatpush1.bf16.xpose.msra.mxu0 0
        %3322 = vmatprep.subr.bf16.mxu0 0
        %3323 = vmatpush1.bf16.xpose.msra.mxu0 0
        %3324 = vmatprep.subr.bf16.mxu0 0
        %3325 = vmatpush1.bf16.xpose.msra.mxu0 0
        %3326 = vmatprep.subr.bf16.mxu0 0
        %3327 = vmatpush1.bf16.xpose.msra.mxu0 0
        %3328 = vmatprep.subr.bf16.mxu0 0
        %3329 = vmatpush1.bf16.xpose.msra.mxu0 0
        %3330 = vmatprep.mubr.bf16.mxu0 0
        %3331 = vmatmul.mubr.bf16.gmra.mrb[0].mxu0 %v3293
        %v3332 = vpop.f32.mrb[0].mxu0
        %v3333 = vadd.f32 0.0, %v3332
        %v3334 = vpop.f32.mrb[0].mxu0
        %v3335 = vpop.f32.mrb[0].mxu0
        %v3336 = vpop.f32.mrb[0].mxu0
        %3337 = vdwg.mxu0
        %v3338 = vsel %vm2269, %v3283, -inf
        %3339 = vmax.xlane.f32.xlu0 %v3338
        %v3340 = vpop.xlane.xlu0 %3339
        %v3341 = vsel %vm2269, %v3333, -inf
        %3342 = vmax.xlane.f32.xlu0 %v3341
        %v3343 = vpop.xlane.xlu0 %3342
        %v3344 = vsub.f32 %v3283, %v3340
        %v3345 = vsub.f32 %v3333, %v3343
        %v3346 = vmul.f32 %v3344, 1.442695
        %v3347 = vpow.pop %v3346
        %v3348 = vmul.f32 %v3345, 1.442695
        %v3349 = vpow.pop %v3348
        %v3350 = vsel %vm2269, %v3347, 0.0
        %3351 = vadd.xlane.f32.xlu0 %v3350
        %v3352 = vpop.xlane.xlu0 %3351
        %v3353 = vsel %vm2269, %v3349, 0.0
        %3354 = vadd.xlane.f32.xlu0 %v3353
        %v3355 = vpop.xlane.xlu0 %3354
        %v3356 = vrcp.pop %v3352
        %v3357 = vrcp.pop %v3355
        %v3358 = vmul.f32 %v3347, %v3356
        %v3359 = vmul.f32 %v3349, %v3357
        %v3360 = vpack.c.bf16 %v3358, %v3358
        %v3361 = vpack.c.bf16 %v3359, %v3359
        %3362 = vrot.lane.b32.xlu0 %v2598, 104
        %v3363 = vpop.permute.xlu0 %3362
        %v3366 = vsel %vm2269, %v3360, 0
        %3368 = vmatprep.subr.bf16.mxu0 0
        %3369 = vmatpush1.bf16.msra.mxu0 %v3363
        %3370 = vmatprep.subr.bf16.mxu0 0
        %3371 = vmatpush1.bf16.msra.mxu0 0
        %3372 = vmatprep.subr.bf16.mxu0 0
        %3373 = vmatpush1.bf16.msra.mxu0 0
        %3374 = vmatprep.subr.bf16.mxu0 0
        %3375 = vmatpush1.bf16.msra.mxu0 0
        %3376 = vmatprep.subr.bf16.mxu0 0
        %3377 = vmatpush1.bf16.msra.mxu0 0
        %3378 = vmatprep.subr.bf16.mxu0 0
        %3379 = vmatpush1.bf16.msra.mxu0 0
        %3380 = vmatprep.subr.bf16.mxu0 0
        %3381 = vmatpush1.bf16.msra.mxu0 0
        %3382 = vmatprep.subr.bf16.mxu0 0
        %3383 = vmatpush1.bf16.msra.mxu0 0
        %3384 = vmatprep.subr.bf16.mxu0 0
        %3385 = vmatpush1.bf16.msra.mxu0 0
        %3386 = vmatprep.subr.bf16.mxu0 0
        %3387 = vmatpush1.bf16.msra.mxu0 0
        %3388 = vmatprep.subr.bf16.mxu0 0
        %3389 = vmatpush1.bf16.msra.mxu0 0
        %3390 = vmatprep.subr.bf16.mxu0 0
        %3391 = vmatpush1.bf16.msra.mxu0 0
        %3392 = vmatprep.subr.bf16.mxu0 0
        %3393 = vmatpush1.bf16.msra.mxu0 0
        %3394 = vmatprep.subr.bf16.mxu0 0
        %3395 = vmatpush1.bf16.msra.mxu0 0
        %3396 = vmatprep.subr.bf16.mxu0 0
        %3397 = vmatpush1.bf16.msra.mxu0 0
        %3398 = vmatprep.subr.bf16.mxu0 0
        %3399 = vmatpush1.bf16.msra.mxu0 0
        %3400 = vmatprep.mubr.bf16.mxu0 0
        %3401 = vmatmul.mubr.bf16.gmra.mrb[0].mxu0 %v3366
        %v3402 = vpop.f32.mrb[0].mxu0
        %v3403 = vadd.f32 0.0, %v3402
        %v3404 = vpop.f32.mrb[0].mxu0
        %v3405 = vpop.f32.mrb[0].mxu0
        %v3406 = vpop.f32.mrb[0].mxu0
        %3407 = vdwg.mxu0
        %3408 = vrot.lane.b32.xlu0 %v2599, 104
        %v3409 = vpop.permute.xlu0 %3408
        %v3412 = vsel %vm2269, %v3361, 0
        %3414 = vmatprep.subr.bf16.mxu0 0
        %3415 = vmatpush1.bf16.msra.mxu0 %v3409
        %3416 = vmatprep.subr.bf16.mxu0 0
        %3417 = vmatpush1.bf16.msra.mxu0 0
        %3418 = vmatprep.subr.bf16.mxu0 0
        %3419 = vmatpush1.bf16.msra.mxu0 0
        %3420 = vmatprep.subr.bf16.mxu0 0
        %3421 = vmatpush1.bf16.msra.mxu0 0
        %3422 = vmatprep.subr.bf16.mxu0 0
        %3423 = vmatpush1.bf16.msra.mxu0 0
        %3424 = vmatprep.subr.bf16.mxu0 0
        %3425 = vmatpush1.bf16.msra.mxu0 0
        %3426 = vmatprep.subr.bf16.mxu0 0
        %3427 = vmatpush1.bf16.msra.mxu0 0
        %3428 = vmatprep.subr.bf16.mxu0 0
        %3429 = vmatpush1.bf16.msra.mxu0 0
        %3430 = vmatprep.subr.bf16.mxu0 0
        %3431 = vmatpush1.bf16.msra.mxu0 0
        %3432 = vmatprep.subr.bf16.mxu0 0
        %3433 = vmatpush1.bf16.msra.mxu0 0
        %3434 = vmatprep.subr.bf16.mxu0 0
        %3435 = vmatpush1.bf16.msra.mxu0 0
        %3436 = vmatprep.subr.bf16.mxu0 0
        %3437 = vmatpush1.bf16.msra.mxu0 0
        %3438 = vmatprep.subr.bf16.mxu0 0
        %3439 = vmatpush1.bf16.msra.mxu0 0
        %3440 = vmatprep.subr.bf16.mxu0 0
        %3441 = vmatpush1.bf16.msra.mxu0 0
        %3442 = vmatprep.subr.bf16.mxu0 0
        %3443 = vmatpush1.bf16.msra.mxu0 0
        %3444 = vmatprep.subr.bf16.mxu0 0
        %3445 = vmatpush1.bf16.msra.mxu0 0
        %3446 = vmatprep.mubr.bf16.mxu0 0
        %3447 = vmatmul.mubr.bf16.gmra.mrb[0].mxu0 %v3412
        %v3448 = vpop.f32.mrb[0].mxu0
        %v3449 = vadd.f32 0.0, %v3448
        %v3450 = vpop.f32.mrb[0].mxu0
        %v3451 = vpop.f32.mrb[0].mxu0
        %v3452 = vpop.f32.mrb[0].mxu0
        %3453 = vdwg.mxu0
        %3456 = vrot.lane.b32.xlu0 %v2970, 8
        %v3457 = vpop.permute.xlu0 %3456
        %3458 = vrot.lane.b32.xlu0 %v3017, 8
        %v3459 = vpop.permute.xlu0 %3458
        %3464 = vrot.lane.b32.xlu0 %v3187, 16
        %v3465 = vpop.permute.xlu0 %3464
        %3466 = vrot.lane.b32.xlu0 %v3233, 16
        %v3467 = vpop.permute.xlu0 %3466
        %3472 = vrot.lane.b32.xlu0 %v3403, 24
        %v3473 = vpop.permute.xlu0 %3472
        %3474 = vrot.lane.b32.xlu0 %v3449, 24
        %v3475 = vpop.permute.xlu0 %3474
        %v3478 = vsel %vm1370, %v2754, %v3457
        %v3479 = vsel %vm1370, %v2797, %v3459
        %v3480 = vsel %vm2269, %v3478, %v3465
        %v3481 = vsel %vm2269, %v3479, %v3467
        %v3482 = vsel %vm2272, %v3480, %v3473
        %v3483 = vsel %vm2272, %v3481, %v3475
        %v3484 = vpack.c.bf16 %v3483, %v3482
        %s3485 = scalar_lea.vmem %s639, 16
        %v3486 = vld [vmem:[%s3485] sm:$0xf]
        %v3487 = vld [vmem:[%s3485 + $0x4] sm:$0xf]
        %v3488 = vld [vmem:[%s3485 + $0x8] sm:$0xf]
        %v3489 = vld [vmem:[%s3485 + $0xc] sm:$0xf]
        %v3490 = vlaneseq
        %v3491 = vshrl.u32 %v3490, 7
        %v3492 = vsub.s32 0, %v3491
        %v3493 = vrot.slane %v2390, %v3492
        %v3498 = vunpack.c.l.b16 %v3486
        %v3499 = vunpack.c.l.b16 %v3487
        %v3500 = vunpack.c.l.b16 %v3488
        %v3501 = vunpack.c.l.b16 %v3489
        %v3502 = vpack.c.b16 %v3499, %v3498
        %v3503 = vpack.c.b16 %v3501, %v3500
        %v3507 = vsel %vm1233, %v3484, 0
        %3509 = vmatprep.subr.bf16.mxu0 0
        %3510 = vmatpush1.bf16.msra.mxu0 %v3502
        %3511 = vmatprep.subr.bf16.mxu0 0
        %3512 = vmatpush1.bf16.msra.mxu0 %v3503
        %3513 = vmatprep.subr.bf16.mxu0 0
        %3514 = vmatpush1.bf16.msra.mxu0 0
        %3515 = vmatprep.subr.bf16.mxu0 0
        %3516 = vmatpush1.bf16.msra.mxu0 0
        %3517 = vmatprep.subr.bf16.mxu0 0
        %3518 = vmatpush1.bf16.msra.mxu0 0
        %3519 = vmatprep.subr.bf16.mxu0 0
        %3520 = vmatpush1.bf16.msra.mxu0 0
        %3521 = vmatprep.subr.bf16.mxu0 0
        %3522 = vmatpush1.bf16.msra.mxu0 0
        %3523 = vmatprep.subr.bf16.mxu0 0
        %3524 = vmatpush1.bf16.msra.mxu0 0
        %3525 = vmatprep.subr.bf16.mxu0 0
        %3526 = vmatpush1.bf16.msra.mxu0 0
        %3527 = vmatprep.subr.bf16.mxu0 0
        %3528 = vmatpush1.bf16.msra.mxu0 0
        %3529 = vmatprep.subr.bf16.mxu0 0
        %3530 = vmatpush1.bf16.msra.mxu0 0
        %3531 = vmatprep.subr.bf16.mxu0 0
        %3532 = vmatpush1.bf16.msra.mxu0 0
        %3533 = vmatprep.subr.bf16.mxu0 0
        %3534 = vmatpush1.bf16.msra.mxu0 0
        %3535 = vmatprep.subr.bf16.mxu0 0
        %3536 = vmatpush1.bf16.msra.mxu0 0
        %3537 = vmatprep.subr.bf16.mxu0 0
        %3538 = vmatpush1.bf16.msra.mxu0 0
        %3539 = vmatprep.subr.bf16.mxu0 0
        %3540 = vmatpush1.bf16.msra.mxu0 0
        %3541 = vmatprep.mubr.bf16.mxu0 0
        %3542 = vmatmul.mubr.bf16.gmra.mrb[0].mxu0 %v3507
        %v3543 = vpop.f32.mrb[0].mxu0
        %v3544 = vadd.f32 %v3493, %v3543
        %v3545 = vpop.f32.mrb[0].mxu0
        %v3546 = vpop.f32.mrb[0].mxu0
        %v3547 = vadd.f32 %v3493, %v3546
        %v3548 = vpop.f32.mrb[0].mxu0
        %3549 = vdwg.mxu0
        %v3550 = vadd.f32 %v2381, %v3544
        %v3551 = vadd.f32 %v2382, %v3547
        %v3552 = vld [vmem:[%s654 + $0x5] sm:$0x1]
        %v3553 = vld [vmem:[%s654 + $0x6] sm:$0x1]
        %v3554 = vsel %vm1233, %v3550, 0.0
        %3555 = vadd.xlane.f32.xlu0 %v3554
        %v3556 = vpop.xlane.xlu0 %3555
        %v3557 = vsel %vm1233, %v3551, 0.0
        %3558 = vadd.xlane.f32.xlu0 %v3557
        %v3559 = vpop.xlane.xlu0 %3558
        %v3560 = vmul.f32 %v3556, %v2350
        %v3561 = vmul.f32 %v3559, %v2350
        %v3562 = vsub.f32 %v3550, %v3560
        %v3563 = vsub.f32 %v3551, %v3561
        %v3564 = vmul.f32 %v3562, %v3562
        %v3565 = vmul.f32 %v3563, %v3563
        %v3566 = vsel %vm1233, %v3564, 0.0
        %3567 = vadd.xlane.f32.xlu0 %v3566
        %v3568 = vpop.xlane.xlu0 %3567
        %v3569 = vsel %vm1233, %v3565, 0.0
        %3570 = vadd.xlane.f32.xlu0 %v3569
        %v3571 = vpop.xlane.xlu0 %3570
        %v3572 = vmul.f32 %v3568, %v2350
        %v3573 = vmul.f32 %v3571, %v2350
        %v3574 = vadd.f32 %v3572, 1e-05
        %v3575 = vadd.f32 %v3573, 1e-05
        %v3576 = vrsqrt.pop %v3574
        %v3577 = vrsqrt.pop %v3575
        %v3578 = vmul.f32 %v3562, %v3576
        %v3579 = vmul.f32 %v3563, %v3577
        %v3580 = vlaneseq
        %v3581 = vshrl.u32 %v3580, 7
        %v3582 = vsub.s32 0, %v3581
        %v3583 = vrot.slane %v3552, %v3582
        %v3584 = vmul.f32 %v3578, %v3583
        %v3585 = vmul.f32 %v3579, %v3583
        %v3586 = vlaneseq
        %v3587 = vshrl.u32 %v3586, 7
        %v3588 = vsub.s32 0, %v3587
        %v3589 = vrot.slane %v3553, %v3588
        %v3590 = vadd.f32 %v3584, %v3589
        %v3591 = vadd.f32 %v3585, %v3589
        %v3592 = vpack.c.bf16 %v3591, %v3590
        %v3593 = vld [vmem:[%s537] sm:$0xf]
        %v3594 = vld [vmem:[%s537 + $0x4] sm:$0xf]
        %v3595 = vld [vmem:[%s537 + $0x8] sm:$0xf]
        %v3596 = vld [vmem:[%s537 + $0xc] sm:$0xf]
        %v3597 = vld [vmem:[%s545] sm:$0x1]
        %v3599 = vlaneseq
        %v3600 = vshrl.u32 %v3599, 7
        %v3601 = vsub.s32 0, %v3600
        %v3602 = vrot.slane %v3597, %v3601
        %v3608 = vunpack.c.l.b16 %v3593
        %v3609 = vunpack.c.l.b16 %v3594
        %v3610 = vunpack.c.l.b16 %v3595
        %v3611 = vunpack.c.l.b16 %v3596
        %v3612 = vpack.c.b16 %v3609, %v3608
        %v3613 = vpack.c.b16 %v3611, %v3610
        %v3617 = vsel %vm1233, %v3592, 0
        %3619 = vmatprep.subr.bf16.mxu0 0
        %3620 = vmatpush1.bf16.msra.mxu0 %v3612
        %3621 = vmatprep.subr.bf16.mxu0 0
        %3622 = vmatpush1.bf16.msra.mxu0 %v3613
        %3623 = vmatprep.subr.bf16.mxu0 0
        %3624 = vmatpush1.bf16.msra.mxu0 0
        %3625 = vmatprep.subr.bf16.mxu0 0
        %3626 = vmatpush1.bf16.msra.mxu0 0
        %3627 = vmatprep.subr.bf16.mxu0 0
        %3628 = vmatpush1.bf16.msra.mxu0 0
        %3629 = vmatprep.subr.bf16.mxu0 0
        %3630 = vmatpush1.bf16.msra.mxu0 0
        %3631 = vmatprep.subr.bf16.mxu0 0
        %3632 = vmatpush1.bf16.msra.mxu0 0
        %3633 = vmatprep.subr.bf16.mxu0 0
        %3634 = vmatpush1.bf16.msra.mxu0 0
        %3635 = vmatprep.subr.bf16.mxu0 0
        %3636 = vmatpush1.bf16.msra.mxu0 0
        %3637 = vmatprep.subr.bf16.mxu0 0
        %3638 = vmatpush1.bf16.msra.mxu0 0
        %3639 = vmatprep.subr.bf16.mxu0 0
        %3640 = vmatpush1.bf16.msra.mxu0 0
        %3641 = vmatprep.subr.bf16.mxu0 0
        %3642 = vmatpush1.bf16.msra.mxu0 0
        %3643 = vmatprep.subr.bf16.mxu0 0
        %3644 = vmatpush1.bf16.msra.mxu0 0
        %3645 = vmatprep.subr.bf16.mxu0 0
        %3646 = vmatpush1.bf16.msra.mxu0 0
        %3647 = vmatprep.subr.bf16.mxu0 0
        %3648 = vmatpush1.bf16.msra.mxu0 0
        %3649 = vmatprep.subr.bf16.mxu0 0
        %3650 = vmatpush1.bf16.msra.mxu0 0
        %3651 = vmatprep.mubr.bf16.mxu0 0
        %3652 = vmatmul.mubr.bf16.gmra.mrb[0].mxu0 %v3617
        %v3653 = vpop.f32.mrb[0].mxu0
        %v3654 = vadd.f32 %v3602, %v3653
        %v3655 = vpop.f32.mrb[0].mxu0
        %v3656 = vpop.f32.mrb[0].mxu0
        %v3657 = vadd.f32 %v3602, %v3656
        %v3658 = vpop.f32.mrb[0].mxu0
        %3659 = vdwg.mxu0
        %v3660 = vmax.f32 %v3654, 0.0
        %v3661 = vmax.f32 %v3657, 0.0
        %v3662 = vpack.c.bf16 %v3661, %v3660
        %v3663 = vld [vmem:[%s649] sm:$0xf]
        %v3664 = vld [vmem:[%s649 + $0x4] sm:$0xf]
        %v3665 = vld [vmem:[%s649 + $0x8] sm:$0xf]
        %v3666 = vld [vmem:[%s649 + $0xc] sm:$0xf]
        %v3667 = vld [vmem:[%s649 + $0x10] sm:$0xf]
        %v3668 = vld [vmem:[%s649 + $0x14] sm:$0xf]
        %v3669 = vld [vmem:[%s649 + $0x18] sm:$0xf]
        %v3670 = vld [vmem:[%s649 + $0x1c] sm:$0xf]
        %v3671 = vld [vmem:[%s654 + $0x2] sm:$0x1]
        %v3672 = vlaneseq
        %v3673 = vshrl.u32 %v3672, 7
        %v3674 = vsub.s32 0, %v3673
        %v3675 = vrot.slane %v3671, %v3674
        %v3684 = vunpack.c.l.b16 %v3663
        %v3685 = vunpack.c.l.b16 %v3664
        %v3686 = vunpack.c.l.b16 %v3665
        %v3687 = vunpack.c.l.b16 %v3666
        %v3688 = vunpack.c.l.b16 %v3667
        %v3689 = vunpack.c.l.b16 %v3668
        %v3690 = vunpack.c.l.b16 %v3669
        %v3691 = vunpack.c.l.b16 %v3670
        %v3692 = vpack.c.b16 %v3685, %v3684
        %v3693 = vpack.c.b16 %v3687, %v3686
        %v3694 = vpack.c.b16 %v3689, %v3688
        %v3695 = vpack.c.b16 %v3691, %v3690
        %vm3700 = vcmask 523264
        %v3702 = vsel %vm3700, %v3662, 0
        %3704 = vmatprep.subr.bf16.mxu0 0
        %3705 = vmatpush1.bf16.msra.mxu0 %v3692
        %3706 = vmatprep.subr.bf16.mxu0 0
        %3707 = vmatpush1.bf16.msra.mxu0 %v3693
        %3708 = vmatprep.subr.bf16.mxu0 0
        %3709 = vmatpush1.bf16.msra.mxu0 %v3694
        %3710 = vmatprep.subr.bf16.mxu0 0
        %3711 = vmatpush1.bf16.msra.mxu0 %v3695
        %3712 = vmatprep.subr.bf16.mxu0 0
        %3713 = vmatpush1.bf16.msra.mxu0 0
        %3714 = vmatprep.subr.bf16.mxu0 0
        %3715 = vmatpush1.bf16.msra.mxu0 0
        %3716 = vmatprep.subr.bf16.mxu0 0
        %3717 = vmatpush1.bf16.msra.mxu0 0
        %3718 = vmatprep.subr.bf16.mxu0 0
        %3719 = vmatpush1.bf16.msra.mxu0 0
        %3720 = vmatprep.subr.bf16.mxu0 0
        %3721 = vmatpush1.bf16.msra.mxu0 0
        %3722 = vmatprep.subr.bf16.mxu0 0
        %3723 = vmatpush1.bf16.msra.mxu0 0
        %3724 = vmatprep.subr.bf16.mxu0 0
        %3725 = vmatpush1.bf16.msra.mxu0 0
        %3726 = vmatprep.subr.bf16.mxu0 0
        %3727 = vmatpush1.bf16.msra.mxu0 0
        %3728 = vmatprep.subr.bf16.mxu0 0
        %3729 = vmatpush1.bf16.msra.mxu0 0
        %3730 = vmatprep.subr.bf16.mxu0 0
        %3731 = vmatpush1.bf16.msra.mxu0 0
        %3732 = vmatprep.subr.bf16.mxu0 0
        %3733 = vmatpush1.bf16.msra.mxu0 0
        %3734 = vmatprep.subr.bf16.mxu0 0
        %3735 = vmatpush1.bf16.msra.mxu0 0
        %3736 = vmatprep.mubr.bf16.mxu0 0
        %3737 = vmatmul.mubr.bf16.gmra.mrb[0].mxu0 %v3702
        %v3738 = vpop.f32.mrb[0].mxu0
        %v3739 = vadd.f32 %v3675, %v3738
        %v3740 = vpop.f32.mrb[0].mxu0
        %v3741 = vpop.f32.mrb[0].mxu0
        %v3742 = vadd.f32 %v3675, %v3741
        %v3743 = vpop.f32.mrb[0].mxu0
        %3744 = vdwg.mxu0
        %v3745 = vadd.f32 %v3590, %v3739
        %v3746 = vadd.f32 %v3591, %v3742
        %v3747 = vld [vmem:[%s654 + $0x7] sm:$0x1]
        %v3748 = vld [vmem:[%s654 + $0x8] sm:$0x1]
        %v3749 = vsel %vm1233, %v3745, 0.0
        %3750 = vadd.xlane.f32.xlu0 %v3749
        %v3751 = vpop.xlane.xlu0 %3750
        %v3752 = vsel %vm1233, %v3746, 0.0
        %3753 = vadd.xlane.f32.xlu0 %v3752
        %v3754 = vpop.xlane.xlu0 %3753
        %v3755 = vmul.f32 %v3751, %v2350
        %v3756 = vmul.f32 %v3754, %v2350
        %v3757 = vsub.f32 %v3745, %v3755
        %v3758 = vsub.f32 %v3746, %v3756
        %v3759 = vmul.f32 %v3757, %v3757
        %v3760 = vmul.f32 %v3758, %v3758
        %v3761 = vsel %vm1233, %v3759, 0.0
        %3762 = vadd.xlane.f32.xlu0 %v3761
        %v3763 = vpop.xlane.xlu0 %3762
        %v3764 = vsel %vm1233, %v3760, 0.0
        %3765 = vadd.xlane.f32.xlu0 %v3764
        %v3766 = vpop.xlane.xlu0 %3765
        %v3767 = vmul.f32 %v3763, %v2350
        %v3768 = vmul.f32 %v3766, %v2350
        %v3769 = vadd.f32 %v3767, 1e-05
        %v3770 = vadd.f32 %v3768, 1e-05
        %v3771 = vrsqrt.pop %v3769
        %v3772 = vrsqrt.pop %v3770
        %v3773 = vmul.f32 %v3757, %v3771
        %v3774 = vmul.f32 %v3758, %v3772
        %v3775 = vlaneseq
        %v3776 = vshrl.u32 %v3775, 7
        %v3777 = vsub.s32 0, %v3776
        %v3778 = vrot.slane %v3747, %v3777
        %v3779 = vmul.f32 %v3773, %v3778
        %v3780 = vmul.f32 %v3774, %v3778
        %v3781 = vlaneseq
        %v3782 = vshrl.u32 %v3781, 7
        %v3783 = vsub.s32 0, %v3782
        %v3784 = vrot.slane %v3748, %v3783
        %v3785 = vadd.f32 %v3779, %v3784
        %v3786 = vadd.f32 %v3780, %v3784
        %3787 = vst.msk [vmem:[#allocation2] sm:$0xff] %vm1233, %v3785
        %3788 = vst.msk [vmem:[#allocation2 + $0x8] sm:$0xff] %vm1233, %v3786
        %p3789 = scmp.eq.s32.totalorder %s31, 1
        // Predicated region
        $region93: #{win_decoder_forward.1} parent=67 // pred_check
          %p3790 = pneg %p3789
        $region94: #{win_decoder_forward.1} parent=67 // pred_check_branch
          %3792 = sbr.rel (%p3790) target = $region96
        $region95: #{win_decoder_forward.1} parent=67 // pred_region
          %v3793 = vld [vmem:[#allocation13] sm:$0x1]
          %v3794 = vld [vmem:[#allocation13 + $0x1] sm:$0x1]
          %v3795 = vsel %vm1233, %v3785, 0.0
          %3796 = vadd.xlane.f32.xlu0 %v3795
          %v3797 = vpop.xlane.xlu0 %3796
          %v3798 = vsel %vm1233, %v3786, 0.0
          %3799 = vadd.xlane.f32.xlu0 %v3798
          %v3800 = vpop.xlane.xlu0 %3799
          %v3801 = vmul.f32 %v3797, %v2350
          %v3802 = vmul.f32 %v3800, %v2350
          %v3803 = vsub.f32 %v3785, %v3801
          %v3804 = vsub.f32 %v3786, %v3802
          %v3805 = vmul.f32 %v3803, %v3803
          %v3806 = vmul.f32 %v3804, %v3804
          %v3807 = vsel %vm1233, %v3805, 0.0
          %3808 = vadd.xlane.f32.xlu0 %v3807
          %v3809 = vpop.xlane.xlu0 %3808
          %v3810 = vsel %vm1233, %v3806, 0.0
          %3811 = vadd.xlane.f32.xlu0 %v3810
          %v3812 = vpop.xlane.xlu0 %3811
          %v3813 = vmul.f32 %v3809, %v2350
          %v3814 = vmul.f32 %v3812, %v2350
          %v3815 = vadd.f32 %v3813, 1e-05
          %v3816 = vadd.f32 %v3814, 1e-05
          %v3817 = vrsqrt.pop %v3815
          %v3818 = vrsqrt.pop %v3816
          %v3819 = vmul.f32 %v3803, %v3817
          %v3820 = vmul.f32 %v3804, %v3818
          %v3821 = vlaneseq
          %v3822 = vshrl.u32 %v3821, 7
          %v3823 = vsub.s32 0, %v3822
          %v3824 = vrot.slane %v3793, %v3823
          %v3825 = vmul.f32 %v3819, %v3824
          %v3826 = vmul.f32 %v3820, %v3824
          %v3827 = vlaneseq
          %v3828 = vshrl.u32 %v3827, 7
          %v3829 = vsub.s32 0, %v3828
          %v3830 = vrot.slane %v3794, %v3829
          %v3831 = vadd.f32 %v3825, %v3830
          %v3832 = vadd.f32 %v3826, %v3830
          %v3834 = vcombine.high %v3831, %v3831
          %v3836 = vunpack.c.l.s4 1966171168
          %v3837 = vunpack.c.0.s8 %v3836
          %v3838 = vlaneseq
          %v3839 = vshrl.u32 %v3838, 7
          %v3840 = vsub.s32 %v3837, %v3839
          %v3841 = vrot.slane %v3831, %v3840
          %v3843 = vunpack.c.l.s4 1966171168
          %v3844 = vunpack.c.0.s8 %v3843
          %v3845 = vlaneseq
          %v3846 = vshrl.u32 %v3845, 7
          %v3847 = vsub.s32 %v3844, %v3846
          %v3848 = vrot.slane %v3834, %v3847
          %v3849 = vcombine.high %v3841, %v3841
          %v3850 = vcombine.high %v3848, %v3848
          %v3852 = vunpack.c.l.s4 1966171168
          %v3853 = vunpack.c.0.s8 %v3852
          %v3854 = vlaneseq
          %v3855 = vshrl.u32 %v3854, 7
          %v3856 = vsub.s32 %v3853, %v3855
          %v3857 = vrot.slane %v3841, %v3856
          %v3859 = vunpack.c.l.s4 1966171168
          %v3860 = vunpack.c.0.s8 %v3859
          %v3861 = vlaneseq
          %v3862 = vshrl.u32 %v3861, 7
          %v3863 = vsub.s32 %v3860, %v3862
          %v3864 = vrot.slane %v3848, %v3863
          %v3866 = vunpack.c.l.s4 1966171168
          %v3867 = vunpack.c.0.s8 %v3866
          %v3868 = vlaneseq
          %v3869 = vshrl.u32 %v3868, 7
          %v3870 = vsub.s32 %v3867, %v3869
          %v3871 = vrot.slane %v3849, %v3870
          %v3873 = vunpack.c.l.s4 1966171168
          %v3874 = vunpack.c.0.s8 %v3873
          %v3875 = vlaneseq
          %v3876 = vshrl.u32 %v3875, 7
          %v3877 = vsub.s32 %v3874, %v3876
          %v3878 = vrot.slane %v3850, %v3877
          %v3879 = vcombine.high %v3857, %v3857
          %v3880 = vcombine.high %v3864, %v3864
          %v3881 = vcombine.high %v3871, %v3871
          %v3882 = vcombine.high %v3878, %v3878
          %vm3891 = vcmask 253952
          %3892 = vst.msk [vmem:[#allocation14] sm:$0x1] %vm3891, %v3857
          %3893 = vst.msk [vmem:[#allocation14 + $0x2] sm:$0x1] %vm3891, %v3871
          %3894 = vst.msk [vmem:[#allocation14 + $0x4] sm:$0x1] %vm3891, %v3879
          %3895 = vst.msk [vmem:[#allocation14 + $0x6] sm:$0x1] %vm3891, %v3881
          %3896 = vst.msk [vmem:[#allocation14 + $0x8] sm:$0x1] %vm3891, %v3864
          %3897 = vst.msk [vmem:[#allocation14 + $0xa] sm:$0x1] %vm3891, %v3878
          %3898 = vst.msk [vmem:[#allocation14 + $0xc] sm:$0x1] %vm3891, %v3880
          %3899 = vst.msk [vmem:[#allocation14 + $0xe] sm:$0x1] %vm3891, %v3882
          %v3901 = vcombine.high %v3832, %v3832
          %v3903 = vunpack.c.l.s4 1966171168
          %v3904 = vunpack.c.0.s8 %v3903
          %v3905 = vlaneseq
          %v3906 = vshrl.u32 %v3905, 7
          %v3907 = vsub.s32 %v3904, %v3906
          %v3908 = vrot.slane %v3832, %v3907
          %v3910 = vunpack.c.l.s4 1966171168
          %v3911 = vunpack.c.0.s8 %v3910
          %v3912 = vlaneseq
          %v3913 = vshrl.u32 %v3912, 7
          %v3914 = vsub.s32 %v3911, %v3913
          %v3915 = vrot.slane %v3901, %v3914
          %v3916 = vcombine.high %v3908, %v3908
          %v3917 = vcombine.high %v3915, %v3915
          %v3919 = vunpack.c.l.s4 1966171168
          %v3920 = vunpack.c.0.s8 %v3919
          %v3921 = vlaneseq
          %v3922 = vshrl.u32 %v3921, 7
          %v3923 = vsub.s32 %v3920, %v3922
          %v3924 = vrot.slane %v3908, %v3923
          %v3926 = vunpack.c.l.s4 1966171168
          %v3927 = vunpack.c.0.s8 %v3926
          %v3928 = vlaneseq
          %v3929 = vshrl.u32 %v3928, 7
          %v3930 = vsub.s32 %v3927, %v3929
          %v3931 = vrot.slane %v3915, %v3930
          %v3933 = vunpack.c.l.s4 1966171168
          %v3934 = vunpack.c.0.s8 %v3933
          %v3935 = vlaneseq
          %v3936 = vshrl.u32 %v3935, 7
          %v3937 = vsub.s32 %v3934, %v3936
          %v3938 = vrot.slane %v3916, %v3937
          %v3940 = vunpack.c.l.s4 1966171168
          %v3941 = vunpack.c.0.s8 %v3940
          %v3942 = vlaneseq
          %v3943 = vshrl.u32 %v3942, 7
          %v3944 = vsub.s32 %v3941, %v3943
          %v3945 = vrot.slane %v3917, %v3944
          %v3946 = vcombine.high %v3924, %v3924
          %v3947 = vcombine.high %v3931, %v3931
          %v3948 = vcombine.high %v3938, %v3938
          %v3949 = vcombine.high %v3945, %v3945
          %3958 = vst.msk [vmem:[#allocation14 + $0x1] sm:$0x1] %vm3891, %v3924
          %3959 = vst.msk [vmem:[#allocation14 + $0x3] sm:$0x1] %vm3891, %v3938
          %3960 = vst.msk [vmem:[#allocation14 + $0x5] sm:$0x1] %vm3891, %v3946
          %3961 = vst.msk [vmem:[#allocation14 + $0x7] sm:$0x1] %vm3891, %v3948
          %3962 = vst.msk [vmem:[#allocation14 + $0x9] sm:$0x1] %vm3891, %v3931
          %3963 = vst.msk [vmem:[#allocation14 + $0xb] sm:$0x1] %vm3891, %v3945
          %3964 = vst.msk [vmem:[#allocation14 + $0xd] sm:$0x1] %vm3891, %v3947
          %3965 = vst.msk [vmem:[#allocation14 + $0xf] sm:$0x1] %vm3891, %v3949
        $region96: #{win_decoder_forward.1} parent=67 // pred_fallthru
          _
        // Predicated region
        $region97: #{win_decoder_forward.1} parent=67 // pred_check
          %p3966 = pneg %p363
        $region98: #{win_decoder_forward.1} parent=67 // pred_check_branch
          %3968 = sbr.rel (%p3966) target = $region100
        $region99: #{win_decoder_forward.1} parent=67 // pred_region
          %s3970 = ssub.s32 256, 256
          %3971 = vsyncadd [#allocation8], %s3970
          %s3972 = smul.addr %s30, 32
          %s3973 = scalar_lea.hbm %s12, %s3972
          %s3974 = sshll.u32 [#allocation14], 4
          %s3975 = int_to_ptr.vmem [resolvable:$true] %s3974
          %3980 = dma.vmem_to_hbm [thread:$0]  %s3975, 256, %s3973, [#allocation8], 32, 32, 2
        $region100: #{win_decoder_forward.1} parent=67 // pred_fallthru
          _
        // Predicated region
        $region101: #{win_decoder_forward.1} parent=67 // pred_check
          %p3981 = pneg %p363
        $region102: #{win_decoder_forward.1} parent=67 // pred_check_branch
          %3983 = sbr.rel (%p3981) target = $region104
        $region103: #{win_decoder_forward.1} parent=67 // pred_region
          %3984 = dma.done [#allocation8], 256
        $region104: #{win_decoder_forward.1} parent=67 // pred_fallthru
          _
      $region68: #{win_decoder_forward.1} parent=5 // pred_fallthru
        _
      %p3985 = scmp.le.s32.totalorder 2, %s21
      // Predicated region
      $region105: #{win_decoder_forward.1} parent=5 // pred_check
        %p3986 = pneg %p3985
      $region106: #{win_decoder_forward.1} parent=5 // pred_check_branch
        %3988 = sbr.rel (%p3986) target = $region108
      $region107: #{win_decoder_forward.1} parent=5 // pred_region
        %s3989 = ssub.s32 %s21, 2
      $region108: #{win_decoder_forward.1} parent=5 // pred_fallthru
        _
    $region6: #{win_decoder_forward.1} parent=1 // loop_footer
      %s25 = sadd.s32 1, %s21
    $region7: #{win_decoder_forward.1} parent=1 // loop_footer_branch
      %20 = sbr.rel target = $region3
    $region8: #{win_decoder_forward.1} parent=1 // loop_exit
      _
    %3990 = vsyncpa [#allocation7], 1
    %s3991 = scalar_lea.sflag [#allocation7], 1
    %3992 = vsyncpa %s3991, 1
    %3993 = vsyncpa [#allocation10], 1
    %3994 = vsyncpa [#allocation8], 1
    %s3995 = scalar_lea.sflag [#allocation8], 1
    %3996 = vsyncpa %s3995, 1

</llo_original>
